<compile_context>
chip_gen: v7x
topology: tpu7x:2x2x1
jax: 0.10.0
libtpu: 0.0.40
codegen_flags: <defaults>
</compile_context>

<pallas_src>
import functools

import jax
import jax.numpy as jnp
import numpy as np
from jax.experimental import pallas as pl
from jax.experimental.pallas import tpu as pltpu


# ----------------------------------------------------------------------------
# Fused Pallas kernel: Conv2d(3x3, s=(1,2), p=(1,0)) -> BatchNorm2d -> ELU
# ----------------------------------------------------------------------------
def _cnn_block_kernel(x_ref, w_ref, g_ref, b_ref, o_ref, *, wo):
    # x_ref: (N, 3*Cin, (H+2)*Wo)  width taps pre-folded into channels (j-major,
    #        cin-minor), rows zero-padded by 1 in H, then (row, col) flattened.
    #        Height tap i is the contiguous lane slice [i*Wo, i*Wo + Ho*Wo).
    # w_ref: (3, Cout, 3*Cin)      conv weight, height-tap major / (kw,cin) minor
    # g_ref: (Cout, 1)             BN gamma
    # b_ref: (Cout, 1)             BN beta
    # o_ref: (N, Cout, Ho*Wo)      channel-major, lane-dense output
    n_b, cout, m = o_ref.shape

    # Hoist the three weight tiles (reused for every image).
    w0 = w_ref[0]
    w1 = w_ref[1]
    w2 = w_ref[2]

    for n in range(n_b):
        # ---- convolution: 3 accumulated MXU matmuls per image --------------
        # NOTE: no conv bias -- it cancels exactly under training-mode BN.
        acc = jnp.dot(w0, x_ref[n, :, 0:m],
                      preferred_element_type=jnp.float32)
        acc = acc + jnp.dot(w1, x_ref[n, :, wo:wo + m],
                            preferred_element_type=jnp.float32)
        acc = acc + jnp.dot(w2, x_ref[n, :, 2 * wo:2 * wo + m],
                            preferred_element_type=jnp.float32)
        o_ref[n, :, :] = acc

    # ---- BatchNorm2d: training-mode batch stats over (N, H, W) per channel,
    # biased variance, eps = 1e-5.  Kept in f32 (v5e VPU/EUP have no bf16).
    y = o_ref[...]                                     # (N, Cout, Ho*Wo)
    inv_count = 1.0 / float(n_b * m)
    mean = jnp.sum(jnp.sum(y, axis=0), axis=1, keepdims=True) * inv_count
    d = y - mean                                       # (N, Cout, M) - (Cout, 1)
    var = jnp.sum(jnp.sum(d * d, axis=0), axis=1, keepdims=True) * inv_count
    inv_std = jax.lax.rsqrt(var + 1e-5)                # (Cout, 1)
    z = d * (g_ref[...] * inv_std) + b_ref[...]

    # ---- ELU(alpha=1): for z <= 0, expm1(z) == tanh(z/2) * (exp(z) + 1);
    # accurate for small |z| and uses only exp/tanh (EUP) + VPU ops.
    neg = jnp.tanh(0.5 * z) * (jnp.exp(z) + 1.0)
    o_ref[...] = jnp.where(z > 0.0, z, neg)


# ----------------------------------------------------------------------------
# One CNN_Block: cheap wrapper (pad H, width-tap fold, flatten) + pallas_call
# ----------------------------------------------------------------------------
def _cnn_block_forward(x, w_taps, gamma, beta):
    """x: (N, Cin, H, W) NCHW f32; w_taps: (3, Cout, 3*Cin).  Returns NCHW."""
    N, Cin, H, W = x.shape
    Cout = w_taps.shape[1]
    Ho = H                        # kh=3, stride 1, pad 1
    Wo = (W - 3) // 2 + 1         # kw=3, stride 2, pad 0

    xp = jnp.pad(x, ((0, 0), (0, 0), (1, 1), (0, 0)))   # zero-pad H only
    # Fold the three stride-2 width taps into the channel axis (j-major).
    v0 = xp[:, :, :, 0:2 * Wo - 1:2]                     # cols 2w
    v1 = xp[:, :, :, 1:2 * Wo:2]                         # cols 2w + 1
    v2 = xp[:, :, :, 2:2 * Wo + 1:2]                     # cols 2w + 2
    xcat = jnp.concatenate([v0, v1, v2], axis=1)         # (N, 3Cin, H+2, Wo)
    xflat = xcat.reshape(N, 3 * Cin, (H + 2) * Wo)       # free collapse

    out = pl.pallas_call(
        functools.partial(_cnn_block_kernel, wo=Wo),
        out_shape=jax.ShapeDtypeStruct((N, Cout, Ho * Wo), jnp.float32),
        in_specs=[pl.BlockSpec(memory_space=pltpu.MemorySpace.VMEM)] * 4,
        out_specs=pl.BlockSpec(memory_space=pltpu.MemorySpace.VMEM),
        compiler_params=pltpu.CompilerParams(
            vmem_limit_bytes=32 * 1024 * 1024),
    )(xflat, w_taps, gamma.reshape(Cout, 1), beta.reshape(Cout, 1))

    # Channel-major kernel output -> NCHW is a free (contiguous) reshape.
    return out.reshape(N, Cout, Ho, Wo)


@jax.jit
def encoder_forward(x, p1, p2, p3):
    """x: (N, 1, H, W) NCHW.  Each p = (weight OIHW, gamma, beta)."""
    outs = []
    for (w, gamma, beta) in (p1, p2, p3):
        cout, cin = w.shape[0], w.shape[1]
        # (Cout, Cin, kh, kw) -> (kh, Cout, kw, Cin) -> (3, Cout, 3*Cin):
        # height-tap major / (kw, cin) minor -- matches the folded channels.
        w_taps = jnp.transpose(w, (2, 0, 3, 1)).reshape(3, cout, 3 * cin)
        x = _cnn_block_forward(x, w_taps, gamma, beta)
        outs.append(x)
    return tuple(outs)


# ----------------------------------------------------------------------------
# Pure-JAX reference (runtime self-check).  No conv bias: it cancels exactly
# under training-mode BatchNorm.
# ----------------------------------------------------------------------------
def _reference_encoder(x, p1, p2, p3):
    outs = []
    for (w, gamma, beta) in (p1, p2, p3):
        y = jax.lax.conv_general_dilated(
            x, w, window_strides=(1, 2), padding=((1, 1), (0, 0)),
            dimension_numbers=("NCHW", "OIHW", "NCHW"))
        mean = jnp.mean(y, axis=(0, 2, 3), keepdims=True)
        var = jnp.mean((y - mean) ** 2, axis=(0, 2, 3), keepdims=True)
        z = (gamma[None, :, None, None] * (y - mean) * jax.lax.rsqrt(var + 1e-5)
             + beta[None, :, None, None])
        x = jnp.where(z > 0.0, z, jnp.expm1(z))
        outs.append(x)
    return tuple(outs)


if __name__ == "__main__":
    # Encoder(in_channels=1, channels=16): channels 1 -> 16 -> 32 -> 64.
    N, H, W, CH = 2, 16, 32, 16
    key = jax.random.PRNGKey(0)
    kx, k1, k2, k3 = jax.random.split(key, 4)

    def init_block(k, cin, cout):
        kw_, kg_, kb_ = jax.random.split(k, 3)
        w = jax.random.normal(kw_, (cout, cin, 3, 3), jnp.float32) / np.sqrt(9.0 * cin)
        gamma = 1.0 + 0.1 * jax.random.normal(kg_, (cout,), jnp.float32)
        beta = 0.1 * jax.random.normal(kb_, (cout,), jnp.float32)
        return w, gamma, beta

    x = jax.random.normal(kx, (N, 1, H, W), dtype=jnp.float32)
    p1 = init_block(k1, 1, CH)
    p2 = init_block(k2, CH, 2 * CH)
    p3 = init_block(k3, 2 * CH, 4 * CH)

    o1, o2, o3 = encoder_forward(x, p1, p2, p3)
    o1, o2, o3 = jax.block_until_ready((o1, o2, o3))

    r1, r2, r3 = _reference_encoder(x, p1, p2, p3)
    for got, ref in zip((o1, o2, o3), (r1, r2, r3)):
        np.testing.assert_allclose(np.asarray(got), np.asarray(ref),
                                   rtol=5e-4, atol=5e-4)

    assert o1.shape == (N, CH, H, 15)
    assert o2.shape == (N, 2 * CH, H, 7)
    assert o3.shape == (N, 4 * CH, H, 3)
    print("KERNEL_OK")
</pallas_src>

<mosaic_0001>
module attributes {stable_mosaic.version = 11 : i64} {
  func.func @_cnn_block_kernel(%arg0: memref<2x3x270xf32, #tpu.memory_space<vmem>>, %arg1: memref<3x16x3xf32, #tpu.memory_space<vmem>>, %arg2: memref<16x1xf32, #tpu.memory_space<vmem>>, %arg3: memref<16x1xf32, #tpu.memory_space<vmem>>, %arg4: memref<2x16x240xf32, #tpu.memory_space<vmem>>) attributes {dimension_semantics = [], scalar_prefetch = 0 : i64, scratch_operands = 0 : i64, tpu.core_type = #tpu.core_type<tc>} {
    %c0 = arith.constant 0 : index
    %c0_0 = arith.constant 0 : index
    %c0_1 = arith.constant 0 : index
    %0 = vector.load %arg1[%c0, %c0_0, %c0_1] : memref<3x16x3xf32, #tpu.memory_space<vmem>>, vector<1x16x3xf32>
    %1 = vector.shape_cast %0 : vector<1x16x3xf32> to vector<16x3xf32>
    %c1 = arith.constant 1 : index
    %c0_2 = arith.constant 0 : index
    %c0_3 = arith.constant 0 : index
    %2 = vector.load %arg1[%c1, %c0_2, %c0_3] : memref<3x16x3xf32, #tpu.memory_space<vmem>>, vector<1x16x3xf32>
    %3 = vector.shape_cast %2 : vector<1x16x3xf32> to vector<16x3xf32>
    %c2 = arith.constant 2 : index
    %c0_4 = arith.constant 0 : index
    %c0_5 = arith.constant 0 : index
    %4 = vector.load %arg1[%c2, %c0_4, %c0_5] : memref<3x16x3xf32, #tpu.memory_space<vmem>>, vector<1x16x3xf32>
    %5 = vector.shape_cast %4 : vector<1x16x3xf32> to vector<16x3xf32>
    %c0_6 = arith.constant 0 : index
    %c0_7 = arith.constant 0 : index
    %c0_8 = arith.constant 0 : index
    %6 = vector.load %arg0[%c0_6, %c0_7, %c0_8] : memref<2x3x270xf32, #tpu.memory_space<vmem>>, vector<1x3x240xf32>
    %7 = vector.shape_cast %6 : vector<1x3x240xf32> to vector<3x240xf32>
    %cst = arith.constant dense<0.000000e+00> : vector<16x240xf32>
    %8 = tpu.matmul %1, %7, %cst {dimension_numbers = #tpu.dot_dimension_numbers<[1], [0], [0], [1], [0, 0, 1, 1], [], []>} : vector<16x3xf32>, vector<3x240xf32>, vector<16x240xf32> -> vector<16x240xf32>
    %c0_9 = arith.constant 0 : index
    %c0_10 = arith.constant 0 : index
    %c15 = arith.constant 15 : index
    %9 = vector.load %arg0[%c0_9, %c0_10, %c15] : memref<2x3x270xf32, #tpu.memory_space<vmem>>, vector<1x3x240xf32>
    %10 = vector.shape_cast %9 : vector<1x3x240xf32> to vector<3x240xf32>
    %cst_11 = arith.constant dense<0.000000e+00> : vector<16x240xf32>
    %11 = tpu.matmul %3, %10, %cst_11 {dimension_numbers = #tpu.dot_dimension_numbers<[1], [0], [0], [1], [0, 0, 1, 1], [], []>} : vector<16x3xf32>, vector<3x240xf32>, vector<16x240xf32> -> vector<16x240xf32>
    %12 = arith.addf %8, %11 : vector<16x240xf32>
    %c0_12 = arith.constant 0 : index
    %c0_13 = arith.constant 0 : index
    %c30 = arith.constant 30 : index
    %13 = vector.load %arg0[%c0_12, %c0_13, %c30] : memref<2x3x270xf32, #tpu.memory_space<vmem>>, vector<1x3x240xf32>
    %14 = vector.shape_cast %13 : vector<1x3x240xf32> to vector<3x240xf32>
    %cst_14 = arith.constant dense<0.000000e+00> : vector<16x240xf32>
    %15 = tpu.matmul %5, %14, %cst_14 {dimension_numbers = #tpu.dot_dimension_numbers<[1], [0], [0], [1], [0, 0, 1, 1], [], []>} : vector<16x3xf32>, vector<3x240xf32>, vector<16x240xf32> -> vector<16x240xf32>
    %16 = arith.addf %12, %15 : vector<16x240xf32>
    %c0_15 = arith.constant 0 : index
    %c0_16 = arith.constant 0 : index
    %c0_17 = arith.constant 0 : index
    %17 = vector.load %arg4[%c0_15, %c0_16, %c0_17] : memref<2x16x240xf32, #tpu.memory_space<vmem>>, vector<1x16x240xf32>
    %18 = vector.shape_cast %17 : vector<1x16x240xf32> to vector<16x240xf32>
    %19 = vector.shape_cast %16 : vector<16x240xf32> to vector<1x16x240xf32>
    tpu.vector_store %arg4[%c0_15, %c0_16, %c0_17], %19 {strides = array<i32>} : memref<2x16x240xf32, #tpu.memory_space<vmem>>, vector<1x16x240xf32>,
    %c1_18 = arith.constant 1 : index
    %c0_19 = arith.constant 0 : index
    %c0_20 = arith.constant 0 : index
    %20 = vector.load %arg0[%c1_18, %c0_19, %c0_20] : memref<2x3x270xf32, #tpu.memory_space<vmem>>, vector<1x3x240xf32>
    %21 = vector.shape_cast %20 : vector<1x3x240xf32> to vector<3x240xf32>
    %cst_21 = arith.constant dense<0.000000e+00> : vector<16x240xf32>
    %22 = tpu.matmul %1, %21, %cst_21 {dimension_numbers = #tpu.dot_dimension_numbers<[1], [0], [0], [1], [0, 0, 1, 1], [], []>} : vector<16x3xf32>, vector<3x240xf32>, vector<16x240xf32> -> vector<16x240xf32>
    %c1_22 = arith.constant 1 : index
    %c0_23 = arith.constant 0 : index
    %c15_24 = arith.constant 15 : index
    %23 = vector.load %arg0[%c1_22, %c0_23, %c15_24] : memref<2x3x270xf32, #tpu.memory_space<vmem>>, vector<1x3x240xf32>
    %24 = vector.shape_cast %23 : vector<1x3x240xf32> to vector<3x240xf32>
    %cst_25 = arith.constant dense<0.000000e+00> : vector<16x240xf32>
    %25 = tpu.matmul %3, %24, %cst_25 {dimension_numbers = #tpu.dot_dimension_numbers<[1], [0], [0], [1], [0, 0, 1, 1], [], []>} : vector<16x3xf32>, vector<3x240xf32>, vector<16x240xf32> -> vector<16x240xf32>
    %26 = arith.addf %22, %25 : vector<16x240xf32>
    %c1_26 = arith.constant 1 : index
    %c0_27 = arith.constant 0 : index
    %c30_28 = arith.constant 30 : index
    %27 = vector.load %arg0[%c1_26, %c0_27, %c30_28] : memref<2x3x270xf32, #tpu.memory_space<vmem>>, vector<1x3x240xf32>
    %28 = vector.shape_cast %27 : vector<1x3x240xf32> to vector<3x240xf32>
    %cst_29 = arith.constant dense<0.000000e+00> : vector<16x240xf32>
    %29 = tpu.matmul %5, %28, %cst_29 {dimension_numbers = #tpu.dot_dimension_numbers<[1], [0], [0], [1], [0, 0, 1, 1], [], []>} : vector<16x3xf32>, vector<3x240xf32>, vector<16x240xf32> -> vector<16x240xf32>
    %30 = arith.addf %26, %29 : vector<16x240xf32>
    %c1_30 = arith.constant 1 : index
    %c0_31 = arith.constant 0 : index
    %c0_32 = arith.constant 0 : index
    %31 = vector.load %arg4[%c1_30, %c0_31, %c0_32] : memref<2x16x240xf32, #tpu.memory_space<vmem>>, vector<1x16x240xf32>
    %32 = vector.shape_cast %31 : vector<1x16x240xf32> to vector<16x240xf32>
    %33 = vector.shape_cast %30 : vector<16x240xf32> to vector<1x16x240xf32>
    tpu.vector_store %arg4[%c1_30, %c0_31, %c0_32], %33 {strides = array<i32>} : memref<2x16x240xf32, #tpu.memory_space<vmem>>, vector<1x16x240xf32>,
    %c0_33 = arith.constant 0 : index
    %c0_34 = arith.constant 0 : index
    %c0_35 = arith.constant 0 : index
    %34 = vector.load %arg4[%c0_33, %c0_34, %c0_35] : memref<2x16x240xf32, #tpu.memory_space<vmem>>, vector<2x16x240xf32>
    %cst_36 = arith.constant dense<0.000000e+00> : vector<16x240xf32>
    %35 = vector.multi_reduction <add>, %34, %cst_36 [0] : vector<2x16x240xf32> to vector<16x240xf32>
    %cst_37 = arith.constant dense<0.000000e+00> : vector<16xf32>
    %36 = vector.multi_reduction <add>, %35, %cst_37 [1] : vector<16x240xf32> to vector<16xf32>
    %37 = vector.shape_cast %36 : vector<16xf32> to vector<16x1xf32>
    %cst_38 = arith.constant 0.00208333344 : f32
    %38 = vector.broadcast %cst_38 : f32 to vector<16x1xf32>
    %39 = arith.mulf %37, %38 : vector<16x1xf32>
    %40 = vector.shape_cast %39 : vector<16x1xf32> to vector<1x16x1xf32>
    %41 = vector.broadcast %40 : vector<1x16x1xf32> to vector<2x16x240xf32>
    %42 = arith.subf %34, %41 : vector<2x16x240xf32>
    %43 = arith.mulf %42, %42 : vector<2x16x240xf32>
    %cst_39 = arith.constant dense<0.000000e+00> : vector<16x240xf32>
    %44 = vector.multi_reduction <add>, %43, %cst_39 [0] : vector<2x16x240xf32> to vector<16x240xf32>
    %cst_40 = arith.constant dense<0.000000e+00> : vector<16xf32>
    %45 = vector.multi_reduction <add>, %44, %cst_40 [1] : vector<16x240xf32> to vector<16xf32>
    %46 = vector.shape_cast %45 : vector<16xf32> to vector<16x1xf32>
    %cst_41 = arith.constant 0.00208333344 : f32
    %47 = vector.broadcast %cst_41 : f32 to vector<16x1xf32>
    %48 = arith.mulf %46, %47 : vector<16x1xf32>
    %cst_42 = arith.constant 9.99999974E-6 : f32
    %49 = vector.broadcast %cst_42 : f32 to vector<16x1xf32>
    %50 = arith.addf %48, %49 : vector<16x1xf32>
    %51 = math.rsqrt %50 : vector<16x1xf32>
    %c0_43 = arith.constant 0 : index
    %c0_44 = arith.constant 0 : index
    %52 = vector.load %arg2[%c0_43, %c0_44] : memref<16x1xf32, #tpu.memory_space<vmem>>, vector<16x1xf32>
    %53 = arith.mulf %52, %51 : vector<16x1xf32>
    %54 = vector.shape_cast %53 : vector<16x1xf32> to vector<1x16x1xf32>
    %55 = vector.broadcast %54 : vector<1x16x1xf32> to vector<2x16x240xf32>
    %56 = arith.mulf %42, %55 : vector<2x16x240xf32>
    %c0_45 = arith.constant 0 : index
    %c0_46 = arith.constant 0 : index
    %57 = vector.load %arg3[%c0_45, %c0_46] : memref<16x1xf32, #tpu.memory_space<vmem>>, vector<16x1xf32>
    %58 = vector.shape_cast %57 : vector<16x1xf32> to vector<1x16x1xf32>
    %59 = vector.broadcast %58 : vector<1x16x1xf32> to vector<2x16x240xf32>
    %60 = arith.addf %56, %59 : vector<2x16x240xf32>
    %cst_47 = arith.constant 5.000000e-01 : f32
    %61 = vector.broadcast %cst_47 : f32 to vector<2x16x240xf32>
    %62 = arith.mulf %61, %60 : vector<2x16x240xf32>
    %63 = math.tanh %62 : vector<2x16x240xf32>
    %64 = math.exp %60 : vector<2x16x240xf32>
    %cst_48 = arith.constant 1.000000e+00 : f32
    %65 = vector.broadcast %cst_48 : f32 to vector<2x16x240xf32>
    %66 = arith.addf %64, %65 : vector<2x16x240xf32>
    %67 = arith.mulf %63, %66 : vector<2x16x240xf32>
    %cst_49 = arith.constant 0.000000e+00 : f32
    %68 = vector.broadcast %cst_49 : f32 to vector<2x16x240xf32>
    %69 = arith.cmpf ogt, %60, %68 : vector<2x16x240xf32>
    %70 = arith.select %69, %60, %67 : vector<2x16x240xi1>, vector<2x16x240xf32>
    %c0_50 = arith.constant 0 : index
    %c0_51 = arith.constant 0 : index
    %c0_52 = arith.constant 0 : index
    %71 = vector.load %arg4[%c0_50, %c0_51, %c0_52] : memref<2x16x240xf32, #tpu.memory_space<vmem>>, vector<2x16x240xf32>
    tpu.vector_store %arg4[%c0_50, %c0_51, %c0_52], %70 {strides = array<i32>} : memref<2x16x240xf32, #tpu.memory_space<vmem>>, vector<2x16x240xf32>,
    return
  }
}

module attributes {stable_mosaic.version = 11 : i64} {
  func.func @_cnn_block_kernel(%arg0: memref<2x48x126xf32, #tpu.memory_space<vmem>>, %arg1: memref<3x32x48xf32, #tpu.memory_space<vmem>>, %arg2: memref<32x1xf32, #tpu.memory_space<vmem>>, %arg3: memref<32x1xf32, #tpu.memory_space<vmem>>, %arg4: memref<2x32x112xf32, #tpu.memory_space<vmem>>) attributes {dimension_semantics = [], scalar_prefetch = 0 : i64, scratch_operands = 0 : i64, tpu.core_type = #tpu.core_type<tc>} {
    %c0 = arith.constant 0 : index
    %c0_0 = arith.constant 0 : index
    %c0_1 = arith.constant 0 : index
    %0 = vector.load %arg1[%c0, %c0_0, %c0_1] : memref<3x32x48xf32, #tpu.memory_space<vmem>>, vector<1x32x48xf32>
    %1 = vector.shape_cast %0 : vector<1x32x48xf32> to vector<32x48xf32>
    %c1 = arith.constant 1 : index
    %c0_2 = arith.constant 0 : index
    %c0_3 = arith.constant 0 : index
    %2 = vector.load %arg1[%c1, %c0_2, %c0_3] : memref<3x32x48xf32, #tpu.memory_space<vmem>>, vector<1x32x48xf32>
    %3 = vector.shape_cast %2 : vector<1x32x48xf32> to vector<32x48xf32>
    %c2 = arith.constant 2 : index
    %c0_4 = arith.constant 0 : index
    %c0_5 = arith.constant 0 : index
    %4 = vector.load %arg1[%c2, %c0_4, %c0_5] : memref<3x32x48xf32, #tpu.memory_space<vmem>>, vector<1x32x48xf32>
    %5 = vector.shape_cast %4 : vector<1x32x48xf32> to vector<32x48xf32>
    %c0_6 = arith.constant 0 : index
    %c0_7 = arith.constant 0 : index
    %c0_8 = arith.constant 0 : index
    %6 = vector.load %arg0[%c0_6, %c0_7, %c0_8] : memref<2x48x126xf32, #tpu.memory_space<vmem>>, vector<1x48x112xf32>
    %7 = vector.shape_cast %6 : vector<1x48x112xf32> to vector<48x112xf32>
    %cst = arith.constant dense<0.000000e+00> : vector<32x112xf32>
    %8 = tpu.matmul %1, %7, %cst {dimension_numbers = #tpu.dot_dimension_numbers<[1], [0], [0], [1], [0, 0, 1, 1], [], []>} : vector<32x48xf32>, vector<48x112xf32>, vector<32x112xf32> -> vector<32x112xf32>
    %c0_9 = arith.constant 0 : index
    %c0_10 = arith.constant 0 : index
    %c7 = arith.constant 7 : index
    %9 = vector.load %arg0[%c0_9, %c0_10, %c7] : memref<2x48x126xf32, #tpu.memory_space<vmem>>, vector<1x48x112xf32>
    %10 = vector.shape_cast %9 : vector<1x48x112xf32> to vector<48x112xf32>
    %cst_11 = arith.constant dense<0.000000e+00> : vector<32x112xf32>
    %11 = tpu.matmul %3, %10, %cst_11 {dimension_numbers = #tpu.dot_dimension_numbers<[1], [0], [0], [1], [0, 0, 1, 1], [], []>} : vector<32x48xf32>, vector<48x112xf32>, vector<32x112xf32> -> vector<32x112xf32>
    %12 = arith.addf %8, %11 : vector<32x112xf32>
    %c0_12 = arith.constant 0 : index
    %c0_13 = arith.constant 0 : index
    %c14 = arith.constant 14 : index
    %13 = vector.load %arg0[%c0_12, %c0_13, %c14] : memref<2x48x126xf32, #tpu.memory_space<vmem>>, vector<1x48x112xf32>
    %14 = vector.shape_cast %13 : vector<1x48x112xf32> to vector<48x112xf32>
    %cst_14 = arith.constant dense<0.000000e+00> : vector<32x112xf32>
    %15 = tpu.matmul %5, %14, %cst_14 {dimension_numbers = #tpu.dot_dimension_numbers<[1], [0], [0], [1], [0, 0, 1, 1], [], []>} : vector<32x48xf32>, vector<48x112xf32>, vector<32x112xf32> -> vector<32x112xf32>
    %16 = arith.addf %12, %15 : vector<32x112xf32>
    %c0_15 = arith.constant 0 : index
    %c0_16 = arith.constant 0 : index
    %c0_17 = arith.constant 0 : index
    %17 = vector.load %arg4[%c0_15, %c0_16, %c0_17] : memref<2x32x112xf32, #tpu.memory_space<vmem>>, vector<1x32x112xf32>
    %18 = vector.shape_cast %17 : vector<1x32x112xf32> to vector<32x112xf32>
    %19 = vector.shape_cast %16 : vector<32x112xf32> to vector<1x32x112xf32>
    tpu.vector_store %arg4[%c0_15, %c0_16, %c0_17], %19 {strides = array<i32>} : memref<2x32x112xf32, #tpu.memory_space<vmem>>, vector<1x32x112xf32>,
    %c1_18 = arith.constant 1 : index
    %c0_19 = arith.constant 0 : index
    %c0_20 = arith.constant 0 : index
    %20 = vector.load %arg0[%c1_18, %c0_19, %c0_20] : memref<2x48x126xf32, #tpu.memory_space<vmem>>, vector<1x48x112xf32>
    %21 = vector.shape_cast %20 : vector<1x48x112xf32> to vector<48x112xf32>
    %cst_21 = arith.constant dense<0.000000e+00> : vector<32x112xf32>
    %22 = tpu.matmul %1, %21, %cst_21 {dimension_numbers = #tpu.dot_dimension_numbers<[1], [0], [0], [1], [0, 0, 1, 1], [], []>} : vector<32x48xf32>, vector<48x112xf32>, vector<32x112xf32> -> vector<32x112xf32>
    %c1_22 = arith.constant 1 : index
    %c0_23 = arith.constant 0 : index
    %c7_24 = arith.constant 7 : index
    %23 = vector.load %arg0[%c1_22, %c0_23, %c7_24] : memref<2x48x126xf32, #tpu.memory_space<vmem>>, vector<1x48x112xf32>
    %24 = vector.shape_cast %23 : vector<1x48x112xf32> to vector<48x112xf32>
    %cst_25 = arith.constant dense<0.000000e+00> : vector<32x112xf32>
    %25 = tpu.matmul %3, %24, %cst_25 {dimension_numbers = #tpu.dot_dimension_numbers<[1], [0], [0], [1], [0, 0, 1, 1], [], []>} : vector<32x48xf32>, vector<48x112xf32>, vector<32x112xf32> -> vector<32x112xf32>
    %26 = arith.addf %22, %25 : vector<32x112xf32>
    %c1_26 = arith.constant 1 : index
    %c0_27 = arith.constant 0 : index
    %c14_28 = arith.constant 14 : index
    %27 = vector.load %arg0[%c1_26, %c0_27, %c14_28] : memref<2x48x126xf32, #tpu.memory_space<vmem>>, vector<1x48x112xf32>
    %28 = vector.shape_cast %27 : vector<1x48x112xf32> to vector<48x112xf32>
    %cst_29 = arith.constant dense<0.000000e+00> : vector<32x112xf32>
    %29 = tpu.matmul %5, %28, %cst_29 {dimension_numbers = #tpu.dot_dimension_numbers<[1], [0], [0], [1], [0, 0, 1, 1], [], []>} : vector<32x48xf32>, vector<48x112xf32>, vector<32x112xf32> -> vector<32x112xf32>
    %30 = arith.addf %26, %29 : vector<32x112xf32>
    %c1_30 = arith.constant 1 : index
    %c0_31 = arith.constant 0 : index
    %c0_32 = arith.constant 0 : index
    %31 = vector.load %arg4[%c1_30, %c0_31, %c0_32] : memref<2x32x112xf32, #tpu.memory_space<vmem>>, vector<1x32x112xf32>
    %32 = vector.shape_cast %31 : vector<1x32x112xf32> to vector<32x112xf32>
    %33 = vector.shape_cast %30 : vector<32x112xf32> to vector<1x32x112xf32>
    tpu.vector_store %arg4[%c1_30, %c0_31, %c0_32], %33 {strides = array<i32>} : memref<2x32x112xf32, #tpu.memory_space<vmem>>, vector<1x32x112xf32>,
    %c0_33 = arith.constant 0 : index
    %c0_34 = arith.constant 0 : index
    %c0_35 = arith.constant 0 : index
    %34 = vector.load %arg4[%c0_33, %c0_34, %c0_35] : memref<2x32x112xf32, #tpu.memory_space<vmem>>, vector<2x32x112xf32>
    %cst_36 = arith.constant dense<0.000000e+00> : vector<32x112xf32>
    %35 = vector.multi_reduction <add>, %34, %cst_36 [0] : vector<2x32x112xf32> to vector<32x112xf32>
    %cst_37 = arith.constant dense<0.000000e+00> : vector<32xf32>
    %36 = vector.multi_reduction <add>, %35, %cst_37 [1] : vector<32x112xf32> to vector<32xf32>
    %37 = vector.shape_cast %36 : vector<32xf32> to vector<32x1xf32>
    %cst_38 = arith.constant 0.00446428591 : f32
    %38 = vector.broadcast %cst_38 : f32 to vector<32x1xf32>
    %39 = arith.mulf %37, %38 : vector<32x1xf32>
    %40 = vector.shape_cast %39 : vector<32x1xf32> to vector<1x32x1xf32>
    %41 = vector.broadcast %40 : vector<1x32x1xf32> to vector<2x32x112xf32>
    %42 = arith.subf %34, %41 : vector<2x32x112xf32>
    %43 = arith.mulf %42, %42 : vector<2x32x112xf32>
    %cst_39 = arith.constant dense<0.000000e+00> : vector<32x112xf32>
    %44 = vector.multi_reduction <add>, %43, %cst_39 [0] : vector<2x32x112xf32> to vector<32x112xf32>
    %cst_40 = arith.constant dense<0.000000e+00> : vector<32xf32>
    %45 = vector.multi_reduction <add>, %44, %cst_40 [1] : vector<32x112xf32> to vector<32xf32>
    %46 = vector.shape_cast %45 : vector<32xf32> to vector<32x1xf32>
    %cst_41 = arith.constant 0.00446428591 : f32
    %47 = vector.broadcast %cst_41 : f32 to vector<32x1xf32>
    %48 = arith.mulf %46, %47 : vector<32x1xf32>
    %cst_42 = arith.constant 9.99999974E-6 : f32
    %49 = vector.broadcast %cst_42 : f32 to vector<32x1xf32>
    %50 = arith.addf %48, %49 : vector<32x1xf32>
    %51 = math.rsqrt %50 : vector<32x1xf32>
    %c0_43 = arith.constant 0 : index
    %c0_44 = arith.constant 0 : index
    %52 = vector.load %arg2[%c0_43, %c0_44] : memref<32x1xf32, #tpu.memory_space<vmem>>, vector<32x1xf32>
    %53 = arith.mulf %52, %51 : vector<32x1xf32>
    %54 = vector.shape_cast %53 : vector<32x1xf32> to vector<1x32x1xf32>
    %55 = vector.broadcast %54 : vector<1x32x1xf32> to vector<2x32x112xf32>
    %56 = arith.mulf %42, %55 : vector<2x32x112xf32>
    %c0_45 = arith.constant 0 : index
    %c0_46 = arith.constant 0 : index
    %57 = vector.load %arg3[%c0_45, %c0_46] : memref<32x1xf32, #tpu.memory_space<vmem>>, vector<32x1xf32>
    %58 = vector.shape_cast %57 : vector<32x1xf32> to vector<1x32x1xf32>
    %59 = vector.broadcast %58 : vector<1x32x1xf32> to vector<2x32x112xf32>
    %60 = arith.addf %56, %59 : vector<2x32x112xf32>
    %cst_47 = arith.constant 5.000000e-01 : f32
    %61 = vector.broadcast %cst_47 : f32 to vector<2x32x112xf32>
    %62 = arith.mulf %61, %60 : vector<2x32x112xf32>
    %63 = math.tanh %62 : vector<2x32x112xf32>
    %64 = math.exp %60 : vector<2x32x112xf32>
    %cst_48 = arith.constant 1.000000e+00 : f32
    %65 = vector.broadcast %cst_48 : f32 to vector<2x32x112xf32>
    %66 = arith.addf %64, %65 : vector<2x32x112xf32>
    %67 = arith.mulf %63, %66 : vector<2x32x112xf32>
    %cst_49 = arith.constant 0.000000e+00 : f32
    %68 = vector.broadcast %cst_49 : f32 to vector<2x32x112xf32>
    %69 = arith.cmpf ogt, %60, %68 : vector<2x32x112xf32>
    %70 = arith.select %69, %60, %67 : vector<2x32x112xi1>, vector<2x32x112xf32>
    %c0_50 = arith.constant 0 : index
    %c0_51 = arith.constant 0 : index
    %c0_52 = arith.constant 0 : index
    %71 = vector.load %arg4[%c0_50, %c0_51, %c0_52] : memref<2x32x112xf32, #tpu.memory_space<vmem>>, vector<2x32x112xf32>
    tpu.vector_store %arg4[%c0_50, %c0_51, %c0_52], %70 {strides = array<i32>} : memref<2x32x112xf32, #tpu.memory_space<vmem>>, vector<2x32x112xf32>,
    return
  }
}

module attributes {stable_mosaic.version = 11 : i64} {
  func.func @_cnn_block_kernel(%arg0: memref<2x96x54xf32, #tpu.memory_space<vmem>>, %arg1: memref<3x64x96xf32, #tpu.memory_space<vmem>>, %arg2: memref<64x1xf32, #tpu.memory_space<vmem>>, %arg3: memref<64x1xf32, #tpu.memory_space<vmem>>, %arg4: memref<2x64x48xf32, #tpu.memory_space<vmem>>) attributes {dimension_semantics = [], scalar_prefetch = 0 : i64, scratch_operands = 0 : i64, tpu.core_type = #tpu.core_type<tc>} {
    %c0 = arith.constant 0 : index
    %c0_0 = arith.constant 0 : index
    %c0_1 = arith.constant 0 : index
    %0 = vector.load %arg1[%c0, %c0_0, %c0_1] : memref<3x64x96xf32, #tpu.memory_space<vmem>>, vector<1x64x96xf32>
    %1 = vector.shape_cast %0 : vector<1x64x96xf32> to vector<64x96xf32>
    %c1 = arith.constant 1 : index
    %c0_2 = arith.constant 0 : index
    %c0_3 = arith.constant 0 : index
    %2 = vector.load %arg1[%c1, %c0_2, %c0_3] : memref<3x64x96xf32, #tpu.memory_space<vmem>>, vector<1x64x96xf32>
    %3 = vector.shape_cast %2 : vector<1x64x96xf32> to vector<64x96xf32>
    %c2 = arith.constant 2 : index
    %c0_4 = arith.constant 0 : index
    %c0_5 = arith.constant 0 : index
    %4 = vector.load %arg1[%c2, %c0_4, %c0_5] : memref<3x64x96xf32, #tpu.memory_space<vmem>>, vector<1x64x96xf32>
    %5 = vector.shape_cast %4 : vector<1x64x96xf32> to vector<64x96xf32>
    %c0_6 = arith.constant 0 : index
    %c0_7 = arith.constant 0 : index
    %c0_8 = arith.constant 0 : index
    %6 = vector.load %arg0[%c0_6, %c0_7, %c0_8] : memref<2x96x54xf32, #tpu.memory_space<vmem>>, vector<1x96x48xf32>
    %7 = vector.shape_cast %6 : vector<1x96x48xf32> to vector<96x48xf32>
    %cst = arith.constant dense<0.000000e+00> : vector<64x48xf32>
    %8 = tpu.matmul %1, %7, %cst {dimension_numbers = #tpu.dot_dimension_numbers<[1], [0], [0], [1], [0, 0, 1, 1], [], []>} : vector<64x96xf32>, vector<96x48xf32>, vector<64x48xf32> -> vector<64x48xf32>
    %c0_9 = arith.constant 0 : index
    %c0_10 = arith.constant 0 : index
    %c3 = arith.constant 3 : index
    %9 = vector.load %arg0[%c0_9, %c0_10, %c3] : memref<2x96x54xf32, #tpu.memory_space<vmem>>, vector<1x96x48xf32>
    %10 = vector.shape_cast %9 : vector<1x96x48xf32> to vector<96x48xf32>
    %cst_11 = arith.constant dense<0.000000e+00> : vector<64x48xf32>
    %11 = tpu.matmul %3, %10, %cst_11 {dimension_numbers = #tpu.dot_dimension_numbers<[1], [0], [0], [1], [0, 0, 1, 1], [], []>} : vector<64x96xf32>, vector<96x48xf32>, vector<64x48xf32> -> vector<64x48xf32>
    %12 = arith.addf %8, %11 : vector<64x48xf32>
    %c0_12 = arith.constant 0 : index
    %c0_13 = arith.constant 0 : index
    %c6 = arith.constant 6 : index
    %13 = vector.load %arg0[%c0_12, %c0_13, %c6] : memref<2x96x54xf32, #tpu.memory_space<vmem>>, vector<1x96x48xf32>
    %14 = vector.shape_cast %13 : vector<1x96x48xf32> to vector<96x48xf32>
    %cst_14 = arith.constant dense<0.000000e+00> : vector<64x48xf32>
    %15 = tpu.matmul %5, %14, %cst_14 {dimension_numbers = #tpu.dot_dimension_numbers<[1], [0], [0], [1], [0, 0, 1, 1], [], []>} : vector<64x96xf32>, vector<96x48xf32>, vector<64x48xf32> -> vector<64x48xf32>
    %16 = arith.addf %12, %15 : vector<64x48xf32>
    %c0_15 = arith.constant 0 : index
    %c0_16 = arith.constant 0 : index
    %c0_17 = arith.constant 0 : index
    %17 = vector.load %arg4[%c0_15, %c0_16, %c0_17] : memref<2x64x48xf32, #tpu.memory_space<vmem>>, vector<1x64x48xf32>
    %18 = vector.shape_cast %17 : vector<1x64x48xf32> to vector<64x48xf32>
    %19 = vector.shape_cast %16 : vector<64x48xf32> to vector<1x64x48xf32>
    tpu.vector_store %arg4[%c0_15, %c0_16, %c0_17], %19 {strides = array<i32>} : memref<2x64x48xf32, #tpu.memory_space<vmem>>, vector<1x64x48xf32>,
    %c1_18 = arith.constant 1 : index
    %c0_19 = arith.constant 0 : index
    %c0_20 = arith.constant 0 : index
    %20 = vector.load %arg0[%c1_18, %c0_19, %c0_20] : memref<2x96x54xf32, #tpu.memory_space<vmem>>, vector<1x96x48xf32>
    %21 = vector.shape_cast %20 : vector<1x96x48xf32> to vector<96x48xf32>
    %cst_21 = arith.constant dense<0.000000e+00> : vector<64x48xf32>
    %22 = tpu.matmul %1, %21, %cst_21 {dimension_numbers = #tpu.dot_dimension_numbers<[1], [0], [0], [1], [0, 0, 1, 1], [], []>} : vector<64x96xf32>, vector<96x48xf32>, vector<64x48xf32> -> vector<64x48xf32>
    %c1_22 = arith.constant 1 : index
    %c0_23 = arith.constant 0 : index
    %c3_24 = arith.constant 3 : index
    %23 = vector.load %arg0[%c1_22, %c0_23, %c3_24] : memref<2x96x54xf32, #tpu.memory_space<vmem>>, vector<1x96x48xf32>
    %24 = vector.shape_cast %23 : vector<1x96x48xf32> to vector<96x48xf32>
    %cst_25 = arith.constant dense<0.000000e+00> : vector<64x48xf32>
    %25 = tpu.matmul %3, %24, %cst_25 {dimension_numbers = #tpu.dot_dimension_numbers<[1], [0], [0], [1], [0, 0, 1, 1], [], []>} : vector<64x96xf32>, vector<96x48xf32>, vector<64x48xf32> -> vector<64x48xf32>
    %26 = arith.addf %22, %25 : vector<64x48xf32>
    %c1_26 = arith.constant 1 : index
    %c0_27 = arith.constant 0 : index
    %c6_28 = arith.constant 6 : index
    %27 = vector.load %arg0[%c1_26, %c0_27, %c6_28] : memref<2x96x54xf32, #tpu.memory_space<vmem>>, vector<1x96x48xf32>
    %28 = vector.shape_cast %27 : vector<1x96x48xf32> to vector<96x48xf32>
    %cst_29 = arith.constant dense<0.000000e+00> : vector<64x48xf32>
    %29 = tpu.matmul %5, %28, %cst_29 {dimension_numbers = #tpu.dot_dimension_numbers<[1], [0], [0], [1], [0, 0, 1, 1], [], []>} : vector<64x96xf32>, vector<96x48xf32>, vector<64x48xf32> -> vector<64x48xf32>
    %30 = arith.addf %26, %29 : vector<64x48xf32>
    %c1_30 = arith.constant 1 : index
    %c0_31 = arith.constant 0 : index
    %c0_32 = arith.constant 0 : index
    %31 = vector.load %arg4[%c1_30, %c0_31, %c0_32] : memref<2x64x48xf32, #tpu.memory_space<vmem>>, vector<1x64x48xf32>
    %32 = vector.shape_cast %31 : vector<1x64x48xf32> to vector<64x48xf32>
    %33 = vector.shape_cast %30 : vector<64x48xf32> to vector<1x64x48xf32>
    tpu.vector_store %arg4[%c1_30, %c0_31, %c0_32], %33 {strides = array<i32>} : memref<2x64x48xf32, #tpu.memory_space<vmem>>, vector<1x64x48xf32>,
    %c0_33 = arith.constant 0 : index
    %c0_34 = arith.constant 0 : index
    %c0_35 = arith.constant 0 : index
    %34 = vector.load %arg4[%c0_33, %c0_34, %c0_35] : memref<2x64x48xf32, #tpu.memory_space<vmem>>, vector<2x64x48xf32>
    %cst_36 = arith.constant dense<0.000000e+00> : vector<64x48xf32>
    %35 = vector.multi_reduction <add>, %34, %cst_36 [0] : vector<2x64x48xf32> to vector<64x48xf32>
    %cst_37 = arith.constant dense<0.000000e+00> : vector<64xf32>
    %36 = vector.multi_reduction <add>, %35, %cst_37 [1] : vector<64x48xf32> to vector<64xf32>
    %37 = vector.shape_cast %36 : vector<64xf32> to vector<64x1xf32>
    %cst_38 = arith.constant 0.010416667 : f32
    %38 = vector.broadcast %cst_38 : f32 to vector<64x1xf32>
    %39 = arith.mulf %37, %38 : vector<64x1xf32>
    %40 = vector.shape_cast %39 : vector<64x1xf32> to vector<1x64x1xf32>
    %41 = vector.broadcast %40 : vector<1x64x1xf32> to vector<2x64x48xf32>
    %42 = arith.subf %34, %41 : vector<2x64x48xf32>
    %43 = arith.mulf %42, %42 : vector<2x64x48xf32>
    %cst_39 = arith.constant dense<0.000000e+00> : vector<64x48xf32>
    %44 = vector.multi_reduction <add>, %43, %cst_39 [0] : vector<2x64x48xf32> to vector<64x48xf32>
    %cst_40 = arith.constant dense<0.000000e+00> : vector<64xf32>
    %45 = vector.multi_reduction <add>, %44, %cst_40 [1] : vector<64x48xf32> to vector<64xf32>
    %46 = vector.shape_cast %45 : vector<64xf32> to vector<64x1xf32>
    %cst_41 = arith.constant 0.010416667 : f32
    %47 = vector.broadcast %cst_41 : f32 to vector<64x1xf32>
    %48 = arith.mulf %46, %47 : vector<64x1xf32>
    %cst_42 = arith.constant 9.99999974E-6 : f32
    %49 = vector.broadcast %cst_42 : f32 to vector<64x1xf32>
    %50 = arith.addf %48, %49 : vector<64x1xf32>
    %51 = math.rsqrt %50 : vector<64x1xf32>
    %c0_43 = arith.constant 0 : index
    %c0_44 = arith.constant 0 : index
    %52 = vector.load %arg2[%c0_43, %c0_44] : memref<64x1xf32, #tpu.memory_space<vmem>>, vector<64x1xf32>
    %53 = arith.mulf %52, %51 : vector<64x1xf32>
    %54 = vector.shape_cast %53 : vector<64x1xf32> to vector<1x64x1xf32>
    %55 = vector.broadcast %54 : vector<1x64x1xf32> to vector<2x64x48xf32>
    %56 = arith.mulf %42, %55 : vector<2x64x48xf32>
    %c0_45 = arith.constant 0 : index
    %c0_46 = arith.constant 0 : index
    %57 = vector.load %arg3[%c0_45, %c0_46] : memref<64x1xf32, #tpu.memory_space<vmem>>, vector<64x1xf32>
    %58 = vector.shape_cast %57 : vector<64x1xf32> to vector<1x64x1xf32>
    %59 = vector.broadcast %58 : vector<1x64x1xf32> to vector<2x64x48xf32>
    %60 = arith.addf %56, %59 : vector<2x64x48xf32>
    %cst_47 = arith.constant 5.000000e-01 : f32
    %61 = vector.broadcast %cst_47 : f32 to vector<2x64x48xf32>
    %62 = arith.mulf %61, %60 : vector<2x64x48xf32>
    %63 = math.tanh %62 : vector<2x64x48xf32>
    %64 = math.exp %60 : vector<2x64x48xf32>
    %cst_48 = arith.constant 1.000000e+00 : f32
    %65 = vector.broadcast %cst_48 : f32 to vector<2x64x48xf32>
    %66 = arith.addf %64, %65 : vector<2x64x48xf32>
    %67 = arith.mulf %63, %66 : vector<2x64x48xf32>
    %cst_49 = arith.constant 0.000000e+00 : f32
    %68 = vector.broadcast %cst_49 : f32 to vector<2x64x48xf32>
    %69 = arith.cmpf ogt, %60, %68 : vector<2x64x48xf32>
    %70 = arith.select %69, %60, %67 : vector<2x64x48xi1>, vector<2x64x48xf32>
    %c0_50 = arith.constant 0 : index
    %c0_51 = arith.constant 0 : index
    %c0_52 = arith.constant 0 : index
    %71 = vector.load %arg4[%c0_50, %c0_51, %c0_52] : memref<2x64x48xf32, #tpu.memory_space<vmem>>, vector<2x64x48xf32>
    tpu.vector_store %arg4[%c0_50, %c0_51, %c0_52], %70 {strides = array<i32>} : memref<2x64x48xf32, #tpu.memory_space<vmem>>, vector<2x64x48xf32>,
    return
  }
}

</mosaic_0001>

<llo_original>
// kernel: encoder_forward.3
$region0: #{encoder_forward.3}
  #allocation0 [shape = 'u32[]', space=smem, size = 0x4, offset = 0x4, fixed_abs, tag = 'smem constant byte address 0x4 - core index']
  #allocation1 [shape = 'u32[144,128]{1,0:T(1,128)}', space=vmem, size = 0x12000, scoped, tag = 'internal scratch']
  %s0 = inlined_call_operand.vmem [shape: f32[2,3,270], index: 0, kind: input, shape index: {}]
  %s1 = inlined_call_operand.vmem [shape: f32[3,16,3], index: 1, kind: input, shape index: {}]
  %s2 = inlined_call_operand.vmem [shape: f32[16,1], index: 2, kind: input, shape index: {}]
  %s3 = inlined_call_operand.vmem [shape: f32[16,1], index: 3, kind: input, shape index: {}]
  %s4 = inlined_call_operand.vmem [shape: f32[2,16,240], index: 4, kind: output, shape index: {}]
  %s5 = sld [smem:[#allocation0]]
  $region26: #{encoder_forward.3} parent=0
    _
  %s7 = ssub.s32 1, %s5
  %s8 = scalar_select 0, %s7, %s5
  // Predicated region
  $region2: #{encoder_forward.3} parent=0 // pred_check
    _
  $region3: #{encoder_forward.3} parent=0 // pred_check_branch
    %10 = sbr.rel (0) target = $region5
  $region4: #{encoder_forward.3} parent=0 // pred_region
    _
  $region5: #{encoder_forward.3} parent=0 // pred_fallthru
    _
  // Predicated region
  $region6: #{encoder_forward.3} parent=0 // pred_check
    _
  $region7: #{encoder_forward.3} parent=0 // pred_check_branch
    %12 = sbr.rel (0) target = $region9
  $region8: #{encoder_forward.3} parent=0 // pred_region
    _
  $region9: #{encoder_forward.3} parent=0 // pred_fallthru
    _
  // Predicated region
  $region10: #{encoder_forward.3} parent=0 // pred_check
    _
  $region11: #{encoder_forward.3} parent=0 // pred_check_branch
    %14 = sbr.rel (0) target = $region13
  $region12: #{encoder_forward.3} parent=0 // pred_region
    _
  $region13: #{encoder_forward.3} parent=0 // pred_fallthru
    _
  // Predicated region
  $region14: #{encoder_forward.3} parent=0 // pred_check
    _
  $region15: #{encoder_forward.3} parent=0 // pred_check_branch
    %16 = sbr.rel (0) target = $region17
  $region16: #{encoder_forward.3} parent=0 // pred_region
    _
  $region17: #{encoder_forward.3} parent=0 // pred_fallthru
    _
  %v17 = vld [vmem:[%s1] sm:$0xff]
  %v18 = vld [vmem:[%s1 + $0x8] sm:$0xff]
  %s19 = scalar_lea.vmem %s1, 16
  %v20 = vld [vmem:[%s19] sm:$0xff]
  %v21 = vld [vmem:[%s19 + $0x8] sm:$0xff]
  %s22 = scalar_lea.vmem %s1, 32
  %v23 = vld [vmem:[%s22] sm:$0xff]
  %v24 = vld [vmem:[%s22 + $0x8] sm:$0xff]
  %v25 = vld [vmem:[%s0] sm:$0x77]
  %v27 = vcombine.high %v25, %v25
  %28 = vrot.lane.b32.xlu0 %v25, 113
  %v29 = vpop.permute.xlu0 %28
  %30 = vrot.lane.b32.xlu0 %v27, 113
  %v31 = vpop.permute.xlu0 %30
  %vm32 = vcmask 924672
  %v33 = vsel %vm32, %v29, %v31
  %vm34 = vcmask 23552
  %v36 = vsel %vm34, %v20, 0
  %v39 = vsel %vm34, %v21, 0
  %vm41 = vcmask 1042432
  %v42 = vsel %vm41, %v33, 0
  %v44 = vsel %vm41, %v31, 0
  %46 = vmatprep.subr.mxu0 %v44
  %47 = vmatpush1.msra.mxu0 %v42
  %48 = vmatprep.subr.mxu0 0.0
  %49 = vmatpush1.msra.mxu0 0.0
  %50 = vmatprep.subr.mxu0 0.0
  %51 = vmatpush1.msra.mxu0 0.0
  %52 = vmatprep.subr.mxu0 0.0
  %53 = vmatpush1.msra.mxu0 0.0
  %54 = vmatprep.subr.mxu0 0.0
  %55 = vmatpush1.msra.mxu0 0.0
  %56 = vmatprep.subr.mxu0 0.0
  %57 = vmatpush1.msra.mxu0 0.0
  %58 = vmatprep.subr.mxu0 0.0
  %59 = vmatpush1.msra.mxu0 0.0
  %60 = vmatprep.subr.mxu0 0.0
  %61 = vmatpush1.msra.mxu0 0.0
  %62 = vmatprep.subr.mxu0 0.0
  %63 = vmatpush1.msra.mxu0 0.0
  %64 = vmatprep.subr.mxu0 0.0
  %65 = vmatpush1.msra.mxu0 0.0
  %66 = vmatprep.subr.mxu0 0.0
  %67 = vmatpush1.msra.mxu0 0.0
  %68 = vmatprep.subr.mxu0 0.0
  %69 = vmatpush1.msra.mxu0 0.0
  %70 = vmatprep.subr.mxu0 0.0
  %71 = vmatpush1.msra.mxu0 0.0
  %72 = vmatprep.subr.mxu0 0.0
  %73 = vmatpush1.msra.mxu0 0.0
  %74 = vmatprep.subr.mxu0 0.0
  %75 = vmatpush1.msra.mxu0 0.0
  %76 = vmatprep.subr.mxu0 0.0
  %77 = vmatpush1.msra.mxu0 0.0
  %78 = vmatprep.subr.mxu0 0.0
  %79 = vmatpush1.msra.mxu0 0.0
  %80 = vmatprep.subr.mxu0 0.0
  %81 = vmatpush1.msra.mxu0 0.0
  %82 = vmatprep.subr.mxu0 0.0
  %83 = vmatpush1.msra.mxu0 0.0
  %84 = vmatprep.subr.mxu0 0.0
  %85 = vmatpush1.msra.mxu0 0.0
  %86 = vmatprep.subr.mxu0 0.0
  %87 = vmatpush1.msra.mxu0 0.0
  %88 = vmatprep.subr.mxu0 0.0
  %89 = vmatpush1.msra.mxu0 0.0
  %90 = vmatprep.subr.mxu0 0.0
  %91 = vmatpush1.msra.mxu0 0.0
  %92 = vmatprep.subr.mxu0 0.0
  %93 = vmatpush1.msra.mxu0 0.0
  %94 = vmatprep.subr.mxu0 0.0
  %95 = vmatpush1.msra.mxu0 0.0
  %96 = vmatprep.subr.mxu0 0.0
  %97 = vmatpush1.msra.mxu0 0.0
  %98 = vmatprep.subr.mxu0 0.0
  %99 = vmatpush1.msra.mxu0 0.0
  %100 = vmatprep.subr.mxu0 0.0
  %101 = vmatpush1.msra.mxu0 0.0
  %102 = vmatprep.subr.mxu0 0.0
  %103 = vmatpush1.msra.mxu0 0.0
  %104 = vmatprep.subr.mxu0 0.0
  %105 = vmatpush1.msra.mxu0 0.0
  %106 = vmatprep.subr.mxu0 0.0
  %107 = vmatpush1.msra.mxu0 0.0
  %108 = vmatprep.subr.mxu0 0.0
  %109 = vmatpush1.msra.mxu0 0.0
  %110 = vmatprep.mubr.f32.mxu0 0.0
  %111 = vmatmul.mubr.f32.gmra.mrb[0].mxu0 %v36
  %v112 = vpop.f32.mrb[0].mxu0
  %v113 = vadd.f32 0.0, %v112
  %v114 = vpop.f32.mrb[0].mxu0
  %v115 = vadd.f32 0.0, %v114
  %116 = vmatprep.mubr.f32.mxu0 0.0
  %117 = vmatmul.mubr.f32.gmra.mrb[0].mxu0 %v39
  %v118 = vpop.f32.mrb[0].mxu0
  %v119 = vadd.f32 0.0, %v118
  %v120 = vpop.f32.mrb[0].mxu0
  %v121 = vadd.f32 0.0, %v120
  %122 = vdwg.mxu0
  %v124 = vsel %vm34, %v17, 0
  %v127 = vsel %vm34, %v18, 0
  %v129 = vsel %vm41, %v25, 0
  %v131 = vsel %vm41, %v27, 0
  %133 = vmatprep.subr.mxu0 %v131
  %134 = vmatpush1.msra.mxu0 %v129
  %135 = vmatprep.subr.mxu0 0.0
  %136 = vmatpush1.msra.mxu0 0.0
  %137 = vmatprep.subr.mxu0 0.0
  %138 = vmatpush1.msra.mxu0 0.0
  %139 = vmatprep.subr.mxu0 0.0
  %140 = vmatpush1.msra.mxu0 0.0
  %141 = vmatprep.subr.mxu0 0.0
  %142 = vmatpush1.msra.mxu0 0.0
  %143 = vmatprep.subr.mxu0 0.0
  %144 = vmatpush1.msra.mxu0 0.0
  %145 = vmatprep.subr.mxu0 0.0
  %146 = vmatpush1.msra.mxu0 0.0
  %147 = vmatprep.subr.mxu0 0.0
  %148 = vmatpush1.msra.mxu0 0.0
  %149 = vmatprep.subr.mxu0 0.0
  %150 = vmatpush1.msra.mxu0 0.0
  %151 = vmatprep.subr.mxu0 0.0
  %152 = vmatpush1.msra.mxu0 0.0
  %153 = vmatprep.subr.mxu0 0.0
  %154 = vmatpush1.msra.mxu0 0.0
  %155 = vmatprep.subr.mxu0 0.0
  %156 = vmatpush1.msra.mxu0 0.0
  %157 = vmatprep.subr.mxu0 0.0
  %158 = vmatpush1.msra.mxu0 0.0
  %159 = vmatprep.subr.mxu0 0.0
  %160 = vmatpush1.msra.mxu0 0.0
  %161 = vmatprep.subr.mxu0 0.0
  %162 = vmatpush1.msra.mxu0 0.0
  %163 = vmatprep.subr.mxu0 0.0
  %164 = vmatpush1.msra.mxu0 0.0
  %165 = vmatprep.subr.mxu0 0.0
  %166 = vmatpush1.msra.mxu0 0.0
  %167 = vmatprep.subr.mxu0 0.0
  %168 = vmatpush1.msra.mxu0 0.0
  %169 = vmatprep.subr.mxu0 0.0
  %170 = vmatpush1.msra.mxu0 0.0
  %171 = vmatprep.subr.mxu0 0.0
  %172 = vmatpush1.msra.mxu0 0.0
  %173 = vmatprep.subr.mxu0 0.0
  %174 = vmatpush1.msra.mxu0 0.0
  %175 = vmatprep.subr.mxu0 0.0
  %176 = vmatpush1.msra.mxu0 0.0
  %177 = vmatprep.subr.mxu0 0.0
  %178 = vmatpush1.msra.mxu0 0.0
  %179 = vmatprep.subr.mxu0 0.0
  %180 = vmatpush1.msra.mxu0 0.0
  %181 = vmatprep.subr.mxu0 0.0
  %182 = vmatpush1.msra.mxu0 0.0
  %183 = vmatprep.subr.mxu0 0.0
  %184 = vmatpush1.msra.mxu0 0.0
  %185 = vmatprep.subr.mxu0 0.0
  %186 = vmatpush1.msra.mxu0 0.0
  %187 = vmatprep.subr.mxu0 0.0
  %188 = vmatpush1.msra.mxu0 0.0
  %189 = vmatprep.subr.mxu0 0.0
  %190 = vmatpush1.msra.mxu0 0.0
  %191 = vmatprep.subr.mxu0 0.0
  %192 = vmatpush1.msra.mxu0 0.0
  %193 = vmatprep.subr.mxu0 0.0
  %194 = vmatpush1.msra.mxu0 0.0
  %195 = vmatprep.subr.mxu0 0.0
  %196 = vmatpush1.msra.mxu0 0.0
  %197 = vmatprep.mubr.f32.mxu0 0.0
  %198 = vmatmul.mubr.f32.gmra.mrb[0].mxu0 %v124
  %v199 = vpop.f32.mrb[0].mxu0
  %v200 = vadd.f32 %v113, %v199
  %v201 = vpop.f32.mrb[0].mxu0
  %v202 = vadd.f32 %v115, %v201
  %203 = vmatprep.mubr.f32.mxu0 0.0
  %204 = vmatmul.mubr.f32.gmra.mrb[0].mxu0 %v127
  %v205 = vpop.f32.mrb[0].mxu0
  %v206 = vadd.f32 %v119, %v205
  %v207 = vpop.f32.mrb[0].mxu0
  %v208 = vadd.f32 %v121, %v207
  %209 = vdwg.mxu0
  %v210 = vld [vmem:[%s0] sm:$0x77]
  %v211 = vld [vmem:[%s0 + $0x8] sm:$0x7]
  %v214 = vcombine.high %v210, %v210
  %215 = vrot.lane.b32.xlu0 %v210, 98
  %v216 = vpop.permute.xlu0 %215
  %217 = vrot.lane.b32.xlu0 %v214, 98
  %v218 = vpop.permute.xlu0 %217
  %219 = vrot.lane.b32.xlu0 %v211, 98
  %v220 = vpop.permute.xlu0 %219
  %vm221 = vcmask 801792
  %v222 = vsel %vm221, %v216, %v218
  %v223 = vsel %vm221, %v218, %v220
  %v225 = vsel %vm34, %v23, 0
  %v228 = vsel %vm34, %v24, 0
  %v230 = vsel %vm41, %v222, 0
  %v232 = vsel %vm41, %v223, 0
  %234 = vmatprep.subr.mxu0 %v232
  %235 = vmatpush1.msra.mxu0 %v230
  %236 = vmatprep.subr.mxu0 0.0
  %237 = vmatpush1.msra.mxu0 0.0
  %238 = vmatprep.subr.mxu0 0.0
  %239 = vmatpush1.msra.mxu0 0.0
  %240 = vmatprep.subr.mxu0 0.0
  %241 = vmatpush1.msra.mxu0 0.0
  %242 = vmatprep.subr.mxu0 0.0
  %243 = vmatpush1.msra.mxu0 0.0
  %244 = vmatprep.subr.mxu0 0.0
  %245 = vmatpush1.msra.mxu0 0.0
  %246 = vmatprep.subr.mxu0 0.0
  %247 = vmatpush1.msra.mxu0 0.0
  %248 = vmatprep.subr.mxu0 0.0
  %249 = vmatpush1.msra.mxu0 0.0
  %250 = vmatprep.subr.mxu0 0.0
  %251 = vmatpush1.msra.mxu0 0.0
  %252 = vmatprep.subr.mxu0 0.0
  %253 = vmatpush1.msra.mxu0 0.0
  %254 = vmatprep.subr.mxu0 0.0
  %255 = vmatpush1.msra.mxu0 0.0
  %256 = vmatprep.subr.mxu0 0.0
  %257 = vmatpush1.msra.mxu0 0.0
  %258 = vmatprep.subr.mxu0 0.0
  %259 = vmatpush1.msra.mxu0 0.0
  %260 = vmatprep.subr.mxu0 0.0
  %261 = vmatpush1.msra.mxu0 0.0
  %262 = vmatprep.subr.mxu0 0.0
  %263 = vmatpush1.msra.mxu0 0.0
  %264 = vmatprep.subr.mxu0 0.0
  %265 = vmatpush1.msra.mxu0 0.0
  %266 = vmatprep.subr.mxu0 0.0
  %267 = vmatpush1.msra.mxu0 0.0
  %268 = vmatprep.subr.mxu0 0.0
  %269 = vmatpush1.msra.mxu0 0.0
  %270 = vmatprep.subr.mxu0 0.0
  %271 = vmatpush1.msra.mxu0 0.0
  %272 = vmatprep.subr.mxu0 0.0
  %273 = vmatpush1.msra.mxu0 0.0
  %274 = vmatprep.subr.mxu0 0.0
  %275 = vmatpush1.msra.mxu0 0.0
  %276 = vmatprep.subr.mxu0 0.0
  %277 = vmatpush1.msra.mxu0 0.0
  %278 = vmatprep.subr.mxu0 0.0
  %279 = vmatpush1.msra.mxu0 0.0
  %280 = vmatprep.subr.mxu0 0.0
  %281 = vmatpush1.msra.mxu0 0.0
  %282 = vmatprep.subr.mxu0 0.0
  %283 = vmatpush1.msra.mxu0 0.0
  %284 = vmatprep.subr.mxu0 0.0
  %285 = vmatpush1.msra.mxu0 0.0
  %286 = vmatprep.subr.mxu0 0.0
  %287 = vmatpush1.msra.mxu0 0.0
  %288 = vmatprep.subr.mxu0 0.0
  %289 = vmatpush1.msra.mxu0 0.0
  %290 = vmatprep.subr.mxu0 0.0
  %291 = vmatpush1.msra.mxu0 0.0
  %292 = vmatprep.subr.mxu0 0.0
  %293 = vmatpush1.msra.mxu0 0.0
  %294 = vmatprep.subr.mxu0 0.0
  %295 = vmatpush1.msra.mxu0 0.0
  %296 = vmatprep.subr.mxu0 0.0
  %297 = vmatpush1.msra.mxu0 0.0
  %298 = vmatprep.mubr.f32.mxu0 0.0
  %299 = vmatmul.mubr.f32.gmra.mrb[0].mxu0 %v225
  %v300 = vpop.f32.mrb[0].mxu0
  %v301 = vadd.f32 0.0, %v300
  %v302 = vpop.f32.mrb[0].mxu0
  %v303 = vadd.f32 0.0, %v302
  %304 = vmatprep.mubr.f32.mxu0 0.0
  %305 = vmatmul.mubr.f32.gmra.mrb[0].mxu0 %v228
  %v306 = vpop.f32.mrb[0].mxu0
  %v307 = vadd.f32 0.0, %v306
  %v308 = vpop.f32.mrb[0].mxu0
  %v309 = vadd.f32 0.0, %v308
  %310 = vdwg.mxu0
  %v311 = vadd.f32 %v200, %v301
  %v312 = vadd.f32 %v202, %v303
  %v313 = vadd.f32 %v206, %v307
  %v314 = vadd.f32 %v208, %v309
  %315 = vst [vmem:[%s4] sm:$0xff] %v311
  %vm316 = vcmask 916480
  %317 = vst.msk [vmem:[%s4 + $0x8] sm:$0xff] %vm316, %v312
  %318 = vst [vmem:[%s4 + $0x10] sm:$0xff] %v313
  %319 = vst.msk [vmem:[%s4 + $0x18] sm:$0xff] %vm316, %v314
  %s320 = scalar_lea.vmem %s0, 12
  %v321 = vld [vmem:[%s320] sm:$0x77]
  %v323 = vcombine.high %v321, %v321
  %324 = vrot.lane.b32.xlu0 %v321, 113
  %v325 = vpop.permute.xlu0 %324
  %326 = vrot.lane.b32.xlu0 %v323, 113
  %v327 = vpop.permute.xlu0 %326
  %v328 = vsel %vm32, %v325, %v327
  %v329 = vsel %vm41, %v328, 0
  %v331 = vsel %vm41, %v327, 0
  %333 = vmatprep.subr.mxu0 %v331
  %334 = vmatpush1.msra.mxu0 %v329
  %335 = vmatprep.subr.mxu0 0.0
  %336 = vmatpush1.msra.mxu0 0.0
  %337 = vmatprep.subr.mxu0 0.0
  %338 = vmatpush1.msra.mxu0 0.0
  %339 = vmatprep.subr.mxu0 0.0
  %340 = vmatpush1.msra.mxu0 0.0
  %341 = vmatprep.subr.mxu0 0.0
  %342 = vmatpush1.msra.mxu0 0.0
  %343 = vmatprep.subr.mxu0 0.0
  %344 = vmatpush1.msra.mxu0 0.0
  %345 = vmatprep.subr.mxu0 0.0
  %346 = vmatpush1.msra.mxu0 0.0
  %347 = vmatprep.subr.mxu0 0.0
  %348 = vmatpush1.msra.mxu0 0.0
  %349 = vmatprep.subr.mxu0 0.0
  %350 = vmatpush1.msra.mxu0 0.0
  %351 = vmatprep.subr.mxu0 0.0
  %352 = vmatpush1.msra.mxu0 0.0
  %353 = vmatprep.subr.mxu0 0.0
  %354 = vmatpush1.msra.mxu0 0.0
  %355 = vmatprep.subr.mxu0 0.0
  %356 = vmatpush1.msra.mxu0 0.0
  %357 = vmatprep.subr.mxu0 0.0
  %358 = vmatpush1.msra.mxu0 0.0
  %359 = vmatprep.subr.mxu0 0.0
  %360 = vmatpush1.msra.mxu0 0.0
  %361 = vmatprep.subr.mxu0 0.0
  %362 = vmatpush1.msra.mxu0 0.0
  %363 = vmatprep.subr.mxu0 0.0
  %364 = vmatpush1.msra.mxu0 0.0
  %365 = vmatprep.subr.mxu0 0.0
  %366 = vmatpush1.msra.mxu0 0.0
  %367 = vmatprep.subr.mxu0 0.0
  %368 = vmatpush1.msra.mxu0 0.0
  %369 = vmatprep.subr.mxu0 0.0
  %370 = vmatpush1.msra.mxu0 0.0
  %371 = vmatprep.subr.mxu0 0.0
  %372 = vmatpush1.msra.mxu0 0.0
  %373 = vmatprep.subr.mxu0 0.0
  %374 = vmatpush1.msra.mxu0 0.0
  %375 = vmatprep.subr.mxu0 0.0
  %376 = vmatpush1.msra.mxu0 0.0
  %377 = vmatprep.subr.mxu0 0.0
  %378 = vmatpush1.msra.mxu0 0.0
  %379 = vmatprep.subr.mxu0 0.0
  %380 = vmatpush1.msra.mxu0 0.0
  %381 = vmatprep.subr.mxu0 0.0
  %382 = vmatpush1.msra.mxu0 0.0
  %383 = vmatprep.subr.mxu0 0.0
  %384 = vmatpush1.msra.mxu0 0.0
  %385 = vmatprep.subr.mxu0 0.0
  %386 = vmatpush1.msra.mxu0 0.0
  %387 = vmatprep.subr.mxu0 0.0
  %388 = vmatpush1.msra.mxu0 0.0
  %389 = vmatprep.subr.mxu0 0.0
  %390 = vmatpush1.msra.mxu0 0.0
  %391 = vmatprep.subr.mxu0 0.0
  %392 = vmatpush1.msra.mxu0 0.0
  %393 = vmatprep.subr.mxu0 0.0
  %394 = vmatpush1.msra.mxu0 0.0
  %395 = vmatprep.subr.mxu0 0.0
  %396 = vmatpush1.msra.mxu0 0.0
  %397 = vmatprep.mubr.f32.mxu0 0.0
  %398 = vmatmul.mubr.f32.gmra.mrb[0].mxu0 %v36
  %v399 = vpop.f32.mrb[0].mxu0
  %v400 = vadd.f32 0.0, %v399
  %v401 = vpop.f32.mrb[0].mxu0
  %v402 = vadd.f32 0.0, %v401
  %403 = vmatprep.mubr.f32.mxu0 0.0
  %404 = vmatmul.mubr.f32.gmra.mrb[0].mxu0 %v39
  %v405 = vpop.f32.mrb[0].mxu0
  %v406 = vadd.f32 0.0, %v405
  %v407 = vpop.f32.mrb[0].mxu0
  %v408 = vadd.f32 0.0, %v407
  %409 = vdwg.mxu0
  %v410 = vsel %vm41, %v321, 0
  %v412 = vsel %vm41, %v323, 0
  %414 = vmatprep.subr.mxu0 %v412
  %415 = vmatpush1.msra.mxu0 %v410
  %416 = vmatprep.subr.mxu0 0.0
  %417 = vmatpush1.msra.mxu0 0.0
  %418 = vmatprep.subr.mxu0 0.0
  %419 = vmatpush1.msra.mxu0 0.0
  %420 = vmatprep.subr.mxu0 0.0
  %421 = vmatpush1.msra.mxu0 0.0
  %422 = vmatprep.subr.mxu0 0.0
  %423 = vmatpush1.msra.mxu0 0.0
  %424 = vmatprep.subr.mxu0 0.0
  %425 = vmatpush1.msra.mxu0 0.0
  %426 = vmatprep.subr.mxu0 0.0
  %427 = vmatpush1.msra.mxu0 0.0
  %428 = vmatprep.subr.mxu0 0.0
  %429 = vmatpush1.msra.mxu0 0.0
  %430 = vmatprep.subr.mxu0 0.0
  %431 = vmatpush1.msra.mxu0 0.0
  %432 = vmatprep.subr.mxu0 0.0
  %433 = vmatpush1.msra.mxu0 0.0
  %434 = vmatprep.subr.mxu0 0.0
  %435 = vmatpush1.msra.mxu0 0.0
  %436 = vmatprep.subr.mxu0 0.0
  %437 = vmatpush1.msra.mxu0 0.0
  %438 = vmatprep.subr.mxu0 0.0
  %439 = vmatpush1.msra.mxu0 0.0
  %440 = vmatprep.subr.mxu0 0.0
  %441 = vmatpush1.msra.mxu0 0.0
  %442 = vmatprep.subr.mxu0 0.0
  %443 = vmatpush1.msra.mxu0 0.0
  %444 = vmatprep.subr.mxu0 0.0
  %445 = vmatpush1.msra.mxu0 0.0
  %446 = vmatprep.subr.mxu0 0.0
  %447 = vmatpush1.msra.mxu0 0.0
  %448 = vmatprep.subr.mxu0 0.0
  %449 = vmatpush1.msra.mxu0 0.0
  %450 = vmatprep.subr.mxu0 0.0
  %451 = vmatpush1.msra.mxu0 0.0
  %452 = vmatprep.subr.mxu0 0.0
  %453 = vmatpush1.msra.mxu0 0.0
  %454 = vmatprep.subr.mxu0 0.0
  %455 = vmatpush1.msra.mxu0 0.0
  %456 = vmatprep.subr.mxu0 0.0
  %457 = vmatpush1.msra.mxu0 0.0
  %458 = vmatprep.subr.mxu0 0.0
  %459 = vmatpush1.msra.mxu0 0.0
  %460 = vmatprep.subr.mxu0 0.0
  %461 = vmatpush1.msra.mxu0 0.0
  %462 = vmatprep.subr.mxu0 0.0
  %463 = vmatpush1.msra.mxu0 0.0
  %464 = vmatprep.subr.mxu0 0.0
  %465 = vmatpush1.msra.mxu0 0.0
  %466 = vmatprep.subr.mxu0 0.0
  %467 = vmatpush1.msra.mxu0 0.0
  %468 = vmatprep.subr.mxu0 0.0
  %469 = vmatpush1.msra.mxu0 0.0
  %470 = vmatprep.subr.mxu0 0.0
  %471 = vmatpush1.msra.mxu0 0.0
  %472 = vmatprep.subr.mxu0 0.0
  %473 = vmatpush1.msra.mxu0 0.0
  %474 = vmatprep.subr.mxu0 0.0
  %475 = vmatpush1.msra.mxu0 0.0
  %476 = vmatprep.subr.mxu0 0.0
  %477 = vmatpush1.msra.mxu0 0.0
  %478 = vmatprep.mubr.f32.mxu0 0.0
  %479 = vmatmul.mubr.f32.gmra.mrb[0].mxu0 %v124
  %v480 = vpop.f32.mrb[0].mxu0
  %v481 = vadd.f32 %v400, %v480
  %v482 = vpop.f32.mrb[0].mxu0
  %v483 = vadd.f32 %v402, %v482
  %484 = vmatprep.mubr.f32.mxu0 0.0
  %485 = vmatmul.mubr.f32.gmra.mrb[0].mxu0 %v127
  %v486 = vpop.f32.mrb[0].mxu0
  %v487 = vadd.f32 %v406, %v486
  %v488 = vpop.f32.mrb[0].mxu0
  %v489 = vadd.f32 %v408, %v488
  %490 = vdwg.mxu0
  %v491 = vld [vmem:[%s320] sm:$0x77]
  %v492 = vld [vmem:[%s320 + $0x8] sm:$0x7]
  %v495 = vcombine.high %v491, %v491
  %496 = vrot.lane.b32.xlu0 %v491, 98
  %v497 = vpop.permute.xlu0 %496
  %498 = vrot.lane.b32.xlu0 %v495, 98
  %v499 = vpop.permute.xlu0 %498
  %500 = vrot.lane.b32.xlu0 %v492, 98
  %v501 = vpop.permute.xlu0 %500
  %v502 = vsel %vm221, %v497, %v499
  %v503 = vsel %vm221, %v499, %v501
  %v504 = vsel %vm41, %v502, 0
  %v506 = vsel %vm41, %v503, 0
  %508 = vmatprep.subr.mxu0 %v506
  %509 = vmatpush1.msra.mxu0 %v504
  %510 = vmatprep.subr.mxu0 0.0
  %511 = vmatpush1.msra.mxu0 0.0
  %512 = vmatprep.subr.mxu0 0.0
  %513 = vmatpush1.msra.mxu0 0.0
  %514 = vmatprep.subr.mxu0 0.0
  %515 = vmatpush1.msra.mxu0 0.0
  %516 = vmatprep.subr.mxu0 0.0
  %517 = vmatpush1.msra.mxu0 0.0
  %518 = vmatprep.subr.mxu0 0.0
  %519 = vmatpush1.msra.mxu0 0.0
  %520 = vmatprep.subr.mxu0 0.0
  %521 = vmatpush1.msra.mxu0 0.0
  %522 = vmatprep.subr.mxu0 0.0
  %523 = vmatpush1.msra.mxu0 0.0
  %524 = vmatprep.subr.mxu0 0.0
  %525 = vmatpush1.msra.mxu0 0.0
  %526 = vmatprep.subr.mxu0 0.0
  %527 = vmatpush1.msra.mxu0 0.0
  %528 = vmatprep.subr.mxu0 0.0
  %529 = vmatpush1.msra.mxu0 0.0
  %530 = vmatprep.subr.mxu0 0.0
  %531 = vmatpush1.msra.mxu0 0.0
  %532 = vmatprep.subr.mxu0 0.0
  %533 = vmatpush1.msra.mxu0 0.0
  %534 = vmatprep.subr.mxu0 0.0
  %535 = vmatpush1.msra.mxu0 0.0
  %536 = vmatprep.subr.mxu0 0.0
  %537 = vmatpush1.msra.mxu0 0.0
  %538 = vmatprep.subr.mxu0 0.0
  %539 = vmatpush1.msra.mxu0 0.0
  %540 = vmatprep.subr.mxu0 0.0
  %541 = vmatpush1.msra.mxu0 0.0
  %542 = vmatprep.subr.mxu0 0.0
  %543 = vmatpush1.msra.mxu0 0.0
  %544 = vmatprep.subr.mxu0 0.0
  %545 = vmatpush1.msra.mxu0 0.0
  %546 = vmatprep.subr.mxu0 0.0
  %547 = vmatpush1.msra.mxu0 0.0
  %548 = vmatprep.subr.mxu0 0.0
  %549 = vmatpush1.msra.mxu0 0.0
  %550 = vmatprep.subr.mxu0 0.0
  %551 = vmatpush1.msra.mxu0 0.0
  %552 = vmatprep.subr.mxu0 0.0
  %553 = vmatpush1.msra.mxu0 0.0
  %554 = vmatprep.subr.mxu0 0.0
  %555 = vmatpush1.msra.mxu0 0.0
  %556 = vmatprep.subr.mxu0 0.0
  %557 = vmatpush1.msra.mxu0 0.0
  %558 = vmatprep.subr.mxu0 0.0
  %559 = vmatpush1.msra.mxu0 0.0
  %560 = vmatprep.subr.mxu0 0.0
  %561 = vmatpush1.msra.mxu0 0.0
  %562 = vmatprep.subr.mxu0 0.0
  %563 = vmatpush1.msra.mxu0 0.0
  %564 = vmatprep.subr.mxu0 0.0
  %565 = vmatpush1.msra.mxu0 0.0
  %566 = vmatprep.subr.mxu0 0.0
  %567 = vmatpush1.msra.mxu0 0.0
  %568 = vmatprep.subr.mxu0 0.0
  %569 = vmatpush1.msra.mxu0 0.0
  %570 = vmatprep.subr.mxu0 0.0
  %571 = vmatpush1.msra.mxu0 0.0
  %572 = vmatprep.mubr.f32.mxu0 0.0
  %573 = vmatmul.mubr.f32.gmra.mrb[0].mxu0 %v225
  %v574 = vpop.f32.mrb[0].mxu0
  %v575 = vadd.f32 0.0, %v574
  %v576 = vpop.f32.mrb[0].mxu0
  %v577 = vadd.f32 0.0, %v576
  %578 = vmatprep.mubr.f32.mxu0 0.0
  %579 = vmatmul.mubr.f32.gmra.mrb[0].mxu0 %v228
  %v580 = vpop.f32.mrb[0].mxu0
  %v581 = vadd.f32 0.0, %v580
  %v582 = vpop.f32.mrb[0].mxu0
  %v583 = vadd.f32 0.0, %v582
  %584 = vdwg.mxu0
  %v585 = vadd.f32 %v481, %v575
  %v586 = vadd.f32 %v483, %v577
  %v587 = vadd.f32 %v487, %v581
  %v588 = vadd.f32 %v489, %v583
  %s589 = scalar_lea.vmem %s4, 32
  %590 = vst [vmem:[%s589] sm:$0xff] %v585
  %591 = vst.msk [vmem:[%s589 + $0x8] sm:$0xff] %vm316, %v586
  %592 = vst [vmem:[%s589 + $0x10] sm:$0xff] %v587
  %593 = vst.msk [vmem:[%s589 + $0x18] sm:$0xff] %vm316, %v588
  %v594 = vld [vmem:[%s4] sm:$0xff]
  %v595 = vld [vmem:[%s4 + $0x8] sm:$0xff]
  %v596 = vld [vmem:[%s4 + $0x10] sm:$0xff]
  %v597 = vld [vmem:[%s4 + $0x18] sm:$0xff]
  %v598 = vld [vmem:[%s4 + $0x20] sm:$0xff]
  %v599 = vld [vmem:[%s4 + $0x28] sm:$0xff]
  %v600 = vld [vmem:[%s4 + $0x30] sm:$0xff]
  %v601 = vld [vmem:[%s4 + $0x38] sm:$0xff]
  %v602 = vadd.f32 %v594, %v598
  %v603 = vsel %vm316, %v595, 0.0
  %v604 = vsel %vm316, %v599, 0.0
  %v605 = vadd.f32 %v603, %v604
  %v606 = vadd.f32 %v596, %v600
  %v607 = vsel %vm316, %v597, 0.0
  %v608 = vsel %vm316, %v601, 0.0
  %v609 = vadd.f32 %v607, %v608
  %v610 = vsel %vm316, %v605, 0.0
  %v611 = vadd.f32 %v602, %v610
  %612 = vadd.xlane.f32.xlu0 %v611
  %v613 = vpop.xlane.xlu0 %612
  %v614 = vsel %vm316, %v609, 0.0
  %v615 = vadd.f32 %v606, %v614
  %616 = vadd.xlane.f32.xlu0 %v615
  %v617 = vpop.xlane.xlu0 %616
  %v618 = vmul.f32 %v613, 0.0020833334
  %v619 = vmul.f32 %v617, 0.0020833334
  %v620 = vsub.f32 %v594, %v618
  %v621 = vsub.f32 %v595, %v618
  %v622 = vsub.f32 %v596, %v619
  %v623 = vsub.f32 %v597, %v619
  %v624 = vsub.f32 %v598, %v618
  %v625 = vsub.f32 %v599, %v618
  %v626 = vsub.f32 %v600, %v619
  %v627 = vsub.f32 %v601, %v619
  %v628 = vmul.f32 %v620, %v620
  %v629 = vmul.f32 %v621, %v621
  %v630 = vmul.f32 %v622, %v622
  %v631 = vmul.f32 %v623, %v623
  %v632 = vmul.f32 %v624, %v624
  %v633 = vmul.f32 %v625, %v625
  %v634 = vmul.f32 %v626, %v626
  %v635 = vmul.f32 %v627, %v627
  %v636 = vadd.f32 %v628, %v632
  %v637 = vsel %vm316, %v629, 0.0
  %v638 = vsel %vm316, %v633, 0.0
  %v639 = vadd.f32 %v637, %v638
  %v640 = vadd.f32 %v630, %v634
  %v641 = vsel %vm316, %v631, 0.0
  %v642 = vsel %vm316, %v635, 0.0
  %v643 = vadd.f32 %v641, %v642
  %v644 = vsel %vm316, %v639, 0.0
  %v645 = vadd.f32 %v636, %v644
  %646 = vadd.xlane.f32.xlu0 %v645
  %v647 = vpop.xlane.xlu0 %646
  %v648 = vsel %vm316, %v643, 0.0
  %v649 = vadd.f32 %v640, %v648
  %650 = vadd.xlane.f32.xlu0 %v649
  %v651 = vpop.xlane.xlu0 %650
  %v652 = vmul.f32 %v647, 0.0020833334
  %v653 = vmul.f32 %v651, 0.0020833334
  %v654 = vadd.f32 %v652, 1e-05
  %v655 = vadd.f32 %v653, 1e-05
  %v656 = vrsqrt.pop %v654
  %v657 = vrsqrt.pop %v655
  %v658 = vld [vmem:[%s2] sm:$0xff]
  %v659 = vld [vmem:[%s2 + $0x8] sm:$0xff]
  %v660 = vmul.f32 %v658, %v656
  %v661 = vmul.f32 %v659, %v657
  %663 = vset.pattern.permute.xlu0 0
  %664 = vperm.xlu0 %663, %v660
  %v665 = vpop.permute.xlu0 %664
  %668 = vset.pattern.permute.xlu0 0
  %669 = vperm.xlu0 %668, %v661
  %v670 = vpop.permute.xlu0 %669
  %v672 = vmul.f32 %v620, %v665
  %v673 = vmul.f32 %v621, %v665
  %v674 = vmul.f32 %v622, %v670
  %v675 = vmul.f32 %v623, %v670
  %v676 = vmul.f32 %v624, %v665
  %v677 = vmul.f32 %v625, %v665
  %v678 = vmul.f32 %v626, %v670
  %v679 = vmul.f32 %v627, %v670
  %v680 = vld [vmem:[%s3] sm:$0xff]
  %v681 = vld [vmem:[%s3 + $0x8] sm:$0xff]
  %683 = vset.pattern.permute.xlu0 0
  %684 = vperm.xlu0 %683, %v680
  %v685 = vpop.permute.xlu0 %684
  %688 = vset.pattern.permute.xlu0 0
  %689 = vperm.xlu0 %688, %v681
  %v690 = vpop.permute.xlu0 %689
  %v692 = vadd.f32 %v672, %v685
  %v693 = vadd.f32 %v673, %v685
  %v694 = vadd.f32 %v674, %v690
  %v695 = vadd.f32 %v675, %v690
  %v696 = vadd.f32 %v676, %v685
  %v697 = vadd.f32 %v677, %v685
  %v698 = vadd.f32 %v678, %v690
  %v699 = vadd.f32 %v679, %v690
  %v700 = vmul.f32 %v692, 0.5
  %v701 = vmul.f32 %v693, 0.5
  %v702 = vmul.f32 %v694, 0.5
  %v703 = vmul.f32 %v695, 0.5
  %v704 = vmul.f32 %v696, 0.5
  %v705 = vmul.f32 %v697, 0.5
  %v706 = vmul.f32 %v698, 0.5
  %v707 = vmul.f32 %v699, 0.5
  %v708 = vtanh.pop %v700
  %v709 = vtanh.pop %v701
  %v710 = vtanh.pop %v702
  %v711 = vtanh.pop %v703
  %v712 = vtanh.pop %v704
  %v713 = vtanh.pop %v705
  %v714 = vtanh.pop %v706
  %v715 = vtanh.pop %v707
  %v716 = vmul.f32 %v692, 1.442695
  %v717 = vpow.pop %v716
  %v718 = vmul.f32 %v693, 1.442695
  %v719 = vpow.pop %v718
  %v720 = vmul.f32 %v694, 1.442695
  %v721 = vpow.pop %v720
  %v722 = vmul.f32 %v695, 1.442695
  %v723 = vpow.pop %v722
  %v724 = vmul.f32 %v696, 1.442695
  %v725 = vpow.pop %v724
  %v726 = vmul.f32 %v697, 1.442695
  %v727 = vpow.pop %v726
  %v728 = vmul.f32 %v698, 1.442695
  %v729 = vpow.pop %v728
  %v730 = vmul.f32 %v699, 1.442695
  %v731 = vpow.pop %v730
  %v732 = vadd.f32 %v717, 1.0
  %v733 = vadd.f32 %v719, 1.0
  %v734 = vadd.f32 %v721, 1.0
  %v735 = vadd.f32 %v723, 1.0
  %v736 = vadd.f32 %v725, 1.0
  %v737 = vadd.f32 %v727, 1.0
  %v738 = vadd.f32 %v729, 1.0
  %v739 = vadd.f32 %v731, 1.0
  %v740 = vmul.f32 %v708, %v732
  %v741 = vmul.f32 %v709, %v733
  %v742 = vmul.f32 %v710, %v734
  %v743 = vmul.f32 %v711, %v735
  %v744 = vmul.f32 %v712, %v736
  %v745 = vmul.f32 %v713, %v737
  %v746 = vmul.f32 %v714, %v738
  %v747 = vmul.f32 %v715, %v739
  %vm748 = vcmp.gt.f32.partialorder %v692, 0.0
  %vm749 = vcmp.gt.f32.partialorder %v693, 0.0
  %vm750 = vcmp.gt.f32.partialorder %v694, 0.0
  %vm751 = vcmp.gt.f32.partialorder %v695, 0.0
  %vm752 = vcmp.gt.f32.partialorder %v696, 0.0
  %vm753 = vcmp.gt.f32.partialorder %v697, 0.0
  %vm754 = vcmp.gt.f32.partialorder %v698, 0.0
  %vm755 = vcmp.gt.f32.partialorder %v699, 0.0
  %v756 = vsel %vm748, %v692, %v740
  %v757 = vsel %vm749, %v693, %v741
  %v758 = vsel %vm750, %v694, %v742
  %v759 = vsel %vm751, %v695, %v743
  %v760 = vsel %vm752, %v696, %v744
  %v761 = vsel %vm753, %v697, %v745
  %v762 = vsel %vm754, %v698, %v746
  %v763 = vsel %vm755, %v699, %v747
  %764 = vst [vmem:[%s4] sm:$0xff] %v756
  %765 = vst.msk [vmem:[%s4 + $0x8] sm:$0xff] %vm316, %v757
  %766 = vst [vmem:[%s4 + $0x10] sm:$0xff] %v758
  %767 = vst.msk [vmem:[%s4 + $0x18] sm:$0xff] %vm316, %v759
  %768 = vst [vmem:[%s4 + $0x20] sm:$0xff] %v760
  %769 = vst.msk [vmem:[%s4 + $0x28] sm:$0xff] %vm316, %v761
  %770 = vst [vmem:[%s4 + $0x30] sm:$0xff] %v762
  %771 = vst.msk [vmem:[%s4 + $0x38] sm:$0xff] %vm316, %v763
  // Predicated region
  $region18: #{encoder_forward.3} parent=0 // pred_check
    _
  $region19: #{encoder_forward.3} parent=0 // pred_check_branch
    %773 = sbr.rel (0) target = $region21
  $region20: #{encoder_forward.3} parent=0 // pred_region
    _
  $region21: #{encoder_forward.3} parent=0 // pred_fallthru
    _
  // Predicated region
  $region22: #{encoder_forward.3} parent=0 // pred_check
    _
  $region23: #{encoder_forward.3} parent=0 // pred_check_branch
    %775 = sbr.rel (0) target = $region25
  $region24: #{encoder_forward.3} parent=0 // pred_region
    _
  $region25: #{encoder_forward.3} parent=0 // pred_fallthru
    _

// kernel: encoder_forward.4
$region0: #{encoder_forward.4}
  #allocation0 [shape = 'u32[]', space=smem, size = 0x4, offset = 0x4, fixed_abs, tag = 'smem constant byte address 0x4 - core index']
  #allocation1 [shape = 'u32[144,128]{1,0:T(1,128)}', space=vmem, size = 0x12000, scoped, tag = 'internal scratch']
  %s0 = inlined_call_operand.vmem [shape: f32[2,48,126], index: 0, kind: input, shape index: {}]
  %s1 = inlined_call_operand.vmem [shape: f32[3,32,48], index: 1, kind: input, shape index: {}]
  %s2 = inlined_call_operand.vmem [shape: f32[32,1], index: 2, kind: input, shape index: {}]
  %s3 = inlined_call_operand.vmem [shape: f32[32,1], index: 3, kind: input, shape index: {}]
  %s4 = inlined_call_operand.vmem [shape: f32[2,32,112], index: 4, kind: output, shape index: {}]
  %s5 = sld [smem:[#allocation0]]
  $region26: #{encoder_forward.4} parent=0
    _
  %s7 = ssub.s32 1, %s5
  %s8 = scalar_select 0, %s7, %s5
  // Predicated region
  $region2: #{encoder_forward.4} parent=0 // pred_check
    _
  $region3: #{encoder_forward.4} parent=0 // pred_check_branch
    %10 = sbr.rel (0) target = $region5
  $region4: #{encoder_forward.4} parent=0 // pred_region
    _
  $region5: #{encoder_forward.4} parent=0 // pred_fallthru
    _
  // Predicated region
  $region6: #{encoder_forward.4} parent=0 // pred_check
    _
  $region7: #{encoder_forward.4} parent=0 // pred_check_branch
    %12 = sbr.rel (0) target = $region9
  $region8: #{encoder_forward.4} parent=0 // pred_region
    _
  $region9: #{encoder_forward.4} parent=0 // pred_fallthru
    _
  // Predicated region
  $region10: #{encoder_forward.4} parent=0 // pred_check
    _
  $region11: #{encoder_forward.4} parent=0 // pred_check_branch
    %14 = sbr.rel (0) target = $region13
  $region12: #{encoder_forward.4} parent=0 // pred_region
    _
  $region13: #{encoder_forward.4} parent=0 // pred_fallthru
    _
  // Predicated region
  $region14: #{encoder_forward.4} parent=0 // pred_check
    _
  $region15: #{encoder_forward.4} parent=0 // pred_check_branch
    %16 = sbr.rel (0) target = $region17
  $region16: #{encoder_forward.4} parent=0 // pred_region
    _
  $region17: #{encoder_forward.4} parent=0 // pred_fallthru
    _
  %v17 = vld [vmem:[%s1] sm:$0xff]
  %v18 = vld [vmem:[%s1 + $0x8] sm:$0xff]
  %v19 = vld [vmem:[%s1 + $0x10] sm:$0xff]
  %v20 = vld [vmem:[%s1 + $0x18] sm:$0xff]
  %s21 = scalar_lea.vmem %s1, 32
  %v22 = vld [vmem:[%s21] sm:$0xff]
  %v23 = vld [vmem:[%s21 + $0x8] sm:$0xff]
  %v24 = vld [vmem:[%s21 + $0x10] sm:$0xff]
  %v25 = vld [vmem:[%s21 + $0x18] sm:$0xff]
  %s26 = scalar_lea.vmem %s1, 64
  %v27 = vld [vmem:[%s26] sm:$0xff]
  %v28 = vld [vmem:[%s26 + $0x8] sm:$0xff]
  %v29 = vld [vmem:[%s26 + $0x10] sm:$0xff]
  %v30 = vld [vmem:[%s26 + $0x18] sm:$0xff]
  %v31 = vld [vmem:[%s0] sm:$0xff]
  %v32 = vld [vmem:[%s0 + $0x8] sm:$0xff]
  %v33 = vld [vmem:[%s0 + $0x10] sm:$0xff]
  %v34 = vld [vmem:[%s0 + $0x18] sm:$0xff]
  %v35 = vld [vmem:[%s0 + $0x20] sm:$0xff]
  %v36 = vld [vmem:[%s0 + $0x28] sm:$0xff]
  %43 = vrot.lane.b32.xlu0 %v31, 121
  %v44 = vpop.permute.xlu0 %43
  %45 = vrot.lane.b32.xlu0 %v32, 121
  %v46 = vpop.permute.xlu0 %45
  %47 = vrot.lane.b32.xlu0 %v33, 121
  %v48 = vpop.permute.xlu0 %47
  %49 = vrot.lane.b32.xlu0 %v34, 121
  %v50 = vpop.permute.xlu0 %49
  %51 = vrot.lane.b32.xlu0 %v35, 121
  %v52 = vpop.permute.xlu0 %51
  %53 = vrot.lane.b32.xlu0 %v36, 121
  %v54 = vpop.permute.xlu0 %53
  %vm61 = vcmask 392192
  %v63 = vsel %vm61, %v22, 0
  %v66 = vsel %vm61, %v23, 0
  %v69 = vsel %vm61, %v24, 0
  %v72 = vsel %vm61, %v25, 0
  %74 = vmatprep.subr.mxu0 0.0
  %75 = vmatpush1.msra.mxu0 %v44
  %76 = vmatprep.subr.mxu0 0.0
  %77 = vmatpush1.msra.mxu0 %v46
  %78 = vmatprep.subr.mxu0 0.0
  %79 = vmatpush1.msra.mxu0 %v48
  %80 = vmatprep.subr.mxu0 0.0
  %81 = vmatpush1.msra.mxu0 %v50
  %82 = vmatprep.subr.mxu0 0.0
  %83 = vmatpush1.msra.mxu0 %v52
  %84 = vmatprep.subr.mxu0 0.0
  %85 = vmatpush1.msra.mxu0 %v54
  %86 = vmatprep.subr.mxu0 0.0
  %87 = vmatpush1.msra.mxu0 0.0
  %88 = vmatprep.subr.mxu0 0.0
  %89 = vmatpush1.msra.mxu0 0.0
  %90 = vmatprep.subr.mxu0 0.0
  %91 = vmatpush1.msra.mxu0 0.0
  %92 = vmatprep.subr.mxu0 0.0
  %93 = vmatpush1.msra.mxu0 0.0
  %94 = vmatprep.subr.mxu0 0.0
  %95 = vmatpush1.msra.mxu0 0.0
  %96 = vmatprep.subr.mxu0 0.0
  %97 = vmatpush1.msra.mxu0 0.0
  %98 = vmatprep.subr.mxu0 0.0
  %99 = vmatpush1.msra.mxu0 0.0
  %100 = vmatprep.subr.mxu0 0.0
  %101 = vmatpush1.msra.mxu0 0.0
  %102 = vmatprep.subr.mxu0 0.0
  %103 = vmatpush1.msra.mxu0 0.0
  %104 = vmatprep.subr.mxu0 0.0
  %105 = vmatpush1.msra.mxu0 0.0
  %106 = vmatprep.subr.mxu0 0.0
  %107 = vmatpush1.msra.mxu0 0.0
  %108 = vmatprep.subr.mxu0 0.0
  %109 = vmatpush1.msra.mxu0 0.0
  %110 = vmatprep.subr.mxu0 0.0
  %111 = vmatpush1.msra.mxu0 0.0
  %112 = vmatprep.subr.mxu0 0.0
  %113 = vmatpush1.msra.mxu0 0.0
  %114 = vmatprep.subr.mxu0 0.0
  %115 = vmatpush1.msra.mxu0 0.0
  %116 = vmatprep.subr.mxu0 0.0
  %117 = vmatpush1.msra.mxu0 0.0
  %118 = vmatprep.subr.mxu0 0.0
  %119 = vmatpush1.msra.mxu0 0.0
  %120 = vmatprep.subr.mxu0 0.0
  %121 = vmatpush1.msra.mxu0 0.0
  %122 = vmatprep.subr.mxu0 0.0
  %123 = vmatpush1.msra.mxu0 0.0
  %124 = vmatprep.subr.mxu0 0.0
  %125 = vmatpush1.msra.mxu0 0.0
  %126 = vmatprep.subr.mxu0 0.0
  %127 = vmatpush1.msra.mxu0 0.0
  %128 = vmatprep.subr.mxu0 0.0
  %129 = vmatpush1.msra.mxu0 0.0
  %130 = vmatprep.subr.mxu0 0.0
  %131 = vmatpush1.msra.mxu0 0.0
  %132 = vmatprep.subr.mxu0 0.0
  %133 = vmatpush1.msra.mxu0 0.0
  %134 = vmatprep.subr.mxu0 0.0
  %135 = vmatpush1.msra.mxu0 0.0
  %136 = vmatprep.subr.mxu0 0.0
  %137 = vmatpush1.msra.mxu0 0.0
  %138 = vmatprep.mubr.f32.mxu0 0.0
  %139 = vmatmul.mubr.f32.gmra.mrb[0].mxu0 %v63
  %v140 = vpop.f32.mrb[0].mxu0
  %v141 = vadd.f32 0.0, %v140
  %v142 = vpop.f32.mrb[0].mxu0
  %143 = vmatprep.mubr.f32.mxu0 0.0
  %144 = vmatmul.mubr.f32.gmra.mrb[0].mxu0 %v66
  %v145 = vpop.f32.mrb[0].mxu0
  %v146 = vadd.f32 0.0, %v145
  %v147 = vpop.f32.mrb[0].mxu0
  %148 = vmatprep.mubr.f32.mxu0 0.0
  %149 = vmatmul.mubr.f32.gmra.mrb[0].mxu0 %v69
  %v150 = vpop.f32.mrb[0].mxu0
  %v151 = vadd.f32 0.0, %v150
  %v152 = vpop.f32.mrb[0].mxu0
  %153 = vmatprep.mubr.f32.mxu0 0.0
  %154 = vmatmul.mubr.f32.gmra.mrb[0].mxu0 %v72
  %v155 = vpop.f32.mrb[0].mxu0
  %v156 = vadd.f32 0.0, %v155
  %v157 = vpop.f32.mrb[0].mxu0
  %158 = vdwg.mxu0
  %v160 = vsel %vm61, %v17, 0
  %v163 = vsel %vm61, %v18, 0
  %v166 = vsel %vm61, %v19, 0
  %v169 = vsel %vm61, %v20, 0
  %171 = vmatprep.subr.mxu0 0.0
  %172 = vmatpush1.msra.mxu0 %v31
  %173 = vmatprep.subr.mxu0 0.0
  %174 = vmatpush1.msra.mxu0 %v32
  %175 = vmatprep.subr.mxu0 0.0
  %176 = vmatpush1.msra.mxu0 %v33
  %177 = vmatprep.subr.mxu0 0.0
  %178 = vmatpush1.msra.mxu0 %v34
  %179 = vmatprep.subr.mxu0 0.0
  %180 = vmatpush1.msra.mxu0 %v35
  %181 = vmatprep.subr.mxu0 0.0
  %182 = vmatpush1.msra.mxu0 %v36
  %183 = vmatprep.subr.mxu0 0.0
  %184 = vmatpush1.msra.mxu0 0.0
  %185 = vmatprep.subr.mxu0 0.0
  %186 = vmatpush1.msra.mxu0 0.0
  %187 = vmatprep.subr.mxu0 0.0
  %188 = vmatpush1.msra.mxu0 0.0
  %189 = vmatprep.subr.mxu0 0.0
  %190 = vmatpush1.msra.mxu0 0.0
  %191 = vmatprep.subr.mxu0 0.0
  %192 = vmatpush1.msra.mxu0 0.0
  %193 = vmatprep.subr.mxu0 0.0
  %194 = vmatpush1.msra.mxu0 0.0
  %195 = vmatprep.subr.mxu0 0.0
  %196 = vmatpush1.msra.mxu0 0.0
  %197 = vmatprep.subr.mxu0 0.0
  %198 = vmatpush1.msra.mxu0 0.0
  %199 = vmatprep.subr.mxu0 0.0
  %200 = vmatpush1.msra.mxu0 0.0
  %201 = vmatprep.subr.mxu0 0.0
  %202 = vmatpush1.msra.mxu0 0.0
  %203 = vmatprep.subr.mxu0 0.0
  %204 = vmatpush1.msra.mxu0 0.0
  %205 = vmatprep.subr.mxu0 0.0
  %206 = vmatpush1.msra.mxu0 0.0
  %207 = vmatprep.subr.mxu0 0.0
  %208 = vmatpush1.msra.mxu0 0.0
  %209 = vmatprep.subr.mxu0 0.0
  %210 = vmatpush1.msra.mxu0 0.0
  %211 = vmatprep.subr.mxu0 0.0
  %212 = vmatpush1.msra.mxu0 0.0
  %213 = vmatprep.subr.mxu0 0.0
  %214 = vmatpush1.msra.mxu0 0.0
  %215 = vmatprep.subr.mxu0 0.0
  %216 = vmatpush1.msra.mxu0 0.0
  %217 = vmatprep.subr.mxu0 0.0
  %218 = vmatpush1.msra.mxu0 0.0
  %219 = vmatprep.subr.mxu0 0.0
  %220 = vmatpush1.msra.mxu0 0.0
  %221 = vmatprep.subr.mxu0 0.0
  %222 = vmatpush1.msra.mxu0 0.0
  %223 = vmatprep.subr.mxu0 0.0
  %224 = vmatpush1.msra.mxu0 0.0
  %225 = vmatprep.subr.mxu0 0.0
  %226 = vmatpush1.msra.mxu0 0.0
  %227 = vmatprep.subr.mxu0 0.0
  %228 = vmatpush1.msra.mxu0 0.0
  %229 = vmatprep.subr.mxu0 0.0
  %230 = vmatpush1.msra.mxu0 0.0
  %231 = vmatprep.subr.mxu0 0.0
  %232 = vmatpush1.msra.mxu0 0.0
  %233 = vmatprep.subr.mxu0 0.0
  %234 = vmatpush1.msra.mxu0 0.0
  %235 = vmatprep.mubr.f32.mxu0 0.0
  %236 = vmatmul.mubr.f32.gmra.mrb[0].mxu0 %v160
  %v237 = vpop.f32.mrb[0].mxu0
  %v238 = vadd.f32 %v141, %v237
  %v239 = vpop.f32.mrb[0].mxu0
  %240 = vmatprep.mubr.f32.mxu0 0.0
  %241 = vmatmul.mubr.f32.gmra.mrb[0].mxu0 %v163
  %v242 = vpop.f32.mrb[0].mxu0
  %v243 = vadd.f32 %v146, %v242
  %v244 = vpop.f32.mrb[0].mxu0
  %245 = vmatprep.mubr.f32.mxu0 0.0
  %246 = vmatmul.mubr.f32.gmra.mrb[0].mxu0 %v166
  %v247 = vpop.f32.mrb[0].mxu0
  %v248 = vadd.f32 %v151, %v247
  %v249 = vpop.f32.mrb[0].mxu0
  %250 = vmatprep.mubr.f32.mxu0 0.0
  %251 = vmatmul.mubr.f32.gmra.mrb[0].mxu0 %v169
  %v252 = vpop.f32.mrb[0].mxu0
  %v253 = vadd.f32 %v156, %v252
  %v254 = vpop.f32.mrb[0].mxu0
  %255 = vdwg.mxu0
  %256 = vrot.lane.b32.xlu0 %v31, 114
  %v257 = vpop.permute.xlu0 %256
  %258 = vrot.lane.b32.xlu0 %v32, 114
  %v259 = vpop.permute.xlu0 %258
  %260 = vrot.lane.b32.xlu0 %v33, 114
  %v261 = vpop.permute.xlu0 %260
  %262 = vrot.lane.b32.xlu0 %v34, 114
  %v263 = vpop.permute.xlu0 %262
  %264 = vrot.lane.b32.xlu0 %v35, 114
  %v265 = vpop.permute.xlu0 %264
  %266 = vrot.lane.b32.xlu0 %v36, 114
  %v267 = vpop.permute.xlu0 %266
  %v275 = vsel %vm61, %v27, 0
  %v278 = vsel %vm61, %v28, 0
  %v281 = vsel %vm61, %v29, 0
  %v284 = vsel %vm61, %v30, 0
  %286 = vmatprep.subr.mxu0 0.0
  %287 = vmatpush1.msra.mxu0 %v257
  %288 = vmatprep.subr.mxu0 0.0
  %289 = vmatpush1.msra.mxu0 %v259
  %290 = vmatprep.subr.mxu0 0.0
  %291 = vmatpush1.msra.mxu0 %v261
  %292 = vmatprep.subr.mxu0 0.0
  %293 = vmatpush1.msra.mxu0 %v263
  %294 = vmatprep.subr.mxu0 0.0
  %295 = vmatpush1.msra.mxu0 %v265
  %296 = vmatprep.subr.mxu0 0.0
  %297 = vmatpush1.msra.mxu0 %v267
  %298 = vmatprep.subr.mxu0 0.0
  %299 = vmatpush1.msra.mxu0 0.0
  %300 = vmatprep.subr.mxu0 0.0
  %301 = vmatpush1.msra.mxu0 0.0
  %302 = vmatprep.subr.mxu0 0.0
  %303 = vmatpush1.msra.mxu0 0.0
  %304 = vmatprep.subr.mxu0 0.0
  %305 = vmatpush1.msra.mxu0 0.0
  %306 = vmatprep.subr.mxu0 0.0
  %307 = vmatpush1.msra.mxu0 0.0
  %308 = vmatprep.subr.mxu0 0.0
  %309 = vmatpush1.msra.mxu0 0.0
  %310 = vmatprep.subr.mxu0 0.0
  %311 = vmatpush1.msra.mxu0 0.0
  %312 = vmatprep.subr.mxu0 0.0
  %313 = vmatpush1.msra.mxu0 0.0
  %314 = vmatprep.subr.mxu0 0.0
  %315 = vmatpush1.msra.mxu0 0.0
  %316 = vmatprep.subr.mxu0 0.0
  %317 = vmatpush1.msra.mxu0 0.0
  %318 = vmatprep.subr.mxu0 0.0
  %319 = vmatpush1.msra.mxu0 0.0
  %320 = vmatprep.subr.mxu0 0.0
  %321 = vmatpush1.msra.mxu0 0.0
  %322 = vmatprep.subr.mxu0 0.0
  %323 = vmatpush1.msra.mxu0 0.0
  %324 = vmatprep.subr.mxu0 0.0
  %325 = vmatpush1.msra.mxu0 0.0
  %326 = vmatprep.subr.mxu0 0.0
  %327 = vmatpush1.msra.mxu0 0.0
  %328 = vmatprep.subr.mxu0 0.0
  %329 = vmatpush1.msra.mxu0 0.0
  %330 = vmatprep.subr.mxu0 0.0
  %331 = vmatpush1.msra.mxu0 0.0
  %332 = vmatprep.subr.mxu0 0.0
  %333 = vmatpush1.msra.mxu0 0.0
  %334 = vmatprep.subr.mxu0 0.0
  %335 = vmatpush1.msra.mxu0 0.0
  %336 = vmatprep.subr.mxu0 0.0
  %337 = vmatpush1.msra.mxu0 0.0
  %338 = vmatprep.subr.mxu0 0.0
  %339 = vmatpush1.msra.mxu0 0.0
  %340 = vmatprep.subr.mxu0 0.0
  %341 = vmatpush1.msra.mxu0 0.0
  %342 = vmatprep.subr.mxu0 0.0
  %343 = vmatpush1.msra.mxu0 0.0
  %344 = vmatprep.subr.mxu0 0.0
  %345 = vmatpush1.msra.mxu0 0.0
  %346 = vmatprep.subr.mxu0 0.0
  %347 = vmatpush1.msra.mxu0 0.0
  %348 = vmatprep.subr.mxu0 0.0
  %349 = vmatpush1.msra.mxu0 0.0
  %350 = vmatprep.mubr.f32.mxu0 0.0
  %351 = vmatmul.mubr.f32.gmra.mrb[0].mxu0 %v275
  %v352 = vpop.f32.mrb[0].mxu0
  %v353 = vadd.f32 0.0, %v352
  %v354 = vpop.f32.mrb[0].mxu0
  %355 = vmatprep.mubr.f32.mxu0 0.0
  %356 = vmatmul.mubr.f32.gmra.mrb[0].mxu0 %v278
  %v357 = vpop.f32.mrb[0].mxu0
  %v358 = vadd.f32 0.0, %v357
  %v359 = vpop.f32.mrb[0].mxu0
  %360 = vmatprep.mubr.f32.mxu0 0.0
  %361 = vmatmul.mubr.f32.gmra.mrb[0].mxu0 %v281
  %v362 = vpop.f32.mrb[0].mxu0
  %v363 = vadd.f32 0.0, %v362
  %v364 = vpop.f32.mrb[0].mxu0
  %365 = vmatprep.mubr.f32.mxu0 0.0
  %366 = vmatmul.mubr.f32.gmra.mrb[0].mxu0 %v284
  %v367 = vpop.f32.mrb[0].mxu0
  %v368 = vadd.f32 0.0, %v367
  %v369 = vpop.f32.mrb[0].mxu0
  %370 = vdwg.mxu0
  %v371 = vadd.f32 %v238, %v353
  %v372 = vadd.f32 %v243, %v358
  %v373 = vadd.f32 %v248, %v363
  %v374 = vadd.f32 %v253, %v368
  %vm375 = vcmask 916480
  %376 = vst.msk [vmem:[%s4] sm:$0xff] %vm375, %v371
  %377 = vst.msk [vmem:[%s4 + $0x8] sm:$0xff] %vm375, %v372
  %378 = vst.msk [vmem:[%s4 + $0x10] sm:$0xff] %vm375, %v373
  %379 = vst.msk [vmem:[%s4 + $0x18] sm:$0xff] %vm375, %v374
  %s380 = scalar_lea.vmem %s0, 48
  %v381 = vld [vmem:[%s380] sm:$0xff]
  %v382 = vld [vmem:[%s380 + $0x8] sm:$0xff]
  %v383 = vld [vmem:[%s380 + $0x10] sm:$0xff]
  %v384 = vld [vmem:[%s380 + $0x18] sm:$0xff]
  %v385 = vld [vmem:[%s380 + $0x20] sm:$0xff]
  %v386 = vld [vmem:[%s380 + $0x28] sm:$0xff]
  %393 = vrot.lane.b32.xlu0 %v381, 121
  %v394 = vpop.permute.xlu0 %393
  %395 = vrot.lane.b32.xlu0 %v382, 121
  %v396 = vpop.permute.xlu0 %395
  %397 = vrot.lane.b32.xlu0 %v383, 121
  %v398 = vpop.permute.xlu0 %397
  %399 = vrot.lane.b32.xlu0 %v384, 121
  %v400 = vpop.permute.xlu0 %399
  %401 = vrot.lane.b32.xlu0 %v385, 121
  %v402 = vpop.permute.xlu0 %401
  %403 = vrot.lane.b32.xlu0 %v386, 121
  %v404 = vpop.permute.xlu0 %403
  %411 = vmatprep.subr.mxu0 0.0
  %412 = vmatpush1.msra.mxu0 %v394
  %413 = vmatprep.subr.mxu0 0.0
  %414 = vmatpush1.msra.mxu0 %v396
  %415 = vmatprep.subr.mxu0 0.0
  %416 = vmatpush1.msra.mxu0 %v398
  %417 = vmatprep.subr.mxu0 0.0
  %418 = vmatpush1.msra.mxu0 %v400
  %419 = vmatprep.subr.mxu0 0.0
  %420 = vmatpush1.msra.mxu0 %v402
  %421 = vmatprep.subr.mxu0 0.0
  %422 = vmatpush1.msra.mxu0 %v404
  %423 = vmatprep.subr.mxu0 0.0
  %424 = vmatpush1.msra.mxu0 0.0
  %425 = vmatprep.subr.mxu0 0.0
  %426 = vmatpush1.msra.mxu0 0.0
  %427 = vmatprep.subr.mxu0 0.0
  %428 = vmatpush1.msra.mxu0 0.0
  %429 = vmatprep.subr.mxu0 0.0
  %430 = vmatpush1.msra.mxu0 0.0
  %431 = vmatprep.subr.mxu0 0.0
  %432 = vmatpush1.msra.mxu0 0.0
  %433 = vmatprep.subr.mxu0 0.0
  %434 = vmatpush1.msra.mxu0 0.0
  %435 = vmatprep.subr.mxu0 0.0
  %436 = vmatpush1.msra.mxu0 0.0
  %437 = vmatprep.subr.mxu0 0.0
  %438 = vmatpush1.msra.mxu0 0.0
  %439 = vmatprep.subr.mxu0 0.0
  %440 = vmatpush1.msra.mxu0 0.0
  %441 = vmatprep.subr.mxu0 0.0
  %442 = vmatpush1.msra.mxu0 0.0
  %443 = vmatprep.subr.mxu0 0.0
  %444 = vmatpush1.msra.mxu0 0.0
  %445 = vmatprep.subr.mxu0 0.0
  %446 = vmatpush1.msra.mxu0 0.0
  %447 = vmatprep.subr.mxu0 0.0
  %448 = vmatpush1.msra.mxu0 0.0
  %449 = vmatprep.subr.mxu0 0.0
  %450 = vmatpush1.msra.mxu0 0.0
  %451 = vmatprep.subr.mxu0 0.0
  %452 = vmatpush1.msra.mxu0 0.0
  %453 = vmatprep.subr.mxu0 0.0
  %454 = vmatpush1.msra.mxu0 0.0
  %455 = vmatprep.subr.mxu0 0.0
  %456 = vmatpush1.msra.mxu0 0.0
  %457 = vmatprep.subr.mxu0 0.0
  %458 = vmatpush1.msra.mxu0 0.0
  %459 = vmatprep.subr.mxu0 0.0
  %460 = vmatpush1.msra.mxu0 0.0
  %461 = vmatprep.subr.mxu0 0.0
  %462 = vmatpush1.msra.mxu0 0.0
  %463 = vmatprep.subr.mxu0 0.0
  %464 = vmatpush1.msra.mxu0 0.0
  %465 = vmatprep.subr.mxu0 0.0
  %466 = vmatpush1.msra.mxu0 0.0
  %467 = vmatprep.subr.mxu0 0.0
  %468 = vmatpush1.msra.mxu0 0.0
  %469 = vmatprep.subr.mxu0 0.0
  %470 = vmatpush1.msra.mxu0 0.0
  %471 = vmatprep.subr.mxu0 0.0
  %472 = vmatpush1.msra.mxu0 0.0
  %473 = vmatprep.subr.mxu0 0.0
  %474 = vmatpush1.msra.mxu0 0.0
  %475 = vmatprep.mubr.f32.mxu0 0.0
  %476 = vmatmul.mubr.f32.gmra.mrb[0].mxu0 %v63
  %v477 = vpop.f32.mrb[0].mxu0
  %v478 = vadd.f32 0.0, %v477
  %v479 = vpop.f32.mrb[0].mxu0
  %480 = vmatprep.mubr.f32.mxu0 0.0
  %481 = vmatmul.mubr.f32.gmra.mrb[0].mxu0 %v66
  %v482 = vpop.f32.mrb[0].mxu0
  %v483 = vadd.f32 0.0, %v482
  %v484 = vpop.f32.mrb[0].mxu0
  %485 = vmatprep.mubr.f32.mxu0 0.0
  %486 = vmatmul.mubr.f32.gmra.mrb[0].mxu0 %v69
  %v487 = vpop.f32.mrb[0].mxu0
  %v488 = vadd.f32 0.0, %v487
  %v489 = vpop.f32.mrb[0].mxu0
  %490 = vmatprep.mubr.f32.mxu0 0.0
  %491 = vmatmul.mubr.f32.gmra.mrb[0].mxu0 %v72
  %v492 = vpop.f32.mrb[0].mxu0
  %v493 = vadd.f32 0.0, %v492
  %v494 = vpop.f32.mrb[0].mxu0
  %495 = vdwg.mxu0
  %496 = vmatprep.subr.mxu0 0.0
  %497 = vmatpush1.msra.mxu0 %v381
  %498 = vmatprep.subr.mxu0 0.0
  %499 = vmatpush1.msra.mxu0 %v382
  %500 = vmatprep.subr.mxu0 0.0
  %501 = vmatpush1.msra.mxu0 %v383
  %502 = vmatprep.subr.mxu0 0.0
  %503 = vmatpush1.msra.mxu0 %v384
  %504 = vmatprep.subr.mxu0 0.0
  %505 = vmatpush1.msra.mxu0 %v385
  %506 = vmatprep.subr.mxu0 0.0
  %507 = vmatpush1.msra.mxu0 %v386
  %508 = vmatprep.subr.mxu0 0.0
  %509 = vmatpush1.msra.mxu0 0.0
  %510 = vmatprep.subr.mxu0 0.0
  %511 = vmatpush1.msra.mxu0 0.0
  %512 = vmatprep.subr.mxu0 0.0
  %513 = vmatpush1.msra.mxu0 0.0
  %514 = vmatprep.subr.mxu0 0.0
  %515 = vmatpush1.msra.mxu0 0.0
  %516 = vmatprep.subr.mxu0 0.0
  %517 = vmatpush1.msra.mxu0 0.0
  %518 = vmatprep.subr.mxu0 0.0
  %519 = vmatpush1.msra.mxu0 0.0
  %520 = vmatprep.subr.mxu0 0.0
  %521 = vmatpush1.msra.mxu0 0.0
  %522 = vmatprep.subr.mxu0 0.0
  %523 = vmatpush1.msra.mxu0 0.0
  %524 = vmatprep.subr.mxu0 0.0
  %525 = vmatpush1.msra.mxu0 0.0
  %526 = vmatprep.subr.mxu0 0.0
  %527 = vmatpush1.msra.mxu0 0.0
  %528 = vmatprep.subr.mxu0 0.0
  %529 = vmatpush1.msra.mxu0 0.0
  %530 = vmatprep.subr.mxu0 0.0
  %531 = vmatpush1.msra.mxu0 0.0
  %532 = vmatprep.subr.mxu0 0.0
  %533 = vmatpush1.msra.mxu0 0.0
  %534 = vmatprep.subr.mxu0 0.0
  %535 = vmatpush1.msra.mxu0 0.0
  %536 = vmatprep.subr.mxu0 0.0
  %537 = vmatpush1.msra.mxu0 0.0
  %538 = vmatprep.subr.mxu0 0.0
  %539 = vmatpush1.msra.mxu0 0.0
  %540 = vmatprep.subr.mxu0 0.0
  %541 = vmatpush1.msra.mxu0 0.0
  %542 = vmatprep.subr.mxu0 0.0
  %543 = vmatpush1.msra.mxu0 0.0
  %544 = vmatprep.subr.mxu0 0.0
  %545 = vmatpush1.msra.mxu0 0.0
  %546 = vmatprep.subr.mxu0 0.0
  %547 = vmatpush1.msra.mxu0 0.0
  %548 = vmatprep.subr.mxu0 0.0
  %549 = vmatpush1.msra.mxu0 0.0
  %550 = vmatprep.subr.mxu0 0.0
  %551 = vmatpush1.msra.mxu0 0.0
  %552 = vmatprep.subr.mxu0 0.0
  %553 = vmatpush1.msra.mxu0 0.0
  %554 = vmatprep.subr.mxu0 0.0
  %555 = vmatpush1.msra.mxu0 0.0
  %556 = vmatprep.subr.mxu0 0.0
  %557 = vmatpush1.msra.mxu0 0.0
  %558 = vmatprep.subr.mxu0 0.0
  %559 = vmatpush1.msra.mxu0 0.0
  %560 = vmatprep.mubr.f32.mxu0 0.0
  %561 = vmatmul.mubr.f32.gmra.mrb[0].mxu0 %v160
  %v562 = vpop.f32.mrb[0].mxu0
  %v563 = vadd.f32 %v478, %v562
  %v564 = vpop.f32.mrb[0].mxu0
  %565 = vmatprep.mubr.f32.mxu0 0.0
  %566 = vmatmul.mubr.f32.gmra.mrb[0].mxu0 %v163
  %v567 = vpop.f32.mrb[0].mxu0
  %v568 = vadd.f32 %v483, %v567
  %v569 = vpop.f32.mrb[0].mxu0
  %570 = vmatprep.mubr.f32.mxu0 0.0
  %571 = vmatmul.mubr.f32.gmra.mrb[0].mxu0 %v166
  %v572 = vpop.f32.mrb[0].mxu0
  %v573 = vadd.f32 %v488, %v572
  %v574 = vpop.f32.mrb[0].mxu0
  %575 = vmatprep.mubr.f32.mxu0 0.0
  %576 = vmatmul.mubr.f32.gmra.mrb[0].mxu0 %v169
  %v577 = vpop.f32.mrb[0].mxu0
  %v578 = vadd.f32 %v493, %v577
  %v579 = vpop.f32.mrb[0].mxu0
  %580 = vdwg.mxu0
  %581 = vrot.lane.b32.xlu0 %v381, 114
  %v582 = vpop.permute.xlu0 %581
  %583 = vrot.lane.b32.xlu0 %v382, 114
  %v584 = vpop.permute.xlu0 %583
  %585 = vrot.lane.b32.xlu0 %v383, 114
  %v586 = vpop.permute.xlu0 %585
  %587 = vrot.lane.b32.xlu0 %v384, 114
  %v588 = vpop.permute.xlu0 %587
  %589 = vrot.lane.b32.xlu0 %v385, 114
  %v590 = vpop.permute.xlu0 %589
  %591 = vrot.lane.b32.xlu0 %v386, 114
  %v592 = vpop.permute.xlu0 %591
  %599 = vmatprep.subr.mxu0 0.0
  %600 = vmatpush1.msra.mxu0 %v582
  %601 = vmatprep.subr.mxu0 0.0
  %602 = vmatpush1.msra.mxu0 %v584
  %603 = vmatprep.subr.mxu0 0.0
  %604 = vmatpush1.msra.mxu0 %v586
  %605 = vmatprep.subr.mxu0 0.0
  %606 = vmatpush1.msra.mxu0 %v588
  %607 = vmatprep.subr.mxu0 0.0
  %608 = vmatpush1.msra.mxu0 %v590
  %609 = vmatprep.subr.mxu0 0.0
  %610 = vmatpush1.msra.mxu0 %v592
  %611 = vmatprep.subr.mxu0 0.0
  %612 = vmatpush1.msra.mxu0 0.0
  %613 = vmatprep.subr.mxu0 0.0
  %614 = vmatpush1.msra.mxu0 0.0
  %615 = vmatprep.subr.mxu0 0.0
  %616 = vmatpush1.msra.mxu0 0.0
  %617 = vmatprep.subr.mxu0 0.0
  %618 = vmatpush1.msra.mxu0 0.0
  %619 = vmatprep.subr.mxu0 0.0
  %620 = vmatpush1.msra.mxu0 0.0
  %621 = vmatprep.subr.mxu0 0.0
  %622 = vmatpush1.msra.mxu0 0.0
  %623 = vmatprep.subr.mxu0 0.0
  %624 = vmatpush1.msra.mxu0 0.0
  %625 = vmatprep.subr.mxu0 0.0
  %626 = vmatpush1.msra.mxu0 0.0
  %627 = vmatprep.subr.mxu0 0.0
  %628 = vmatpush1.msra.mxu0 0.0
  %629 = vmatprep.subr.mxu0 0.0
  %630 = vmatpush1.msra.mxu0 0.0
  %631 = vmatprep.subr.mxu0 0.0
  %632 = vmatpush1.msra.mxu0 0.0
  %633 = vmatprep.subr.mxu0 0.0
  %634 = vmatpush1.msra.mxu0 0.0
  %635 = vmatprep.subr.mxu0 0.0
  %636 = vmatpush1.msra.mxu0 0.0
  %637 = vmatprep.subr.mxu0 0.0
  %638 = vmatpush1.msra.mxu0 0.0
  %639 = vmatprep.subr.mxu0 0.0
  %640 = vmatpush1.msra.mxu0 0.0
  %641 = vmatprep.subr.mxu0 0.0
  %642 = vmatpush1.msra.mxu0 0.0
  %643 = vmatprep.subr.mxu0 0.0
  %644 = vmatpush1.msra.mxu0 0.0
  %645 = vmatprep.subr.mxu0 0.0
  %646 = vmatpush1.msra.mxu0 0.0
  %647 = vmatprep.subr.mxu0 0.0
  %648 = vmatpush1.msra.mxu0 0.0
  %649 = vmatprep.subr.mxu0 0.0
  %650 = vmatpush1.msra.mxu0 0.0
  %651 = vmatprep.subr.mxu0 0.0
  %652 = vmatpush1.msra.mxu0 0.0
  %653 = vmatprep.subr.mxu0 0.0
  %654 = vmatpush1.msra.mxu0 0.0
  %655 = vmatprep.subr.mxu0 0.0
  %656 = vmatpush1.msra.mxu0 0.0
  %657 = vmatprep.subr.mxu0 0.0
  %658 = vmatpush1.msra.mxu0 0.0
  %659 = vmatprep.subr.mxu0 0.0
  %660 = vmatpush1.msra.mxu0 0.0
  %661 = vmatprep.subr.mxu0 0.0
  %662 = vmatpush1.msra.mxu0 0.0
  %663 = vmatprep.mubr.f32.mxu0 0.0
  %664 = vmatmul.mubr.f32.gmra.mrb[0].mxu0 %v275
  %v665 = vpop.f32.mrb[0].mxu0
  %v666 = vadd.f32 0.0, %v665
  %v667 = vpop.f32.mrb[0].mxu0
  %668 = vmatprep.mubr.f32.mxu0 0.0
  %669 = vmatmul.mubr.f32.gmra.mrb[0].mxu0 %v278
  %v670 = vpop.f32.mrb[0].mxu0
  %v671 = vadd.f32 0.0, %v670
  %v672 = vpop.f32.mrb[0].mxu0
  %673 = vmatprep.mubr.f32.mxu0 0.0
  %674 = vmatmul.mubr.f32.gmra.mrb[0].mxu0 %v281
  %v675 = vpop.f32.mrb[0].mxu0
  %v676 = vadd.f32 0.0, %v675
  %v677 = vpop.f32.mrb[0].mxu0
  %678 = vmatprep.mubr.f32.mxu0 0.0
  %679 = vmatmul.mubr.f32.gmra.mrb[0].mxu0 %v284
  %v680 = vpop.f32.mrb[0].mxu0
  %v681 = vadd.f32 0.0, %v680
  %v682 = vpop.f32.mrb[0].mxu0
  %683 = vdwg.mxu0
  %v684 = vadd.f32 %v563, %v666
  %v685 = vadd.f32 %v568, %v671
  %v686 = vadd.f32 %v573, %v676
  %v687 = vadd.f32 %v578, %v681
  %s688 = scalar_lea.vmem %s4, 32
  %689 = vst.msk [vmem:[%s688] sm:$0xff] %vm375, %v684
  %690 = vst.msk [vmem:[%s688 + $0x8] sm:$0xff] %vm375, %v685
  %691 = vst.msk [vmem:[%s688 + $0x10] sm:$0xff] %vm375, %v686
  %692 = vst.msk [vmem:[%s688 + $0x18] sm:$0xff] %vm375, %v687
  %v693 = vld [vmem:[%s4] sm:$0xff]
  %v694 = vld [vmem:[%s4 + $0x8] sm:$0xff]
  %v695 = vld [vmem:[%s4 + $0x10] sm:$0xff]
  %v696 = vld [vmem:[%s4 + $0x18] sm:$0xff]
  %v697 = vld [vmem:[%s4 + $0x20] sm:$0xff]
  %v698 = vld [vmem:[%s4 + $0x28] sm:$0xff]
  %v699 = vld [vmem:[%s4 + $0x30] sm:$0xff]
  %v700 = vld [vmem:[%s4 + $0x38] sm:$0xff]
  %v701 = vsel %vm375, %v693, 0.0
  %v702 = vsel %vm375, %v697, 0.0
  %v703 = vadd.f32 %v701, %v702
  %v704 = vsel %vm375, %v694, 0.0
  %v705 = vsel %vm375, %v698, 0.0
  %v706 = vadd.f32 %v704, %v705
  %v707 = vsel %vm375, %v695, 0.0
  %v708 = vsel %vm375, %v699, 0.0
  %v709 = vadd.f32 %v707, %v708
  %v710 = vsel %vm375, %v696, 0.0
  %v711 = vsel %vm375, %v700, 0.0
  %v712 = vadd.f32 %v710, %v711
  %v713 = vsel %vm375, %v703, 0.0
  %714 = vadd.xlane.f32.xlu0 %v713
  %v715 = vpop.xlane.xlu0 %714
  %v716 = vsel %vm375, %v706, 0.0
  %717 = vadd.xlane.f32.xlu0 %v716
  %v718 = vpop.xlane.xlu0 %717
  %v719 = vsel %vm375, %v709, 0.0
  %720 = vadd.xlane.f32.xlu0 %v719
  %v721 = vpop.xlane.xlu0 %720
  %v722 = vsel %vm375, %v712, 0.0
  %723 = vadd.xlane.f32.xlu0 %v722
  %v724 = vpop.xlane.xlu0 %723
  %v725 = vmul.f32 %v715, 0.004464286
  %v726 = vmul.f32 %v718, 0.004464286
  %v727 = vmul.f32 %v721, 0.004464286
  %v728 = vmul.f32 %v724, 0.004464286
  %v729 = vsub.f32 %v693, %v725
  %v730 = vsub.f32 %v694, %v726
  %v731 = vsub.f32 %v695, %v727
  %v732 = vsub.f32 %v696, %v728
  %v733 = vsub.f32 %v697, %v725
  %v734 = vsub.f32 %v698, %v726
  %v735 = vsub.f32 %v699, %v727
  %v736 = vsub.f32 %v700, %v728
  %v737 = vmul.f32 %v729, %v729
  %v738 = vmul.f32 %v730, %v730
  %v739 = vmul.f32 %v731, %v731
  %v740 = vmul.f32 %v732, %v732
  %v741 = vmul.f32 %v733, %v733
  %v742 = vmul.f32 %v734, %v734
  %v743 = vmul.f32 %v735, %v735
  %v744 = vmul.f32 %v736, %v736
  %v745 = vsel %vm375, %v737, 0.0
  %v746 = vsel %vm375, %v741, 0.0
  %v747 = vadd.f32 %v745, %v746
  %v748 = vsel %vm375, %v738, 0.0
  %v749 = vsel %vm375, %v742, 0.0
  %v750 = vadd.f32 %v748, %v749
  %v751 = vsel %vm375, %v739, 0.0
  %v752 = vsel %vm375, %v743, 0.0
  %v753 = vadd.f32 %v751, %v752
  %v754 = vsel %vm375, %v740, 0.0
  %v755 = vsel %vm375, %v744, 0.0
  %v756 = vadd.f32 %v754, %v755
  %v757 = vsel %vm375, %v747, 0.0
  %758 = vadd.xlane.f32.xlu0 %v757
  %v759 = vpop.xlane.xlu0 %758
  %v760 = vsel %vm375, %v750, 0.0
  %761 = vadd.xlane.f32.xlu0 %v760
  %v762 = vpop.xlane.xlu0 %761
  %v763 = vsel %vm375, %v753, 0.0
  %764 = vadd.xlane.f32.xlu0 %v763
  %v765 = vpop.xlane.xlu0 %764
  %v766 = vsel %vm375, %v756, 0.0
  %767 = vadd.xlane.f32.xlu0 %v766
  %v768 = vpop.xlane.xlu0 %767
  %v769 = vmul.f32 %v759, 0.004464286
  %v770 = vmul.f32 %v762, 0.004464286
  %v771 = vmul.f32 %v765, 0.004464286
  %v772 = vmul.f32 %v768, 0.004464286
  %v773 = vadd.f32 %v769, 1e-05
  %v774 = vadd.f32 %v770, 1e-05
  %v775 = vadd.f32 %v771, 1e-05
  %v776 = vadd.f32 %v772, 1e-05
  %v777 = vrsqrt.pop %v773
  %v778 = vrsqrt.pop %v774
  %v779 = vrsqrt.pop %v775
  %v780 = vrsqrt.pop %v776
  %v781 = vld [vmem:[%s2] sm:$0xff]
  %v782 = vld [vmem:[%s2 + $0x8] sm:$0xff]
  %v783 = vld [vmem:[%s2 + $0x10] sm:$0xff]
  %v784 = vld [vmem:[%s2 + $0x18] sm:$0xff]
  %v785 = vmul.f32 %v781, %v777
  %v786 = vmul.f32 %v782, %v778
  %v787 = vmul.f32 %v783, %v779
  %v788 = vmul.f32 %v784, %v780
  %790 = vset.pattern.permute.xlu0 0
  %791 = vperm.xlu0 %790, %v785
  %v792 = vpop.permute.xlu0 %791
  %795 = vset.pattern.permute.xlu0 0
  %796 = vperm.xlu0 %795, %v786
  %v797 = vpop.permute.xlu0 %796
  %800 = vset.pattern.permute.xlu0 0
  %801 = vperm.xlu0 %800, %v787
  %v802 = vpop.permute.xlu0 %801
  %805 = vset.pattern.permute.xlu0 0
  %806 = vperm.xlu0 %805, %v788
  %v807 = vpop.permute.xlu0 %806
  %v809 = vmul.f32 %v729, %v792
  %v810 = vmul.f32 %v730, %v797
  %v811 = vmul.f32 %v731, %v802
  %v812 = vmul.f32 %v732, %v807
  %v813 = vmul.f32 %v733, %v792
  %v814 = vmul.f32 %v734, %v797
  %v815 = vmul.f32 %v735, %v802
  %v816 = vmul.f32 %v736, %v807
  %v817 = vld [vmem:[%s3] sm:$0xff]
  %v818 = vld [vmem:[%s3 + $0x8] sm:$0xff]
  %v819 = vld [vmem:[%s3 + $0x10] sm:$0xff]
  %v820 = vld [vmem:[%s3 + $0x18] sm:$0xff]
  %822 = vset.pattern.permute.xlu0 0
  %823 = vperm.xlu0 %822, %v817
  %v824 = vpop.permute.xlu0 %823
  %827 = vset.pattern.permute.xlu0 0
  %828 = vperm.xlu0 %827, %v818
  %v829 = vpop.permute.xlu0 %828
  %832 = vset.pattern.permute.xlu0 0
  %833 = vperm.xlu0 %832, %v819
  %v834 = vpop.permute.xlu0 %833
  %837 = vset.pattern.permute.xlu0 0
  %838 = vperm.xlu0 %837, %v820
  %v839 = vpop.permute.xlu0 %838
  %v841 = vadd.f32 %v809, %v824
  %v842 = vadd.f32 %v810, %v829
  %v843 = vadd.f32 %v811, %v834
  %v844 = vadd.f32 %v812, %v839
  %v845 = vadd.f32 %v813, %v824
  %v846 = vadd.f32 %v814, %v829
  %v847 = vadd.f32 %v815, %v834
  %v848 = vadd.f32 %v816, %v839
  %v849 = vmul.f32 %v841, 0.5
  %v850 = vmul.f32 %v842, 0.5
  %v851 = vmul.f32 %v843, 0.5
  %v852 = vmul.f32 %v844, 0.5
  %v853 = vmul.f32 %v845, 0.5
  %v854 = vmul.f32 %v846, 0.5
  %v855 = vmul.f32 %v847, 0.5
  %v856 = vmul.f32 %v848, 0.5
  %v857 = vtanh.pop %v849
  %v858 = vtanh.pop %v850
  %v859 = vtanh.pop %v851
  %v860 = vtanh.pop %v852
  %v861 = vtanh.pop %v853
  %v862 = vtanh.pop %v854
  %v863 = vtanh.pop %v855
  %v864 = vtanh.pop %v856
  %v865 = vmul.f32 %v841, 1.442695
  %v866 = vpow.pop %v865
  %v867 = vmul.f32 %v842, 1.442695
  %v868 = vpow.pop %v867
  %v869 = vmul.f32 %v843, 1.442695
  %v870 = vpow.pop %v869
  %v871 = vmul.f32 %v844, 1.442695
  %v872 = vpow.pop %v871
  %v873 = vmul.f32 %v845, 1.442695
  %v874 = vpow.pop %v873
  %v875 = vmul.f32 %v846, 1.442695
  %v876 = vpow.pop %v875
  %v877 = vmul.f32 %v847, 1.442695
  %v878 = vpow.pop %v877
  %v879 = vmul.f32 %v848, 1.442695
  %v880 = vpow.pop %v879
  %v881 = vadd.f32 %v866, 1.0
  %v882 = vadd.f32 %v868, 1.0
  %v883 = vadd.f32 %v870, 1.0
  %v884 = vadd.f32 %v872, 1.0
  %v885 = vadd.f32 %v874, 1.0
  %v886 = vadd.f32 %v876, 1.0
  %v887 = vadd.f32 %v878, 1.0
  %v888 = vadd.f32 %v880, 1.0
  %v889 = vmul.f32 %v857, %v881
  %v890 = vmul.f32 %v858, %v882
  %v891 = vmul.f32 %v859, %v883
  %v892 = vmul.f32 %v860, %v884
  %v893 = vmul.f32 %v861, %v885
  %v894 = vmul.f32 %v862, %v886
  %v895 = vmul.f32 %v863, %v887
  %v896 = vmul.f32 %v864, %v888
  %vm897 = vcmp.gt.f32.partialorder %v841, 0.0
  %vm898 = vcmp.gt.f32.partialorder %v842, 0.0
  %vm899 = vcmp.gt.f32.partialorder %v843, 0.0
  %vm900 = vcmp.gt.f32.partialorder %v844, 0.0
  %vm901 = vcmp.gt.f32.partialorder %v845, 0.0
  %vm902 = vcmp.gt.f32.partialorder %v846, 0.0
  %vm903 = vcmp.gt.f32.partialorder %v847, 0.0
  %vm904 = vcmp.gt.f32.partialorder %v848, 0.0
  %v905 = vsel %vm897, %v841, %v889
  %v906 = vsel %vm898, %v842, %v890
  %v907 = vsel %vm899, %v843, %v891
  %v908 = vsel %vm900, %v844, %v892
  %v909 = vsel %vm901, %v845, %v893
  %v910 = vsel %vm902, %v846, %v894
  %v911 = vsel %vm903, %v847, %v895
  %v912 = vsel %vm904, %v848, %v896
  %913 = vst.msk [vmem:[%s4] sm:$0xff] %vm375, %v905
  %914 = vst.msk [vmem:[%s4 + $0x8] sm:$0xff] %vm375, %v906
  %915 = vst.msk [vmem:[%s4 + $0x10] sm:$0xff] %vm375, %v907
  %916 = vst.msk [vmem:[%s4 + $0x18] sm:$0xff] %vm375, %v908
  %917 = vst.msk [vmem:[%s4 + $0x20] sm:$0xff] %vm375, %v909
  %918 = vst.msk [vmem:[%s4 + $0x28] sm:$0xff] %vm375, %v910
  %919 = vst.msk [vmem:[%s4 + $0x30] sm:$0xff] %vm375, %v911
  %920 = vst.msk [vmem:[%s4 + $0x38] sm:$0xff] %vm375, %v912
  // Predicated region
  $region18: #{encoder_forward.4} parent=0 // pred_check
    _
  $region19: #{encoder_forward.4} parent=0 // pred_check_branch
    %922 = sbr.rel (0) target = $region21
  $region20: #{encoder_forward.4} parent=0 // pred_region
    _
  $region21: #{encoder_forward.4} parent=0 // pred_fallthru
    _
  // Predicated region
  $region22: #{encoder_forward.4} parent=0 // pred_check
    _
  $region23: #{encoder_forward.4} parent=0 // pred_check_branch
    %924 = sbr.rel (0) target = $region25
  $region24: #{encoder_forward.4} parent=0 // pred_region
    _
  $region25: #{encoder_forward.4} parent=0 // pred_fallthru
    _

// kernel: encoder_forward.5
$region0: #{encoder_forward.5}
  #allocation0 [shape = 'u32[]', space=smem, size = 0x4, offset = 0x4, fixed_abs, tag = 'smem constant byte address 0x4 - core index']
  #allocation1 [shape = 'u32[144,128]{1,0:T(1,128)}', space=vmem, size = 0x12000, scoped, tag = 'internal scratch']
  %s0 = inlined_call_operand.vmem [shape: f32[2,96,54], index: 0, kind: input, shape index: {}]
  %s1 = inlined_call_operand.vmem [shape: f32[3,64,96], index: 1, kind: input, shape index: {}]
  %s2 = inlined_call_operand.vmem [shape: f32[64,1], index: 2, kind: input, shape index: {}]
  %s3 = inlined_call_operand.vmem [shape: f32[64,1], index: 3, kind: input, shape index: {}]
  %s4 = inlined_call_operand.vmem [shape: f32[2,64,48], index: 4, kind: output, shape index: {}]
  %s5 = sld [smem:[#allocation0]]
  $region26: #{encoder_forward.5} parent=0
    _
  %s7 = ssub.s32 1, %s5
  %s8 = scalar_select 0, %s7, %s5
  // Predicated region
  $region2: #{encoder_forward.5} parent=0 // pred_check
    _
  $region3: #{encoder_forward.5} parent=0 // pred_check_branch
    %10 = sbr.rel (0) target = $region5
  $region4: #{encoder_forward.5} parent=0 // pred_region
    _
  $region5: #{encoder_forward.5} parent=0 // pred_fallthru
    _
  // Predicated region
  $region6: #{encoder_forward.5} parent=0 // pred_check
    _
  $region7: #{encoder_forward.5} parent=0 // pred_check_branch
    %12 = sbr.rel (0) target = $region9
  $region8: #{encoder_forward.5} parent=0 // pred_region
    _
  $region9: #{encoder_forward.5} parent=0 // pred_fallthru
    _
  // Predicated region
  $region10: #{encoder_forward.5} parent=0 // pred_check
    _
  $region11: #{encoder_forward.5} parent=0 // pred_check_branch
    %14 = sbr.rel (0) target = $region13
  $region12: #{encoder_forward.5} parent=0 // pred_region
    _
  $region13: #{encoder_forward.5} parent=0 // pred_fallthru
    _
  // Predicated region
  $region14: #{encoder_forward.5} parent=0 // pred_check
    _
  $region15: #{encoder_forward.5} parent=0 // pred_check_branch
    %16 = sbr.rel (0) target = $region17
  $region16: #{encoder_forward.5} parent=0 // pred_region
    _
  $region17: #{encoder_forward.5} parent=0 // pred_fallthru
    _
  %v17 = vld [vmem:[%s1] sm:$0xff]
  %v18 = vld [vmem:[%s1 + $0x8] sm:$0xff]
  %v19 = vld [vmem:[%s1 + $0x10] sm:$0xff]
  %v20 = vld [vmem:[%s1 + $0x18] sm:$0xff]
  %v21 = vld [vmem:[%s1 + $0x20] sm:$0xff]
  %v22 = vld [vmem:[%s1 + $0x28] sm:$0xff]
  %v23 = vld [vmem:[%s1 + $0x30] sm:$0xff]
  %v24 = vld [vmem:[%s1 + $0x38] sm:$0xff]
  %s25 = scalar_lea.vmem %s1, 64
  %v26 = vld [vmem:[%s25] sm:$0xff]
  %v27 = vld [vmem:[%s25 + $0x8] sm:$0xff]
  %v28 = vld [vmem:[%s25 + $0x10] sm:$0xff]
  %v29 = vld [vmem:[%s25 + $0x18] sm:$0xff]
  %v30 = vld [vmem:[%s25 + $0x20] sm:$0xff]
  %v31 = vld [vmem:[%s25 + $0x28] sm:$0xff]
  %v32 = vld [vmem:[%s25 + $0x30] sm:$0xff]
  %v33 = vld [vmem:[%s25 + $0x38] sm:$0xff]
  %s34 = scalar_lea.vmem %s1, 128
  %v35 = vld [vmem:[%s34] sm:$0xff]
  %v36 = vld [vmem:[%s34 + $0x8] sm:$0xff]
  %v37 = vld [vmem:[%s34 + $0x10] sm:$0xff]
  %v38 = vld [vmem:[%s34 + $0x18] sm:$0xff]
  %v39 = vld [vmem:[%s34 + $0x20] sm:$0xff]
  %v40 = vld [vmem:[%s34 + $0x28] sm:$0xff]
  %v41 = vld [vmem:[%s34 + $0x30] sm:$0xff]
  %v42 = vld [vmem:[%s34 + $0x38] sm:$0xff]
  %v43 = vld [vmem:[%s0] sm:$0xff]
  %v44 = vld [vmem:[%s0 + $0x8] sm:$0xff]
  %v45 = vld [vmem:[%s0 + $0x10] sm:$0xff]
  %v46 = vld [vmem:[%s0 + $0x18] sm:$0xff]
  %v47 = vld [vmem:[%s0 + $0x20] sm:$0xff]
  %v48 = vld [vmem:[%s0 + $0x28] sm:$0xff]
  %v49 = vld [vmem:[%s0 + $0x30] sm:$0xff]
  %v50 = vld [vmem:[%s0 + $0x38] sm:$0xff]
  %v51 = vld [vmem:[%s0 + $0x40] sm:$0xff]
  %v52 = vld [vmem:[%s0 + $0x48] sm:$0xff]
  %v53 = vld [vmem:[%s0 + $0x50] sm:$0xff]
  %v54 = vld [vmem:[%s0 + $0x58] sm:$0xff]
  %67 = vrot.lane.b32.xlu0 %v43, 125
  %v68 = vpop.permute.xlu0 %67
  %69 = vrot.lane.b32.xlu0 %v44, 125
  %v70 = vpop.permute.xlu0 %69
  %71 = vrot.lane.b32.xlu0 %v45, 125
  %v72 = vpop.permute.xlu0 %71
  %73 = vrot.lane.b32.xlu0 %v46, 125
  %v74 = vpop.permute.xlu0 %73
  %75 = vrot.lane.b32.xlu0 %v47, 125
  %v76 = vpop.permute.xlu0 %75
  %77 = vrot.lane.b32.xlu0 %v48, 125
  %v78 = vpop.permute.xlu0 %77
  %79 = vrot.lane.b32.xlu0 %v49, 125
  %v80 = vpop.permute.xlu0 %79
  %81 = vrot.lane.b32.xlu0 %v50, 125
  %v82 = vpop.permute.xlu0 %81
  %83 = vrot.lane.b32.xlu0 %v51, 125
  %v84 = vpop.permute.xlu0 %83
  %85 = vrot.lane.b32.xlu0 %v52, 125
  %v86 = vpop.permute.xlu0 %85
  %87 = vrot.lane.b32.xlu0 %v53, 125
  %v88 = vpop.permute.xlu0 %87
  %89 = vrot.lane.b32.xlu0 %v54, 125
  %v90 = vpop.permute.xlu0 %89
  %vm103 = vcmask 785408
  %v105 = vsel %vm103, %v26, 0
  %v108 = vsel %vm103, %v27, 0
  %v111 = vsel %vm103, %v28, 0
  %v114 = vsel %vm103, %v29, 0
  %v117 = vsel %vm103, %v30, 0
  %v120 = vsel %vm103, %v31, 0
  %v123 = vsel %vm103, %v32, 0
  %v126 = vsel %vm103, %v33, 0
  %128 = vmatprep.subr.mxu0 0.0
  %129 = vmatpush1.msra.mxu0 %v68
  %130 = vmatprep.subr.mxu0 0.0
  %131 = vmatpush1.msra.mxu0 %v70
  %132 = vmatprep.subr.mxu0 0.0
  %133 = vmatpush1.msra.mxu0 %v72
  %134 = vmatprep.subr.mxu0 0.0
  %135 = vmatpush1.msra.mxu0 %v74
  %136 = vmatprep.subr.mxu0 0.0
  %137 = vmatpush1.msra.mxu0 %v76
  %138 = vmatprep.subr.mxu0 0.0
  %139 = vmatpush1.msra.mxu0 %v78
  %140 = vmatprep.subr.mxu0 0.0
  %141 = vmatpush1.msra.mxu0 %v80
  %142 = vmatprep.subr.mxu0 0.0
  %143 = vmatpush1.msra.mxu0 %v82
  %144 = vmatprep.subr.mxu0 0.0
  %145 = vmatpush1.msra.mxu0 %v84
  %146 = vmatprep.subr.mxu0 0.0
  %147 = vmatpush1.msra.mxu0 %v86
  %148 = vmatprep.subr.mxu0 0.0
  %149 = vmatpush1.msra.mxu0 %v88
  %150 = vmatprep.subr.mxu0 0.0
  %151 = vmatpush1.msra.mxu0 %v90
  %152 = vmatprep.subr.mxu0 0.0
  %153 = vmatpush1.msra.mxu0 0.0
  %154 = vmatprep.subr.mxu0 0.0
  %155 = vmatpush1.msra.mxu0 0.0
  %156 = vmatprep.subr.mxu0 0.0
  %157 = vmatpush1.msra.mxu0 0.0
  %158 = vmatprep.subr.mxu0 0.0
  %159 = vmatpush1.msra.mxu0 0.0
  %160 = vmatprep.subr.mxu0 0.0
  %161 = vmatpush1.msra.mxu0 0.0
  %162 = vmatprep.subr.mxu0 0.0
  %163 = vmatpush1.msra.mxu0 0.0
  %164 = vmatprep.subr.mxu0 0.0
  %165 = vmatpush1.msra.mxu0 0.0
  %166 = vmatprep.subr.mxu0 0.0
  %167 = vmatpush1.msra.mxu0 0.0
  %168 = vmatprep.subr.mxu0 0.0
  %169 = vmatpush1.msra.mxu0 0.0
  %170 = vmatprep.subr.mxu0 0.0
  %171 = vmatpush1.msra.mxu0 0.0
  %172 = vmatprep.subr.mxu0 0.0
  %173 = vmatpush1.msra.mxu0 0.0
  %174 = vmatprep.subr.mxu0 0.0
  %175 = vmatpush1.msra.mxu0 0.0
  %176 = vmatprep.subr.mxu0 0.0
  %177 = vmatpush1.msra.mxu0 0.0
  %178 = vmatprep.subr.mxu0 0.0
  %179 = vmatpush1.msra.mxu0 0.0
  %180 = vmatprep.subr.mxu0 0.0
  %181 = vmatpush1.msra.mxu0 0.0
  %182 = vmatprep.subr.mxu0 0.0
  %183 = vmatpush1.msra.mxu0 0.0
  %184 = vmatprep.subr.mxu0 0.0
  %185 = vmatpush1.msra.mxu0 0.0
  %186 = vmatprep.subr.mxu0 0.0
  %187 = vmatpush1.msra.mxu0 0.0
  %188 = vmatprep.subr.mxu0 0.0
  %189 = vmatpush1.msra.mxu0 0.0
  %190 = vmatprep.subr.mxu0 0.0
  %191 = vmatpush1.msra.mxu0 0.0
  %192 = vmatprep.mubr.f32.mxu0 0.0
  %193 = vmatmul.mubr.f32.gmra.mrb[0].mxu0 %v105
  %v194 = vpop.f32.mrb[0].mxu0
  %v195 = vadd.f32 0.0, %v194
  %v196 = vpop.f32.mrb[0].mxu0
  %197 = vmatprep.mubr.f32.mxu0 0.0
  %198 = vmatmul.mubr.f32.gmra.mrb[0].mxu0 %v108
  %v199 = vpop.f32.mrb[0].mxu0
  %v200 = vadd.f32 0.0, %v199
  %v201 = vpop.f32.mrb[0].mxu0
  %202 = vmatprep.mubr.f32.mxu0 0.0
  %203 = vmatmul.mubr.f32.gmra.mrb[0].mxu0 %v111
  %v204 = vpop.f32.mrb[0].mxu0
  %v205 = vadd.f32 0.0, %v204
  %v206 = vpop.f32.mrb[0].mxu0
  %207 = vmatprep.mubr.f32.mxu0 0.0
  %208 = vmatmul.mubr.f32.gmra.mrb[0].mxu0 %v114
  %v209 = vpop.f32.mrb[0].mxu0
  %v210 = vadd.f32 0.0, %v209
  %v211 = vpop.f32.mrb[0].mxu0
  %212 = vmatprep.mubr.f32.mxu0 0.0
  %213 = vmatmul.mubr.f32.gmra.mrb[0].mxu0 %v117
  %v214 = vpop.f32.mrb[0].mxu0
  %v215 = vadd.f32 0.0, %v214
  %v216 = vpop.f32.mrb[0].mxu0
  %217 = vmatprep.mubr.f32.mxu0 0.0
  %218 = vmatmul.mubr.f32.gmra.mrb[0].mxu0 %v120
  %v219 = vpop.f32.mrb[0].mxu0
  %v220 = vadd.f32 0.0, %v219
  %v221 = vpop.f32.mrb[0].mxu0
  %222 = vmatprep.mubr.f32.mxu0 0.0
  %223 = vmatmul.mubr.f32.gmra.mrb[0].mxu0 %v123
  %v224 = vpop.f32.mrb[0].mxu0
  %v225 = vadd.f32 0.0, %v224
  %v226 = vpop.f32.mrb[0].mxu0
  %227 = vmatprep.mubr.f32.mxu0 0.0
  %228 = vmatmul.mubr.f32.gmra.mrb[0].mxu0 %v126
  %v229 = vpop.f32.mrb[0].mxu0
  %v230 = vadd.f32 0.0, %v229
  %v231 = vpop.f32.mrb[0].mxu0
  %232 = vdwg.mxu0
  %v234 = vsel %vm103, %v17, 0
  %v237 = vsel %vm103, %v18, 0
  %v240 = vsel %vm103, %v19, 0
  %v243 = vsel %vm103, %v20, 0
  %v246 = vsel %vm103, %v21, 0
  %v249 = vsel %vm103, %v22, 0
  %v252 = vsel %vm103, %v23, 0
  %v255 = vsel %vm103, %v24, 0
  %257 = vmatprep.subr.mxu0 0.0
  %258 = vmatpush1.msra.mxu0 %v43
  %259 = vmatprep.subr.mxu0 0.0
  %260 = vmatpush1.msra.mxu0 %v44
  %261 = vmatprep.subr.mxu0 0.0
  %262 = vmatpush1.msra.mxu0 %v45
  %263 = vmatprep.subr.mxu0 0.0
  %264 = vmatpush1.msra.mxu0 %v46
  %265 = vmatprep.subr.mxu0 0.0
  %266 = vmatpush1.msra.mxu0 %v47
  %267 = vmatprep.subr.mxu0 0.0
  %268 = vmatpush1.msra.mxu0 %v48
  %269 = vmatprep.subr.mxu0 0.0
  %270 = vmatpush1.msra.mxu0 %v49
  %271 = vmatprep.subr.mxu0 0.0
  %272 = vmatpush1.msra.mxu0 %v50
  %273 = vmatprep.subr.mxu0 0.0
  %274 = vmatpush1.msra.mxu0 %v51
  %275 = vmatprep.subr.mxu0 0.0
  %276 = vmatpush1.msra.mxu0 %v52
  %277 = vmatprep.subr.mxu0 0.0
  %278 = vmatpush1.msra.mxu0 %v53
  %279 = vmatprep.subr.mxu0 0.0
  %280 = vmatpush1.msra.mxu0 %v54
  %281 = vmatprep.subr.mxu0 0.0
  %282 = vmatpush1.msra.mxu0 0.0
  %283 = vmatprep.subr.mxu0 0.0
  %284 = vmatpush1.msra.mxu0 0.0
  %285 = vmatprep.subr.mxu0 0.0
  %286 = vmatpush1.msra.mxu0 0.0
  %287 = vmatprep.subr.mxu0 0.0
  %288 = vmatpush1.msra.mxu0 0.0
  %289 = vmatprep.subr.mxu0 0.0
  %290 = vmatpush1.msra.mxu0 0.0
  %291 = vmatprep.subr.mxu0 0.0
  %292 = vmatpush1.msra.mxu0 0.0
  %293 = vmatprep.subr.mxu0 0.0
  %294 = vmatpush1.msra.mxu0 0.0
  %295 = vmatprep.subr.mxu0 0.0
  %296 = vmatpush1.msra.mxu0 0.0
  %297 = vmatprep.subr.mxu0 0.0
  %298 = vmatpush1.msra.mxu0 0.0
  %299 = vmatprep.subr.mxu0 0.0
  %300 = vmatpush1.msra.mxu0 0.0
  %301 = vmatprep.subr.mxu0 0.0
  %302 = vmatpush1.msra.mxu0 0.0
  %303 = vmatprep.subr.mxu0 0.0
  %304 = vmatpush1.msra.mxu0 0.0
  %305 = vmatprep.subr.mxu0 0.0
  %306 = vmatpush1.msra.mxu0 0.0
  %307 = vmatprep.subr.mxu0 0.0
  %308 = vmatpush1.msra.mxu0 0.0
  %309 = vmatprep.subr.mxu0 0.0
  %310 = vmatpush1.msra.mxu0 0.0
  %311 = vmatprep.subr.mxu0 0.0
  %312 = vmatpush1.msra.mxu0 0.0
  %313 = vmatprep.subr.mxu0 0.0
  %314 = vmatpush1.msra.mxu0 0.0
  %315 = vmatprep.subr.mxu0 0.0
  %316 = vmatpush1.msra.mxu0 0.0
  %317 = vmatprep.subr.mxu0 0.0
  %318 = vmatpush1.msra.mxu0 0.0
  %319 = vmatprep.subr.mxu0 0.0
  %320 = vmatpush1.msra.mxu0 0.0
  %321 = vmatprep.mubr.f32.mxu0 0.0
  %322 = vmatmul.mubr.f32.gmra.mrb[0].mxu0 %v234
  %v323 = vpop.f32.mrb[0].mxu0
  %v324 = vadd.f32 %v195, %v323
  %v325 = vpop.f32.mrb[0].mxu0
  %326 = vmatprep.mubr.f32.mxu0 0.0
  %327 = vmatmul.mubr.f32.gmra.mrb[0].mxu0 %v237
  %v328 = vpop.f32.mrb[0].mxu0
  %v329 = vadd.f32 %v200, %v328
  %v330 = vpop.f32.mrb[0].mxu0
  %331 = vmatprep.mubr.f32.mxu0 0.0
  %332 = vmatmul.mubr.f32.gmra.mrb[0].mxu0 %v240
  %v333 = vpop.f32.mrb[0].mxu0
  %v334 = vadd.f32 %v205, %v333
  %v335 = vpop.f32.mrb[0].mxu0
  %336 = vmatprep.mubr.f32.mxu0 0.0
  %337 = vmatmul.mubr.f32.gmra.mrb[0].mxu0 %v243
  %v338 = vpop.f32.mrb[0].mxu0
  %v339 = vadd.f32 %v210, %v338
  %v340 = vpop.f32.mrb[0].mxu0
  %341 = vmatprep.mubr.f32.mxu0 0.0
  %342 = vmatmul.mubr.f32.gmra.mrb[0].mxu0 %v246
  %v343 = vpop.f32.mrb[0].mxu0
  %v344 = vadd.f32 %v215, %v343
  %v345 = vpop.f32.mrb[0].mxu0
  %346 = vmatprep.mubr.f32.mxu0 0.0
  %347 = vmatmul.mubr.f32.gmra.mrb[0].mxu0 %v249
  %v348 = vpop.f32.mrb[0].mxu0
  %v349 = vadd.f32 %v220, %v348
  %v350 = vpop.f32.mrb[0].mxu0
  %351 = vmatprep.mubr.f32.mxu0 0.0
  %352 = vmatmul.mubr.f32.gmra.mrb[0].mxu0 %v252
  %v353 = vpop.f32.mrb[0].mxu0
  %v354 = vadd.f32 %v225, %v353
  %v355 = vpop.f32.mrb[0].mxu0
  %356 = vmatprep.mubr.f32.mxu0 0.0
  %357 = vmatmul.mubr.f32.gmra.mrb[0].mxu0 %v255
  %v358 = vpop.f32.mrb[0].mxu0
  %v359 = vadd.f32 %v230, %v358
  %v360 = vpop.f32.mrb[0].mxu0
  %361 = vdwg.mxu0
  %362 = vrot.lane.b32.xlu0 %v43, 122
  %v363 = vpop.permute.xlu0 %362
  %364 = vrot.lane.b32.xlu0 %v44, 122
  %v365 = vpop.permute.xlu0 %364
  %366 = vrot.lane.b32.xlu0 %v45, 122
  %v367 = vpop.permute.xlu0 %366
  %368 = vrot.lane.b32.xlu0 %v46, 122
  %v369 = vpop.permute.xlu0 %368
  %370 = vrot.lane.b32.xlu0 %v47, 122
  %v371 = vpop.permute.xlu0 %370
  %372 = vrot.lane.b32.xlu0 %v48, 122
  %v373 = vpop.permute.xlu0 %372
  %374 = vrot.lane.b32.xlu0 %v49, 122
  %v375 = vpop.permute.xlu0 %374
  %376 = vrot.lane.b32.xlu0 %v50, 122
  %v377 = vpop.permute.xlu0 %376
  %378 = vrot.lane.b32.xlu0 %v51, 122
  %v379 = vpop.permute.xlu0 %378
  %380 = vrot.lane.b32.xlu0 %v52, 122
  %v381 = vpop.permute.xlu0 %380
  %382 = vrot.lane.b32.xlu0 %v53, 122
  %v383 = vpop.permute.xlu0 %382
  %384 = vrot.lane.b32.xlu0 %v54, 122
  %v385 = vpop.permute.xlu0 %384
  %v399 = vsel %vm103, %v35, 0
  %v402 = vsel %vm103, %v36, 0
  %v405 = vsel %vm103, %v37, 0
  %v408 = vsel %vm103, %v38, 0
  %v411 = vsel %vm103, %v39, 0
  %v414 = vsel %vm103, %v40, 0
  %v417 = vsel %vm103, %v41, 0
  %v420 = vsel %vm103, %v42, 0
  %422 = vmatprep.subr.mxu0 0.0
  %423 = vmatpush1.msra.mxu0 %v363
  %424 = vmatprep.subr.mxu0 0.0
  %425 = vmatpush1.msra.mxu0 %v365
  %426 = vmatprep.subr.mxu0 0.0
  %427 = vmatpush1.msra.mxu0 %v367
  %428 = vmatprep.subr.mxu0 0.0
  %429 = vmatpush1.msra.mxu0 %v369
  %430 = vmatprep.subr.mxu0 0.0
  %431 = vmatpush1.msra.mxu0 %v371
  %432 = vmatprep.subr.mxu0 0.0
  %433 = vmatpush1.msra.mxu0 %v373
  %434 = vmatprep.subr.mxu0 0.0
  %435 = vmatpush1.msra.mxu0 %v375
  %436 = vmatprep.subr.mxu0 0.0
  %437 = vmatpush1.msra.mxu0 %v377
  %438 = vmatprep.subr.mxu0 0.0
  %439 = vmatpush1.msra.mxu0 %v379
  %440 = vmatprep.subr.mxu0 0.0
  %441 = vmatpush1.msra.mxu0 %v381
  %442 = vmatprep.subr.mxu0 0.0
  %443 = vmatpush1.msra.mxu0 %v383
  %444 = vmatprep.subr.mxu0 0.0
  %445 = vmatpush1.msra.mxu0 %v385
  %446 = vmatprep.subr.mxu0 0.0
  %447 = vmatpush1.msra.mxu0 0.0
  %448 = vmatprep.subr.mxu0 0.0
  %449 = vmatpush1.msra.mxu0 0.0
  %450 = vmatprep.subr.mxu0 0.0
  %451 = vmatpush1.msra.mxu0 0.0
  %452 = vmatprep.subr.mxu0 0.0
  %453 = vmatpush1.msra.mxu0 0.0
  %454 = vmatprep.subr.mxu0 0.0
  %455 = vmatpush1.msra.mxu0 0.0
  %456 = vmatprep.subr.mxu0 0.0
  %457 = vmatpush1.msra.mxu0 0.0
  %458 = vmatprep.subr.mxu0 0.0
  %459 = vmatpush1.msra.mxu0 0.0
  %460 = vmatprep.subr.mxu0 0.0
  %461 = vmatpush1.msra.mxu0 0.0
  %462 = vmatprep.subr.mxu0 0.0
  %463 = vmatpush1.msra.mxu0 0.0
  %464 = vmatprep.subr.mxu0 0.0
  %465 = vmatpush1.msra.mxu0 0.0
  %466 = vmatprep.subr.mxu0 0.0
  %467 = vmatpush1.msra.mxu0 0.0
  %468 = vmatprep.subr.mxu0 0.0
  %469 = vmatpush1.msra.mxu0 0.0
  %470 = vmatprep.subr.mxu0 0.0
  %471 = vmatpush1.msra.mxu0 0.0
  %472 = vmatprep.subr.mxu0 0.0
  %473 = vmatpush1.msra.mxu0 0.0
  %474 = vmatprep.subr.mxu0 0.0
  %475 = vmatpush1.msra.mxu0 0.0
  %476 = vmatprep.subr.mxu0 0.0
  %477 = vmatpush1.msra.mxu0 0.0
  %478 = vmatprep.subr.mxu0 0.0
  %479 = vmatpush1.msra.mxu0 0.0
  %480 = vmatprep.subr.mxu0 0.0
  %481 = vmatpush1.msra.mxu0 0.0
  %482 = vmatprep.subr.mxu0 0.0
  %483 = vmatpush1.msra.mxu0 0.0
  %484 = vmatprep.subr.mxu0 0.0
  %485 = vmatpush1.msra.mxu0 0.0
  %486 = vmatprep.mubr.f32.mxu0 0.0
  %487 = vmatmul.mubr.f32.gmra.mrb[0].mxu0 %v399
  %v488 = vpop.f32.mrb[0].mxu0
  %v489 = vadd.f32 0.0, %v488
  %v490 = vpop.f32.mrb[0].mxu0
  %491 = vmatprep.mubr.f32.mxu0 0.0
  %492 = vmatmul.mubr.f32.gmra.mrb[0].mxu0 %v402
  %v493 = vpop.f32.mrb[0].mxu0
  %v494 = vadd.f32 0.0, %v493
  %v495 = vpop.f32.mrb[0].mxu0
  %496 = vmatprep.mubr.f32.mxu0 0.0
  %497 = vmatmul.mubr.f32.gmra.mrb[0].mxu0 %v405
  %v498 = vpop.f32.mrb[0].mxu0
  %v499 = vadd.f32 0.0, %v498
  %v500 = vpop.f32.mrb[0].mxu0
  %501 = vmatprep.mubr.f32.mxu0 0.0
  %502 = vmatmul.mubr.f32.gmra.mrb[0].mxu0 %v408
  %v503 = vpop.f32.mrb[0].mxu0
  %v504 = vadd.f32 0.0, %v503
  %v505 = vpop.f32.mrb[0].mxu0
  %506 = vmatprep.mubr.f32.mxu0 0.0
  %507 = vmatmul.mubr.f32.gmra.mrb[0].mxu0 %v411
  %v508 = vpop.f32.mrb[0].mxu0
  %v509 = vadd.f32 0.0, %v508
  %v510 = vpop.f32.mrb[0].mxu0
  %511 = vmatprep.mubr.f32.mxu0 0.0
  %512 = vmatmul.mubr.f32.gmra.mrb[0].mxu0 %v414
  %v513 = vpop.f32.mrb[0].mxu0
  %v514 = vadd.f32 0.0, %v513
  %v515 = vpop.f32.mrb[0].mxu0
  %516 = vmatprep.mubr.f32.mxu0 0.0
  %517 = vmatmul.mubr.f32.gmra.mrb[0].mxu0 %v417
  %v518 = vpop.f32.mrb[0].mxu0
  %v519 = vadd.f32 0.0, %v518
  %v520 = vpop.f32.mrb[0].mxu0
  %521 = vmatprep.mubr.f32.mxu0 0.0
  %522 = vmatmul.mubr.f32.gmra.mrb[0].mxu0 %v420
  %v523 = vpop.f32.mrb[0].mxu0
  %v524 = vadd.f32 0.0, %v523
  %v525 = vpop.f32.mrb[0].mxu0
  %526 = vdwg.mxu0
  %v527 = vadd.f32 %v324, %v489
  %v528 = vadd.f32 %v329, %v494
  %v529 = vadd.f32 %v334, %v499
  %v530 = vadd.f32 %v339, %v504
  %v531 = vadd.f32 %v344, %v509
  %v532 = vadd.f32 %v349, %v514
  %v533 = vadd.f32 %v354, %v519
  %v534 = vadd.f32 %v359, %v524
  %vm535 = vcmask 392192
  %536 = vst.msk [vmem:[%s4] sm:$0xff] %vm535, %v527
  %537 = vst.msk [vmem:[%s4 + $0x8] sm:$0xff] %vm535, %v528
  %538 = vst.msk [vmem:[%s4 + $0x10] sm:$0xff] %vm535, %v529
  %539 = vst.msk [vmem:[%s4 + $0x18] sm:$0xff] %vm535, %v530
  %540 = vst.msk [vmem:[%s4 + $0x20] sm:$0xff] %vm535, %v531
  %541 = vst.msk [vmem:[%s4 + $0x28] sm:$0xff] %vm535, %v532
  %542 = vst.msk [vmem:[%s4 + $0x30] sm:$0xff] %vm535, %v533
  %543 = vst.msk [vmem:[%s4 + $0x38] sm:$0xff] %vm535, %v534
  %s544 = scalar_lea.vmem %s0, 96
  %v545 = vld [vmem:[%s544] sm:$0xff]
  %v546 = vld [vmem:[%s544 + $0x8] sm:$0xff]
  %v547 = vld [vmem:[%s544 + $0x10] sm:$0xff]
  %v548 = vld [vmem:[%s544 + $0x18] sm:$0xff]
  %v549 = vld [vmem:[%s544 + $0x20] sm:$0xff]
  %v550 = vld [vmem:[%s544 + $0x28] sm:$0xff]
  %v551 = vld [vmem:[%s544 + $0x30] sm:$0xff]
  %v552 = vld [vmem:[%s544 + $0x38] sm:$0xff]
  %v553 = vld [vmem:[%s544 + $0x40] sm:$0xff]
  %v554 = vld [vmem:[%s544 + $0x48] sm:$0xff]
  %v555 = vld [vmem:[%s544 + $0x50] sm:$0xff]
  %v556 = vld [vmem:[%s544 + $0x58] sm:$0xff]
  %569 = vrot.lane.b32.xlu0 %v545, 125
  %v570 = vpop.permute.xlu0 %569
  %571 = vrot.lane.b32.xlu0 %v546, 125
  %v572 = vpop.permute.xlu0 %571
  %573 = vrot.lane.b32.xlu0 %v547, 125
  %v574 = vpop.permute.xlu0 %573
  %575 = vrot.lane.b32.xlu0 %v548, 125
  %v576 = vpop.permute.xlu0 %575
  %577 = vrot.lane.b32.xlu0 %v549, 125
  %v578 = vpop.permute.xlu0 %577
  %579 = vrot.lane.b32.xlu0 %v550, 125
  %v580 = vpop.permute.xlu0 %579
  %581 = vrot.lane.b32.xlu0 %v551, 125
  %v582 = vpop.permute.xlu0 %581
  %583 = vrot.lane.b32.xlu0 %v552, 125
  %v584 = vpop.permute.xlu0 %583
  %585 = vrot.lane.b32.xlu0 %v553, 125
  %v586 = vpop.permute.xlu0 %585
  %587 = vrot.lane.b32.xlu0 %v554, 125
  %v588 = vpop.permute.xlu0 %587
  %589 = vrot.lane.b32.xlu0 %v555, 125
  %v590 = vpop.permute.xlu0 %589
  %591 = vrot.lane.b32.xlu0 %v556, 125
  %v592 = vpop.permute.xlu0 %591
  %605 = vmatprep.subr.mxu0 0.0
  %606 = vmatpush1.msra.mxu0 %v570
  %607 = vmatprep.subr.mxu0 0.0
  %608 = vmatpush1.msra.mxu0 %v572
  %609 = vmatprep.subr.mxu0 0.0
  %610 = vmatpush1.msra.mxu0 %v574
  %611 = vmatprep.subr.mxu0 0.0
  %612 = vmatpush1.msra.mxu0 %v576
  %613 = vmatprep.subr.mxu0 0.0
  %614 = vmatpush1.msra.mxu0 %v578
  %615 = vmatprep.subr.mxu0 0.0
  %616 = vmatpush1.msra.mxu0 %v580
  %617 = vmatprep.subr.mxu0 0.0
  %618 = vmatpush1.msra.mxu0 %v582
  %619 = vmatprep.subr.mxu0 0.0
  %620 = vmatpush1.msra.mxu0 %v584
  %621 = vmatprep.subr.mxu0 0.0
  %622 = vmatpush1.msra.mxu0 %v586
  %623 = vmatprep.subr.mxu0 0.0
  %624 = vmatpush1.msra.mxu0 %v588
  %625 = vmatprep.subr.mxu0 0.0
  %626 = vmatpush1.msra.mxu0 %v590
  %627 = vmatprep.subr.mxu0 0.0
  %628 = vmatpush1.msra.mxu0 %v592
  %629 = vmatprep.subr.mxu0 0.0
  %630 = vmatpush1.msra.mxu0 0.0
  %631 = vmatprep.subr.mxu0 0.0
  %632 = vmatpush1.msra.mxu0 0.0
  %633 = vmatprep.subr.mxu0 0.0
  %634 = vmatpush1.msra.mxu0 0.0
  %635 = vmatprep.subr.mxu0 0.0
  %636 = vmatpush1.msra.mxu0 0.0
  %637 = vmatprep.subr.mxu0 0.0
  %638 = vmatpush1.msra.mxu0 0.0
  %639 = vmatprep.subr.mxu0 0.0
  %640 = vmatpush1.msra.mxu0 0.0
  %641 = vmatprep.subr.mxu0 0.0
  %642 = vmatpush1.msra.mxu0 0.0
  %643 = vmatprep.subr.mxu0 0.0
  %644 = vmatpush1.msra.mxu0 0.0
  %645 = vmatprep.subr.mxu0 0.0
  %646 = vmatpush1.msra.mxu0 0.0
  %647 = vmatprep.subr.mxu0 0.0
  %648 = vmatpush1.msra.mxu0 0.0
  %649 = vmatprep.subr.mxu0 0.0
  %650 = vmatpush1.msra.mxu0 0.0
  %651 = vmatprep.subr.mxu0 0.0
  %652 = vmatpush1.msra.mxu0 0.0
  %653 = vmatprep.subr.mxu0 0.0
  %654 = vmatpush1.msra.mxu0 0.0
  %655 = vmatprep.subr.mxu0 0.0
  %656 = vmatpush1.msra.mxu0 0.0
  %657 = vmatprep.subr.mxu0 0.0
  %658 = vmatpush1.msra.mxu0 0.0
  %659 = vmatprep.subr.mxu0 0.0
  %660 = vmatpush1.msra.mxu0 0.0
  %661 = vmatprep.subr.mxu0 0.0
  %662 = vmatpush1.msra.mxu0 0.0
  %663 = vmatprep.subr.mxu0 0.0
  %664 = vmatpush1.msra.mxu0 0.0
  %665 = vmatprep.subr.mxu0 0.0
  %666 = vmatpush1.msra.mxu0 0.0
  %667 = vmatprep.subr.mxu0 0.0
  %668 = vmatpush1.msra.mxu0 0.0
  %669 = vmatprep.mubr.f32.mxu0 0.0
  %670 = vmatmul.mubr.f32.gmra.mrb[0].mxu0 %v105
  %v671 = vpop.f32.mrb[0].mxu0
  %v672 = vadd.f32 0.0, %v671
  %v673 = vpop.f32.mrb[0].mxu0
  %674 = vmatprep.mubr.f32.mxu0 0.0
  %675 = vmatmul.mubr.f32.gmra.mrb[0].mxu0 %v108
  %v676 = vpop.f32.mrb[0].mxu0
  %v677 = vadd.f32 0.0, %v676
  %v678 = vpop.f32.mrb[0].mxu0
  %679 = vmatprep.mubr.f32.mxu0 0.0
  %680 = vmatmul.mubr.f32.gmra.mrb[0].mxu0 %v111
  %v681 = vpop.f32.mrb[0].mxu0
  %v682 = vadd.f32 0.0, %v681
  %v683 = vpop.f32.mrb[0].mxu0
  %684 = vmatprep.mubr.f32.mxu0 0.0
  %685 = vmatmul.mubr.f32.gmra.mrb[0].mxu0 %v114
  %v686 = vpop.f32.mrb[0].mxu0
  %v687 = vadd.f32 0.0, %v686
  %v688 = vpop.f32.mrb[0].mxu0
  %689 = vmatprep.mubr.f32.mxu0 0.0
  %690 = vmatmul.mubr.f32.gmra.mrb[0].mxu0 %v117
  %v691 = vpop.f32.mrb[0].mxu0
  %v692 = vadd.f32 0.0, %v691
  %v693 = vpop.f32.mrb[0].mxu0
  %694 = vmatprep.mubr.f32.mxu0 0.0
  %695 = vmatmul.mubr.f32.gmra.mrb[0].mxu0 %v120
  %v696 = vpop.f32.mrb[0].mxu0
  %v697 = vadd.f32 0.0, %v696
  %v698 = vpop.f32.mrb[0].mxu0
  %699 = vmatprep.mubr.f32.mxu0 0.0
  %700 = vmatmul.mubr.f32.gmra.mrb[0].mxu0 %v123
  %v701 = vpop.f32.mrb[0].mxu0
  %v702 = vadd.f32 0.0, %v701
  %v703 = vpop.f32.mrb[0].mxu0
  %704 = vmatprep.mubr.f32.mxu0 0.0
  %705 = vmatmul.mubr.f32.gmra.mrb[0].mxu0 %v126
  %v706 = vpop.f32.mrb[0].mxu0
  %v707 = vadd.f32 0.0, %v706
  %v708 = vpop.f32.mrb[0].mxu0
  %709 = vdwg.mxu0
  %710 = vmatprep.subr.mxu0 0.0
  %711 = vmatpush1.msra.mxu0 %v545
  %712 = vmatprep.subr.mxu0 0.0
  %713 = vmatpush1.msra.mxu0 %v546
  %714 = vmatprep.subr.mxu0 0.0
  %715 = vmatpush1.msra.mxu0 %v547
  %716 = vmatprep.subr.mxu0 0.0
  %717 = vmatpush1.msra.mxu0 %v548
  %718 = vmatprep.subr.mxu0 0.0
  %719 = vmatpush1.msra.mxu0 %v549
  %720 = vmatprep.subr.mxu0 0.0
  %721 = vmatpush1.msra.mxu0 %v550
  %722 = vmatprep.subr.mxu0 0.0
  %723 = vmatpush1.msra.mxu0 %v551
  %724 = vmatprep.subr.mxu0 0.0
  %725 = vmatpush1.msra.mxu0 %v552
  %726 = vmatprep.subr.mxu0 0.0
  %727 = vmatpush1.msra.mxu0 %v553
  %728 = vmatprep.subr.mxu0 0.0
  %729 = vmatpush1.msra.mxu0 %v554
  %730 = vmatprep.subr.mxu0 0.0
  %731 = vmatpush1.msra.mxu0 %v555
  %732 = vmatprep.subr.mxu0 0.0
  %733 = vmatpush1.msra.mxu0 %v556
  %734 = vmatprep.subr.mxu0 0.0
  %735 = vmatpush1.msra.mxu0 0.0
  %736 = vmatprep.subr.mxu0 0.0
  %737 = vmatpush1.msra.mxu0 0.0
  %738 = vmatprep.subr.mxu0 0.0
  %739 = vmatpush1.msra.mxu0 0.0
  %740 = vmatprep.subr.mxu0 0.0
  %741 = vmatpush1.msra.mxu0 0.0
  %742 = vmatprep.subr.mxu0 0.0
  %743 = vmatpush1.msra.mxu0 0.0
  %744 = vmatprep.subr.mxu0 0.0
  %745 = vmatpush1.msra.mxu0 0.0
  %746 = vmatprep.subr.mxu0 0.0
  %747 = vmatpush1.msra.mxu0 0.0
  %748 = vmatprep.subr.mxu0 0.0
  %749 = vmatpush1.msra.mxu0 0.0
  %750 = vmatprep.subr.mxu0 0.0
  %751 = vmatpush1.msra.mxu0 0.0
  %752 = vmatprep.subr.mxu0 0.0
  %753 = vmatpush1.msra.mxu0 0.0
  %754 = vmatprep.subr.mxu0 0.0
  %755 = vmatpush1.msra.mxu0 0.0
  %756 = vmatprep.subr.mxu0 0.0
  %757 = vmatpush1.msra.mxu0 0.0
  %758 = vmatprep.subr.mxu0 0.0
  %759 = vmatpush1.msra.mxu0 0.0
  %760 = vmatprep.subr.mxu0 0.0
  %761 = vmatpush1.msra.mxu0 0.0
  %762 = vmatprep.subr.mxu0 0.0
  %763 = vmatpush1.msra.mxu0 0.0
  %764 = vmatprep.subr.mxu0 0.0
  %765 = vmatpush1.msra.mxu0 0.0
  %766 = vmatprep.subr.mxu0 0.0
  %767 = vmatpush1.msra.mxu0 0.0
  %768 = vmatprep.subr.mxu0 0.0
  %769 = vmatpush1.msra.mxu0 0.0
  %770 = vmatprep.subr.mxu0 0.0
  %771 = vmatpush1.msra.mxu0 0.0
  %772 = vmatprep.subr.mxu0 0.0
  %773 = vmatpush1.msra.mxu0 0.0
  %774 = vmatprep.mubr.f32.mxu0 0.0
  %775 = vmatmul.mubr.f32.gmra.mrb[0].mxu0 %v234
  %v776 = vpop.f32.mrb[0].mxu0
  %v777 = vadd.f32 %v672, %v776
  %v778 = vpop.f32.mrb[0].mxu0
  %779 = vmatprep.mubr.f32.mxu0 0.0
  %780 = vmatmul.mubr.f32.gmra.mrb[0].mxu0 %v237
  %v781 = vpop.f32.mrb[0].mxu0
  %v782 = vadd.f32 %v677, %v781
  %v783 = vpop.f32.mrb[0].mxu0
  %784 = vmatprep.mubr.f32.mxu0 0.0
  %785 = vmatmul.mubr.f32.gmra.mrb[0].mxu0 %v240
  %v786 = vpop.f32.mrb[0].mxu0
  %v787 = vadd.f32 %v682, %v786
  %v788 = vpop.f32.mrb[0].mxu0
  %789 = vmatprep.mubr.f32.mxu0 0.0
  %790 = vmatmul.mubr.f32.gmra.mrb[0].mxu0 %v243
  %v791 = vpop.f32.mrb[0].mxu0
  %v792 = vadd.f32 %v687, %v791
  %v793 = vpop.f32.mrb[0].mxu0
  %794 = vmatprep.mubr.f32.mxu0 0.0
  %795 = vmatmul.mubr.f32.gmra.mrb[0].mxu0 %v246
  %v796 = vpop.f32.mrb[0].mxu0
  %v797 = vadd.f32 %v692, %v796
  %v798 = vpop.f32.mrb[0].mxu0
  %799 = vmatprep.mubr.f32.mxu0 0.0
  %800 = vmatmul.mubr.f32.gmra.mrb[0].mxu0 %v249
  %v801 = vpop.f32.mrb[0].mxu0
  %v802 = vadd.f32 %v697, %v801
  %v803 = vpop.f32.mrb[0].mxu0
  %804 = vmatprep.mubr.f32.mxu0 0.0
  %805 = vmatmul.mubr.f32.gmra.mrb[0].mxu0 %v252
  %v806 = vpop.f32.mrb[0].mxu0
  %v807 = vadd.f32 %v702, %v806
  %v808 = vpop.f32.mrb[0].mxu0
  %809 = vmatprep.mubr.f32.mxu0 0.0
  %810 = vmatmul.mubr.f32.gmra.mrb[0].mxu0 %v255
  %v811 = vpop.f32.mrb[0].mxu0
  %v812 = vadd.f32 %v707, %v811
  %v813 = vpop.f32.mrb[0].mxu0
  %814 = vdwg.mxu0
  %815 = vrot.lane.b32.xlu0 %v545, 122
  %v816 = vpop.permute.xlu0 %815
  %817 = vrot.lane.b32.xlu0 %v546, 122
  %v818 = vpop.permute.xlu0 %817
  %819 = vrot.lane.b32.xlu0 %v547, 122
  %v820 = vpop.permute.xlu0 %819
  %821 = vrot.lane.b32.xlu0 %v548, 122
  %v822 = vpop.permute.xlu0 %821
  %823 = vrot.lane.b32.xlu0 %v549, 122
  %v824 = vpop.permute.xlu0 %823
  %825 = vrot.lane.b32.xlu0 %v550, 122
  %v826 = vpop.permute.xlu0 %825
  %827 = vrot.lane.b32.xlu0 %v551, 122
  %v828 = vpop.permute.xlu0 %827
  %829 = vrot.lane.b32.xlu0 %v552, 122
  %v830 = vpop.permute.xlu0 %829
  %831 = vrot.lane.b32.xlu0 %v553, 122
  %v832 = vpop.permute.xlu0 %831
  %833 = vrot.lane.b32.xlu0 %v554, 122
  %v834 = vpop.permute.xlu0 %833
  %835 = vrot.lane.b32.xlu0 %v555, 122
  %v836 = vpop.permute.xlu0 %835
  %837 = vrot.lane.b32.xlu0 %v556, 122
  %v838 = vpop.permute.xlu0 %837
  %851 = vmatprep.subr.mxu0 0.0
  %852 = vmatpush1.msra.mxu0 %v816
  %853 = vmatprep.subr.mxu0 0.0
  %854 = vmatpush1.msra.mxu0 %v818
  %855 = vmatprep.subr.mxu0 0.0
  %856 = vmatpush1.msra.mxu0 %v820
  %857 = vmatprep.subr.mxu0 0.0
  %858 = vmatpush1.msra.mxu0 %v822
  %859 = vmatprep.subr.mxu0 0.0
  %860 = vmatpush1.msra.mxu0 %v824
  %861 = vmatprep.subr.mxu0 0.0
  %862 = vmatpush1.msra.mxu0 %v826
  %863 = vmatprep.subr.mxu0 0.0
  %864 = vmatpush1.msra.mxu0 %v828
  %865 = vmatprep.subr.mxu0 0.0
  %866 = vmatpush1.msra.mxu0 %v830
  %867 = vmatprep.subr.mxu0 0.0
  %868 = vmatpush1.msra.mxu0 %v832
  %869 = vmatprep.subr.mxu0 0.0
  %870 = vmatpush1.msra.mxu0 %v834
  %871 = vmatprep.subr.mxu0 0.0
  %872 = vmatpush1.msra.mxu0 %v836
  %873 = vmatprep.subr.mxu0 0.0
  %874 = vmatpush1.msra.mxu0 %v838
  %875 = vmatprep.subr.mxu0 0.0
  %876 = vmatpush1.msra.mxu0 0.0
  %877 = vmatprep.subr.mxu0 0.0
  %878 = vmatpush1.msra.mxu0 0.0
  %879 = vmatprep.subr.mxu0 0.0
  %880 = vmatpush1.msra.mxu0 0.0
  %881 = vmatprep.subr.mxu0 0.0
  %882 = vmatpush1.msra.mxu0 0.0
  %883 = vmatprep.subr.mxu0 0.0
  %884 = vmatpush1.msra.mxu0 0.0
  %885 = vmatprep.subr.mxu0 0.0
  %886 = vmatpush1.msra.mxu0 0.0
  %887 = vmatprep.subr.mxu0 0.0
  %888 = vmatpush1.msra.mxu0 0.0
  %889 = vmatprep.subr.mxu0 0.0
  %890 = vmatpush1.msra.mxu0 0.0
  %891 = vmatprep.subr.mxu0 0.0
  %892 = vmatpush1.msra.mxu0 0.0
  %893 = vmatprep.subr.mxu0 0.0
  %894 = vmatpush1.msra.mxu0 0.0
  %895 = vmatprep.subr.mxu0 0.0
  %896 = vmatpush1.msra.mxu0 0.0
  %897 = vmatprep.subr.mxu0 0.0
  %898 = vmatpush1.msra.mxu0 0.0
  %899 = vmatprep.subr.mxu0 0.0
  %900 = vmatpush1.msra.mxu0 0.0
  %901 = vmatprep.subr.mxu0 0.0
  %902 = vmatpush1.msra.mxu0 0.0
  %903 = vmatprep.subr.mxu0 0.0
  %904 = vmatpush1.msra.mxu0 0.0
  %905 = vmatprep.subr.mxu0 0.0
  %906 = vmatpush1.msra.mxu0 0.0
  %907 = vmatprep.subr.mxu0 0.0
  %908 = vmatpush1.msra.mxu0 0.0
  %909 = vmatprep.subr.mxu0 0.0
  %910 = vmatpush1.msra.mxu0 0.0
  %911 = vmatprep.subr.mxu0 0.0
  %912 = vmatpush1.msra.mxu0 0.0
  %913 = vmatprep.subr.mxu0 0.0
  %914 = vmatpush1.msra.mxu0 0.0
  %915 = vmatprep.mubr.f32.mxu0 0.0
  %916 = vmatmul.mubr.f32.gmra.mrb[0].mxu0 %v399
  %v917 = vpop.f32.mrb[0].mxu0
  %v918 = vadd.f32 0.0, %v917
  %v919 = vpop.f32.mrb[0].mxu0
  %920 = vmatprep.mubr.f32.mxu0 0.0
  %921 = vmatmul.mubr.f32.gmra.mrb[0].mxu0 %v402
  %v922 = vpop.f32.mrb[0].mxu0
  %v923 = vadd.f32 0.0, %v922
  %v924 = vpop.f32.mrb[0].mxu0
  %925 = vmatprep.mubr.f32.mxu0 0.0
  %926 = vmatmul.mubr.f32.gmra.mrb[0].mxu0 %v405
  %v927 = vpop.f32.mrb[0].mxu0
  %v928 = vadd.f32 0.0, %v927
  %v929 = vpop.f32.mrb[0].mxu0
  %930 = vmatprep.mubr.f32.mxu0 0.0
  %931 = vmatmul.mubr.f32.gmra.mrb[0].mxu0 %v408
  %v932 = vpop.f32.mrb[0].mxu0
  %v933 = vadd.f32 0.0, %v932
  %v934 = vpop.f32.mrb[0].mxu0
  %935 = vmatprep.mubr.f32.mxu0 0.0
  %936 = vmatmul.mubr.f32.gmra.mrb[0].mxu0 %v411
  %v937 = vpop.f32.mrb[0].mxu0
  %v938 = vadd.f32 0.0, %v937
  %v939 = vpop.f32.mrb[0].mxu0
  %940 = vmatprep.mubr.f32.mxu0 0.0
  %941 = vmatmul.mubr.f32.gmra.mrb[0].mxu0 %v414
  %v942 = vpop.f32.mrb[0].mxu0
  %v943 = vadd.f32 0.0, %v942
  %v944 = vpop.f32.mrb[0].mxu0
  %945 = vmatprep.mubr.f32.mxu0 0.0
  %946 = vmatmul.mubr.f32.gmra.mrb[0].mxu0 %v417
  %v947 = vpop.f32.mrb[0].mxu0
  %v948 = vadd.f32 0.0, %v947
  %v949 = vpop.f32.mrb[0].mxu0
  %950 = vmatprep.mubr.f32.mxu0 0.0
  %951 = vmatmul.mubr.f32.gmra.mrb[0].mxu0 %v420
  %v952 = vpop.f32.mrb[0].mxu0
  %v953 = vadd.f32 0.0, %v952
  %v954 = vpop.f32.mrb[0].mxu0
  %955 = vdwg.mxu0
  %v956 = vadd.f32 %v777, %v918
  %v957 = vadd.f32 %v782, %v923
  %v958 = vadd.f32 %v787, %v928
  %v959 = vadd.f32 %v792, %v933
  %v960 = vadd.f32 %v797, %v938
  %v961 = vadd.f32 %v802, %v943
  %v962 = vadd.f32 %v807, %v948
  %v963 = vadd.f32 %v812, %v953
  %s964 = scalar_lea.vmem %s4, 64
  %965 = vst.msk [vmem:[%s964] sm:$0xff] %vm535, %v956
  %966 = vst.msk [vmem:[%s964 + $0x8] sm:$0xff] %vm535, %v957
  %967 = vst.msk [vmem:[%s964 + $0x10] sm:$0xff] %vm535, %v958
  %968 = vst.msk [vmem:[%s964 + $0x18] sm:$0xff] %vm535, %v959
  %969 = vst.msk [vmem:[%s964 + $0x20] sm:$0xff] %vm535, %v960
  %970 = vst.msk [vmem:[%s964 + $0x28] sm:$0xff] %vm535, %v961
  %971 = vst.msk [vmem:[%s964 + $0x30] sm:$0xff] %vm535, %v962
  %972 = vst.msk [vmem:[%s964 + $0x38] sm:$0xff] %vm535, %v963
  %v973 = vld [vmem:[%s4] sm:$0xff]
  %v974 = vld [vmem:[%s4 + $0x8] sm:$0xff]
  %v975 = vld [vmem:[%s4 + $0x10] sm:$0xff]
  %v976 = vld [vmem:[%s4 + $0x18] sm:$0xff]
  %v977 = vld [vmem:[%s4 + $0x20] sm:$0xff]
  %v978 = vld [vmem:[%s4 + $0x28] sm:$0xff]
  %v979 = vld [vmem:[%s4 + $0x30] sm:$0xff]
  %v980 = vld [vmem:[%s4 + $0x38] sm:$0xff]
  %v981 = vld [vmem:[%s4 + $0x40] sm:$0xff]
  %v982 = vld [vmem:[%s4 + $0x48] sm:$0xff]
  %v983 = vld [vmem:[%s4 + $0x50] sm:$0xff]
  %v984 = vld [vmem:[%s4 + $0x58] sm:$0xff]
  %v985 = vld [vmem:[%s4 + $0x60] sm:$0xff]
  %v986 = vld [vmem:[%s4 + $0x68] sm:$0xff]
  %v987 = vld [vmem:[%s4 + $0x70] sm:$0xff]
  %v988 = vld [vmem:[%s4 + $0x78] sm:$0xff]
  %v989 = vsel %vm535, %v973, 0.0
  %v990 = vsel %vm535, %v981, 0.0
  %v991 = vadd.f32 %v989, %v990
  %v992 = vsel %vm535, %v974, 0.0
  %v993 = vsel %vm535, %v982, 0.0
  %v994 = vadd.f32 %v992, %v993
  %v995 = vsel %vm535, %v975, 0.0
  %v996 = vsel %vm535, %v983, 0.0
  %v997 = vadd.f32 %v995, %v996
  %v998 = vsel %vm535, %v976, 0.0
  %v999 = vsel %vm535, %v984, 0.0
  %v1000 = vadd.f32 %v998, %v999
  %v1001 = vsel %vm535, %v977, 0.0
  %v1002 = vsel %vm535, %v985, 0.0
  %v1003 = vadd.f32 %v1001, %v1002
  %v1004 = vsel %vm535, %v978, 0.0
  %v1005 = vsel %vm535, %v986, 0.0
  %v1006 = vadd.f32 %v1004, %v1005
  %v1007 = vsel %vm535, %v979, 0.0
  %v1008 = vsel %vm535, %v987, 0.0
  %v1009 = vadd.f32 %v1007, %v1008
  %v1010 = vsel %vm535, %v980, 0.0
  %v1011 = vsel %vm535, %v988, 0.0
  %v1012 = vadd.f32 %v1010, %v1011
  %v1013 = vsel %vm535, %v991, 0.0
  %1014 = vadd.xlane.f32.xlu0 %v1013
  %v1015 = vpop.xlane.xlu0 %1014
  %v1016 = vsel %vm535, %v994, 0.0
  %1017 = vadd.xlane.f32.xlu0 %v1016
  %v1018 = vpop.xlane.xlu0 %1017
  %v1019 = vsel %vm535, %v997, 0.0
  %1020 = vadd.xlane.f32.xlu0 %v1019
  %v1021 = vpop.xlane.xlu0 %1020
  %v1022 = vsel %vm535, %v1000, 0.0
  %1023 = vadd.xlane.f32.xlu0 %v1022
  %v1024 = vpop.xlane.xlu0 %1023
  %v1025 = vsel %vm535, %v1003, 0.0
  %1026 = vadd.xlane.f32.xlu0 %v1025
  %v1027 = vpop.xlane.xlu0 %1026
  %v1028 = vsel %vm535, %v1006, 0.0
  %1029 = vadd.xlane.f32.xlu0 %v1028
  %v1030 = vpop.xlane.xlu0 %1029
  %v1031 = vsel %vm535, %v1009, 0.0
  %1032 = vadd.xlane.f32.xlu0 %v1031
  %v1033 = vpop.xlane.xlu0 %1032
  %v1034 = vsel %vm535, %v1012, 0.0
  %1035 = vadd.xlane.f32.xlu0 %v1034
  %v1036 = vpop.xlane.xlu0 %1035
  %v1037 = vmul.f32 %v1015, 0.010416667
  %v1038 = vmul.f32 %v1018, 0.010416667
  %v1039 = vmul.f32 %v1021, 0.010416667
  %v1040 = vmul.f32 %v1024, 0.010416667
  %v1041 = vmul.f32 %v1027, 0.010416667
  %v1042 = vmul.f32 %v1030, 0.010416667
  %v1043 = vmul.f32 %v1033, 0.010416667
  %v1044 = vmul.f32 %v1036, 0.010416667
  %v1045 = vsub.f32 %v973, %v1037
  %v1046 = vsub.f32 %v974, %v1038
  %v1047 = vsub.f32 %v975, %v1039
  %v1048 = vsub.f32 %v976, %v1040
  %v1049 = vsub.f32 %v977, %v1041
  %v1050 = vsub.f32 %v978, %v1042
  %v1051 = vsub.f32 %v979, %v1043
  %v1052 = vsub.f32 %v980, %v1044
  %v1053 = vsub.f32 %v981, %v1037
  %v1054 = vsub.f32 %v982, %v1038
  %v1055 = vsub.f32 %v983, %v1039
  %v1056 = vsub.f32 %v984, %v1040
  %v1057 = vsub.f32 %v985, %v1041
  %v1058 = vsub.f32 %v986, %v1042
  %v1059 = vsub.f32 %v987, %v1043
  %v1060 = vsub.f32 %v988, %v1044
  %v1061 = vmul.f32 %v1045, %v1045
  %v1062 = vmul.f32 %v1046, %v1046
  %v1063 = vmul.f32 %v1047, %v1047
  %v1064 = vmul.f32 %v1048, %v1048
  %v1065 = vmul.f32 %v1049, %v1049
  %v1066 = vmul.f32 %v1050, %v1050
  %v1067 = vmul.f32 %v1051, %v1051
  %v1068 = vmul.f32 %v1052, %v1052
  %v1069 = vmul.f32 %v1053, %v1053
  %v1070 = vmul.f32 %v1054, %v1054
  %v1071 = vmul.f32 %v1055, %v1055
  %v1072 = vmul.f32 %v1056, %v1056
  %v1073 = vmul.f32 %v1057, %v1057
  %v1074 = vmul.f32 %v1058, %v1058
  %v1075 = vmul.f32 %v1059, %v1059
  %v1076 = vmul.f32 %v1060, %v1060
  %v1077 = vsel %vm535, %v1061, 0.0
  %v1078 = vsel %vm535, %v1069, 0.0
  %v1079 = vadd.f32 %v1077, %v1078
  %v1080 = vsel %vm535, %v1062, 0.0
  %v1081 = vsel %vm535, %v1070, 0.0
  %v1082 = vadd.f32 %v1080, %v1081
  %v1083 = vsel %vm535, %v1063, 0.0
  %v1084 = vsel %vm535, %v1071, 0.0
  %v1085 = vadd.f32 %v1083, %v1084
  %v1086 = vsel %vm535, %v1064, 0.0
  %v1087 = vsel %vm535, %v1072, 0.0
  %v1088 = vadd.f32 %v1086, %v1087
  %v1089 = vsel %vm535, %v1065, 0.0
  %v1090 = vsel %vm535, %v1073, 0.0
  %v1091 = vadd.f32 %v1089, %v1090
  %v1092 = vsel %vm535, %v1066, 0.0
  %v1093 = vsel %vm535, %v1074, 0.0
  %v1094 = vadd.f32 %v1092, %v1093
  %v1095 = vsel %vm535, %v1067, 0.0
  %v1096 = vsel %vm535, %v1075, 0.0
  %v1097 = vadd.f32 %v1095, %v1096
  %v1098 = vsel %vm535, %v1068, 0.0
  %v1099 = vsel %vm535, %v1076, 0.0
  %v1100 = vadd.f32 %v1098, %v1099
  %v1101 = vsel %vm535, %v1079, 0.0
  %1102 = vadd.xlane.f32.xlu0 %v1101
  %v1103 = vpop.xlane.xlu0 %1102
  %v1104 = vsel %vm535, %v1082, 0.0
  %1105 = vadd.xlane.f32.xlu0 %v1104
  %v1106 = vpop.xlane.xlu0 %1105
  %v1107 = vsel %vm535, %v1085, 0.0
  %1108 = vadd.xlane.f32.xlu0 %v1107
  %v1109 = vpop.xlane.xlu0 %1108
  %v1110 = vsel %vm535, %v1088, 0.0
  %1111 = vadd.xlane.f32.xlu0 %v1110
  %v1112 = vpop.xlane.xlu0 %1111
  %v1113 = vsel %vm535, %v1091, 0.0
  %1114 = vadd.xlane.f32.xlu0 %v1113
  %v1115 = vpop.xlane.xlu0 %1114
  %v1116 = vsel %vm535, %v1094, 0.0
  %1117 = vadd.xlane.f32.xlu0 %v1116
  %v1118 = vpop.xlane.xlu0 %1117
  %v1119 = vsel %vm535, %v1097, 0.0
  %1120 = vadd.xlane.f32.xlu0 %v1119
  %v1121 = vpop.xlane.xlu0 %1120
  %v1122 = vsel %vm535, %v1100, 0.0
  %1123 = vadd.xlane.f32.xlu0 %v1122
  %v1124 = vpop.xlane.xlu0 %1123
  %v1125 = vmul.f32 %v1103, 0.010416667
  %v1126 = vmul.f32 %v1106, 0.010416667
  %v1127 = vmul.f32 %v1109, 0.010416667
  %v1128 = vmul.f32 %v1112, 0.010416667
  %v1129 = vmul.f32 %v1115, 0.010416667
  %v1130 = vmul.f32 %v1118, 0.010416667
  %v1131 = vmul.f32 %v1121, 0.010416667
  %v1132 = vmul.f32 %v1124, 0.010416667
  %v1133 = vadd.f32 %v1125, 1e-05
  %v1134 = vadd.f32 %v1126, 1e-05
  %v1135 = vadd.f32 %v1127, 1e-05
  %v1136 = vadd.f32 %v1128, 1e-05
  %v1137 = vadd.f32 %v1129, 1e-05
  %v1138 = vadd.f32 %v1130, 1e-05
  %v1139 = vadd.f32 %v1131, 1e-05
  %v1140 = vadd.f32 %v1132, 1e-05
  %v1141 = vrsqrt.pop %v1133
  %v1142 = vrsqrt.pop %v1134
  %v1143 = vrsqrt.pop %v1135
  %v1144 = vrsqrt.pop %v1136
  %v1145 = vrsqrt.pop %v1137
  %v1146 = vrsqrt.pop %v1138
  %v1147 = vrsqrt.pop %v1139
  %v1148 = vrsqrt.pop %v1140
  %v1149 = vld [vmem:[%s2] sm:$0xff]
  %v1150 = vld [vmem:[%s2 + $0x8] sm:$0xff]
  %v1151 = vld [vmem:[%s2 + $0x10] sm:$0xff]
  %v1152 = vld [vmem:[%s2 + $0x18] sm:$0xff]
  %v1153 = vld [vmem:[%s2 + $0x20] sm:$0xff]
  %v1154 = vld [vmem:[%s2 + $0x28] sm:$0xff]
  %v1155 = vld [vmem:[%s2 + $0x30] sm:$0xff]
  %v1156 = vld [vmem:[%s2 + $0x38] sm:$0xff]
  %v1157 = vmul.f32 %v1149, %v1141
  %v1158 = vmul.f32 %v1150, %v1142
  %v1159 = vmul.f32 %v1151, %v1143
  %v1160 = vmul.f32 %v1152, %v1144
  %v1161 = vmul.f32 %v1153, %v1145
  %v1162 = vmul.f32 %v1154, %v1146
  %v1163 = vmul.f32 %v1155, %v1147
  %v1164 = vmul.f32 %v1156, %v1148
  %1166 = vset.pattern.permute.xlu0 0
  %1167 = vperm.xlu0 %1166, %v1157
  %v1168 = vpop.permute.xlu0 %1167
  %1171 = vset.pattern.permute.xlu0 0
  %1172 = vperm.xlu0 %1171, %v1158
  %v1173 = vpop.permute.xlu0 %1172
  %1176 = vset.pattern.permute.xlu0 0
  %1177 = vperm.xlu0 %1176, %v1159
  %v1178 = vpop.permute.xlu0 %1177
  %1181 = vset.pattern.permute.xlu0 0
  %1182 = vperm.xlu0 %1181, %v1160
  %v1183 = vpop.permute.xlu0 %1182
  %1186 = vset.pattern.permute.xlu0 0
  %1187 = vperm.xlu0 %1186, %v1161
  %v1188 = vpop.permute.xlu0 %1187
  %1191 = vset.pattern.permute.xlu0 0
  %1192 = vperm.xlu0 %1191, %v1162
  %v1193 = vpop.permute.xlu0 %1192
  %1196 = vset.pattern.permute.xlu0 0
  %1197 = vperm.xlu0 %1196, %v1163
  %v1198 = vpop.permute.xlu0 %1197
  %1201 = vset.pattern.permute.xlu0 0
  %1202 = vperm.xlu0 %1201, %v1164
  %v1203 = vpop.permute.xlu0 %1202
  %v1205 = vmul.f32 %v1045, %v1168
  %v1206 = vmul.f32 %v1046, %v1173
  %v1207 = vmul.f32 %v1047, %v1178
  %v1208 = vmul.f32 %v1048, %v1183
  %v1209 = vmul.f32 %v1049, %v1188
  %v1210 = vmul.f32 %v1050, %v1193
  %v1211 = vmul.f32 %v1051, %v1198
  %v1212 = vmul.f32 %v1052, %v1203
  %v1213 = vmul.f32 %v1053, %v1168
  %v1214 = vmul.f32 %v1054, %v1173
  %v1215 = vmul.f32 %v1055, %v1178
  %v1216 = vmul.f32 %v1056, %v1183
  %v1217 = vmul.f32 %v1057, %v1188
  %v1218 = vmul.f32 %v1058, %v1193
  %v1219 = vmul.f32 %v1059, %v1198
  %v1220 = vmul.f32 %v1060, %v1203
  %v1221 = vld [vmem:[%s3] sm:$0xff]
  %v1222 = vld [vmem:[%s3 + $0x8] sm:$0xff]
  %v1223 = vld [vmem:[%s3 + $0x10] sm:$0xff]
  %v1224 = vld [vmem:[%s3 + $0x18] sm:$0xff]
  %v1225 = vld [vmem:[%s3 + $0x20] sm:$0xff]
  %v1226 = vld [vmem:[%s3 + $0x28] sm:$0xff]
  %v1227 = vld [vmem:[%s3 + $0x30] sm:$0xff]
  %v1228 = vld [vmem:[%s3 + $0x38] sm:$0xff]
  %1230 = vset.pattern.permute.xlu0 0
  %1231 = vperm.xlu0 %1230, %v1221
  %v1232 = vpop.permute.xlu0 %1231
  %1235 = vset.pattern.permute.xlu0 0
  %1236 = vperm.xlu0 %1235, %v1222
  %v1237 = vpop.permute.xlu0 %1236
  %1240 = vset.pattern.permute.xlu0 0
  %1241 = vperm.xlu0 %1240, %v1223
  %v1242 = vpop.permute.xlu0 %1241
  %1245 = vset.pattern.permute.xlu0 0
  %1246 = vperm.xlu0 %1245, %v1224
  %v1247 = vpop.permute.xlu0 %1246
  %1250 = vset.pattern.permute.xlu0 0
  %1251 = vperm.xlu0 %1250, %v1225
  %v1252 = vpop.permute.xlu0 %1251
  %1255 = vset.pattern.permute.xlu0 0
  %1256 = vperm.xlu0 %1255, %v1226
  %v1257 = vpop.permute.xlu0 %1256
  %1260 = vset.pattern.permute.xlu0 0
  %1261 = vperm.xlu0 %1260, %v1227
  %v1262 = vpop.permute.xlu0 %1261
  %1265 = vset.pattern.permute.xlu0 0
  %1266 = vperm.xlu0 %1265, %v1228
  %v1267 = vpop.permute.xlu0 %1266
  %v1269 = vadd.f32 %v1205, %v1232
  %v1270 = vadd.f32 %v1206, %v1237
  %v1271 = vadd.f32 %v1207, %v1242
  %v1272 = vadd.f32 %v1208, %v1247
  %v1273 = vadd.f32 %v1209, %v1252
  %v1274 = vadd.f32 %v1210, %v1257
  %v1275 = vadd.f32 %v1211, %v1262
  %v1276 = vadd.f32 %v1212, %v1267
  %v1277 = vadd.f32 %v1213, %v1232
  %v1278 = vadd.f32 %v1214, %v1237
  %v1279 = vadd.f32 %v1215, %v1242
  %v1280 = vadd.f32 %v1216, %v1247
  %v1281 = vadd.f32 %v1217, %v1252
  %v1282 = vadd.f32 %v1218, %v1257
  %v1283 = vadd.f32 %v1219, %v1262
  %v1284 = vadd.f32 %v1220, %v1267
  %v1285 = vmul.f32 %v1269, 0.5
  %v1286 = vmul.f32 %v1270, 0.5
  %v1287 = vmul.f32 %v1271, 0.5
  %v1288 = vmul.f32 %v1272, 0.5
  %v1289 = vmul.f32 %v1273, 0.5
  %v1290 = vmul.f32 %v1274, 0.5
  %v1291 = vmul.f32 %v1275, 0.5
  %v1292 = vmul.f32 %v1276, 0.5
  %v1293 = vmul.f32 %v1277, 0.5
  %v1294 = vmul.f32 %v1278, 0.5
  %v1295 = vmul.f32 %v1279, 0.5
  %v1296 = vmul.f32 %v1280, 0.5
  %v1297 = vmul.f32 %v1281, 0.5
  %v1298 = vmul.f32 %v1282, 0.5
  %v1299 = vmul.f32 %v1283, 0.5
  %v1300 = vmul.f32 %v1284, 0.5
  %v1301 = vtanh.pop %v1285
  %v1302 = vtanh.pop %v1286
  %v1303 = vtanh.pop %v1287
  %v1304 = vtanh.pop %v1288
  %v1305 = vtanh.pop %v1289
  %v1306 = vtanh.pop %v1290
  %v1307 = vtanh.pop %v1291
  %v1308 = vtanh.pop %v1292
  %v1309 = vtanh.pop %v1293
  %v1310 = vtanh.pop %v1294
  %v1311 = vtanh.pop %v1295
  %v1312 = vtanh.pop %v1296
  %v1313 = vtanh.pop %v1297
  %v1314 = vtanh.pop %v1298
  %v1315 = vtanh.pop %v1299
  %v1316 = vtanh.pop %v1300
  %v1317 = vmul.f32 %v1269, 1.442695
  %v1318 = vpow.pop %v1317
  %v1319 = vmul.f32 %v1270, 1.442695
  %v1320 = vpow.pop %v1319
  %v1321 = vmul.f32 %v1271, 1.442695
  %v1322 = vpow.pop %v1321
  %v1323 = vmul.f32 %v1272, 1.442695
  %v1324 = vpow.pop %v1323
  %v1325 = vmul.f32 %v1273, 1.442695
  %v1326 = vpow.pop %v1325
  %v1327 = vmul.f32 %v1274, 1.442695
  %v1328 = vpow.pop %v1327
  %v1329 = vmul.f32 %v1275, 1.442695
  %v1330 = vpow.pop %v1329
  %v1331 = vmul.f32 %v1276, 1.442695
  %v1332 = vpow.pop %v1331
  %v1333 = vmul.f32 %v1277, 1.442695
  %v1334 = vpow.pop %v1333
  %v1335 = vmul.f32 %v1278, 1.442695
  %v1336 = vpow.pop %v1335
  %v1337 = vmul.f32 %v1279, 1.442695
  %v1338 = vpow.pop %v1337
  %v1339 = vmul.f32 %v1280, 1.442695
  %v1340 = vpow.pop %v1339
  %v1341 = vmul.f32 %v1281, 1.442695
  %v1342 = vpow.pop %v1341
  %v1343 = vmul.f32 %v1282, 1.442695
  %v1344 = vpow.pop %v1343
  %v1345 = vmul.f32 %v1283, 1.442695
  %v1346 = vpow.pop %v1345
  %v1347 = vmul.f32 %v1284, 1.442695
  %v1348 = vpow.pop %v1347
  %v1349 = vadd.f32 %v1318, 1.0
  %v1350 = vadd.f32 %v1320, 1.0
  %v1351 = vadd.f32 %v1322, 1.0
  %v1352 = vadd.f32 %v1324, 1.0
  %v1353 = vadd.f32 %v1326, 1.0
  %v1354 = vadd.f32 %v1328, 1.0
  %v1355 = vadd.f32 %v1330, 1.0
  %v1356 = vadd.f32 %v1332, 1.0
  %v1357 = vadd.f32 %v1334, 1.0
  %v1358 = vadd.f32 %v1336, 1.0
  %v1359 = vadd.f32 %v1338, 1.0
  %v1360 = vadd.f32 %v1340, 1.0
  %v1361 = vadd.f32 %v1342, 1.0
  %v1362 = vadd.f32 %v1344, 1.0
  %v1363 = vadd.f32 %v1346, 1.0
  %v1364 = vadd.f32 %v1348, 1.0
  %v1365 = vmul.f32 %v1301, %v1349
  %v1366 = vmul.f32 %v1302, %v1350
  %v1367 = vmul.f32 %v1303, %v1351
  %v1368 = vmul.f32 %v1304, %v1352
  %v1369 = vmul.f32 %v1305, %v1353
  %v1370 = vmul.f32 %v1306, %v1354
  %v1371 = vmul.f32 %v1307, %v1355
  %v1372 = vmul.f32 %v1308, %v1356
  %v1373 = vmul.f32 %v1309, %v1357
  %v1374 = vmul.f32 %v1310, %v1358
  %v1375 = vmul.f32 %v1311, %v1359
  %v1376 = vmul.f32 %v1312, %v1360
  %v1377 = vmul.f32 %v1313, %v1361
  %v1378 = vmul.f32 %v1314, %v1362
  %v1379 = vmul.f32 %v1315, %v1363
  %v1380 = vmul.f32 %v1316, %v1364
  %vm1381 = vcmp.gt.f32.partialorder %v1269, 0.0
  %vm1382 = vcmp.gt.f32.partialorder %v1270, 0.0
  %vm1383 = vcmp.gt.f32.partialorder %v1271, 0.0
  %vm1384 = vcmp.gt.f32.partialorder %v1272, 0.0
  %vm1385 = vcmp.gt.f32.partialorder %v1273, 0.0
  %vm1386 = vcmp.gt.f32.partialorder %v1274, 0.0
  %vm1387 = vcmp.gt.f32.partialorder %v1275, 0.0
  %vm1388 = vcmp.gt.f32.partialorder %v1276, 0.0
  %vm1389 = vcmp.gt.f32.partialorder %v1277, 0.0
  %vm1390 = vcmp.gt.f32.partialorder %v1278, 0.0
  %vm1391 = vcmp.gt.f32.partialorder %v1279, 0.0
  %vm1392 = vcmp.gt.f32.partialorder %v1280, 0.0
  %vm1393 = vcmp.gt.f32.partialorder %v1281, 0.0
  %vm1394 = vcmp.gt.f32.partialorder %v1282, 0.0
  %vm1395 = vcmp.gt.f32.partialorder %v1283, 0.0
  %vm1396 = vcmp.gt.f32.partialorder %v1284, 0.0
  %v1397 = vsel %vm1381, %v1269, %v1365
  %v1398 = vsel %vm1382, %v1270, %v1366
  %v1399 = vsel %vm1383, %v1271, %v1367
  %v1400 = vsel %vm1384, %v1272, %v1368
  %v1401 = vsel %vm1385, %v1273, %v1369
  %v1402 = vsel %vm1386, %v1274, %v1370
  %v1403 = vsel %vm1387, %v1275, %v1371
  %v1404 = vsel %vm1388, %v1276, %v1372
  %v1405 = vsel %vm1389, %v1277, %v1373
  %v1406 = vsel %vm1390, %v1278, %v1374
  %v1407 = vsel %vm1391, %v1279, %v1375
  %v1408 = vsel %vm1392, %v1280, %v1376
  %v1409 = vsel %vm1393, %v1281, %v1377
  %v1410 = vsel %vm1394, %v1282, %v1378
  %v1411 = vsel %vm1395, %v1283, %v1379
  %v1412 = vsel %vm1396, %v1284, %v1380
  %1413 = vst.msk [vmem:[%s4] sm:$0xff] %vm535, %v1397
  %1414 = vst.msk [vmem:[%s4 + $0x8] sm:$0xff] %vm535, %v1398
  %1415 = vst.msk [vmem:[%s4 + $0x10] sm:$0xff] %vm535, %v1399
  %1416 = vst.msk [vmem:[%s4 + $0x18] sm:$0xff] %vm535, %v1400
  %1417 = vst.msk [vmem:[%s4 + $0x20] sm:$0xff] %vm535, %v1401
  %1418 = vst.msk [vmem:[%s4 + $0x28] sm:$0xff] %vm535, %v1402
  %1419 = vst.msk [vmem:[%s4 + $0x30] sm:$0xff] %vm535, %v1403
  %1420 = vst.msk [vmem:[%s4 + $0x38] sm:$0xff] %vm535, %v1404
  %1421 = vst.msk [vmem:[%s4 + $0x40] sm:$0xff] %vm535, %v1405
  %1422 = vst.msk [vmem:[%s4 + $0x48] sm:$0xff] %vm535, %v1406
  %1423 = vst.msk [vmem:[%s4 + $0x50] sm:$0xff] %vm535, %v1407
  %1424 = vst.msk [vmem:[%s4 + $0x58] sm:$0xff] %vm535, %v1408
  %1425 = vst.msk [vmem:[%s4 + $0x60] sm:$0xff] %vm535, %v1409
  %1426 = vst.msk [vmem:[%s4 + $0x68] sm:$0xff] %vm535, %v1410
  %1427 = vst.msk [vmem:[%s4 + $0x70] sm:$0xff] %vm535, %v1411
  %1428 = vst.msk [vmem:[%s4 + $0x78] sm:$0xff] %vm535, %v1412
  // Predicated region
  $region18: #{encoder_forward.5} parent=0 // pred_check
    _
  $region19: #{encoder_forward.5} parent=0 // pred_check_branch
    %1430 = sbr.rel (0) target = $region21
  $region20: #{encoder_forward.5} parent=0 // pred_region
    _
  $region21: #{encoder_forward.5} parent=0 // pred_fallthru
    _
  // Predicated region
  $region22: #{encoder_forward.5} parent=0 // pred_check
    _
  $region23: #{encoder_forward.5} parent=0 // pred_check_branch
    %1432 = sbr.rel (0) target = $region25
  $region24: #{encoder_forward.5} parent=0 // pred_region
    _
  $region25: #{encoder_forward.5} parent=0 // pred_fallthru
    _

</llo_original>
